<compile_context>
chip_gen: v6e
topology: v6e:2x2x1
jax: 0.10.0
libtpu: 0.0.40
codegen_flags: <defaults>
</compile_context>

<pallas_src>
import functools

import numpy as np

import jax
import jax.numpy as jnp
from jax.experimental import pallas as pl

_LANES = 128
_ALIGN = 16                      # bf16 packed tile is (16, 128): keep slices aligned


# --------------------- offline parameter preparation ----------------------- #

class _Packer:
    """Packs many small 2D matrices into one (rows, 128) bf16 array."""

    def __init__(self):
        self._chunks = []
        self._rows = 0

    def add(self, mat):
        mat = np.asarray(mat, np.float32)
        assert mat.ndim == 2 and mat.shape[1] <= _LANES, mat.shape
        r, c = mat.shape
        rp = r + (-r) % _ALIGN                     # 16-row aligned slices (bf16 tile)
        buf = np.zeros((rp, _LANES), np.float32)
        buf[:r, :c] = mat
        handle = (self._rows, r, c)
        self._chunks.append(buf)
        self._rows += rp
        return handle

    def pack(self):
        return jnp.asarray(np.concatenate(self._chunks, axis=0), dtype=jnp.bfloat16)


def _convt_lane_mat(wt, w_in):
    """ConvTranspose2d(k=2,s=2) weight (Cin,Cout,2,2) -> M_cat = [M0 | M1].

    M_cat has shape (W*Cin, 2 * 2W*Cout) with
      M_cat[j*Cin + ic, ki*(2W*Cout) + (2j+kj)*Cout + oc] = wt[ic, oc, ki, kj]
    so `act @ M_cat` performs the channel mixing AND the column upsample for
    both row phases ki=0/1 in a single matmul.
    """
    cin, cout = wt.shape[0], wt.shape[1]
    half = 2 * w_in * cout
    m = np.zeros((w_in * cin, 2 * half), np.float32)
    for ki in range(2):
        for j in range(w_in):
            for kj in range(2):
                m[j * cin:(j + 1) * cin,
                  ki * half + (2 * j + kj) * cout:
                  ki * half + (2 * j + kj + 1) * cout] = wt[:, :, ki, kj]
    return m


def _row_dup_mat(rows_in):
    """D (2R, R): D[2i+ki, i] = 1 -- duplicates every activation row (the 2x
    row upsample; the parity select in the kernel picks the ki lane half)."""
    d = np.zeros((2 * rows_in, rows_in), np.float32)
    for i in range(rows_in):
        d[2 * i, i] = 1.0
        d[2 * i + 1, i] = 1.0
    return d


def _conv3_lane_mat(w, w_img):
    """Conv2d(3x3, pad=1) weight (Cout,Cin,3,3) -> K-stacked G_cat.

    G_cat = vstack([G_-1, G_0, G_+1]), each G_d of shape (W*Cin, W*Cout) with
      G_d[(j+dj)*Cin + ic, j*Cout + oc] = w[oc, ic, d+1, dj+1]  (0 <= j+dj < W)
    (column zero padding is built in by omitting out-of-range taps).
    The kernel multiplies X3 = [x(row-1) | x(row) | x(row+1)] by G_cat.
    """
    cout, cin = w.shape[0], w.shape[1]
    gs = []
    for d in (-1, 0, 1):
        g = np.zeros((w_img * cin, w_img * cout), np.float32)
        for j in range(w_img):
            for dj in (-1, 0, 1):
                js = j + dj
                if 0 <= js < w_img:
                    g[js * cin:(js + 1) * cin,
                      j * cout:(j + 1) * cout] = w[:, :, d + 1, dj + 1].T
        gs.append(g)
    return np.concatenate(gs, axis=0)


def prepare_decoder_params(params, in_channels, latent_dim, batch):
    """Fold all PyTorch weights into matmul-ready operands, packed into a single
    (rows, 128) bf16 array.  The batch size is baked in only through the tiny
    row-duplication matrices (batch is stacked on sublanes)."""
    pd = latent_dim // 2
    pk = _Packer()
    meta = {"blocks": [], "batch": batch}
    h_img, w_img = 2, 1
    c_in = pd
    for blk in params["blocks"]:
        wt = np.asarray(blk["wt"]); bt = np.asarray(blk["bt"])
        w1 = np.asarray(blk["res"]["w1"]); b1 = np.asarray(blk["res"]["b1"])
        w2 = np.asarray(blk["res"]["w2"]); b2 = np.asarray(blk["res"]["b2"])
        c_out = wt.shape[1]
        ho, wo = 2 * h_img, 2 * w_img

        bm = {
            "m": pk.add(_convt_lane_mat(wt, w_img)),
            "d": pk.add(_row_dup_mat(batch * h_img)),
            "bt": pk.add(np.tile(bt, wo)[None, :]),
            "g1": pk.add(_conv3_lane_mat(w1, wo)),
            "b1": pk.add(np.tile(b1, wo)[None, :]),
            "g2": pk.add(_conv3_lane_mat(w2, wo)),
            "b2": pk.add(np.tile(b2, wo)[None, :]),
            "h_out": ho,                       # per-sample rows after this block
            "half": 2 * w_img * c_out,         # lanes of the convT output (= 64)
        }
        meta["blocks"].append(bm)
        h_img, w_img, c_in = ho, wo, c_out

    # Final 1x1 conv: one lane-dense matrix; slab lane = oc*W + j (zero-padded
    # to 128 lanes so the output store is fully unmasked).
    wc = np.asarray(params["channel"]["w"]).reshape(in_channels, c_in)
    bc = np.asarray(params["channel"]["b"])
    gf = np.zeros((w_img * c_in, _LANES), np.float32)
    bf = np.zeros((1, _LANES), np.float32)
    for oc in range(in_channels):
        for j in range(w_img):
            gf[j * c_in:(j + 1) * c_in, oc * w_img + j] = wc[oc, :]
            bf[0, oc * w_img + j] = bc[oc]
    meta["final_g"] = pk.add(gf)
    meta["final_b"] = pk.add(bf)
    meta["H"], meta["W"] = h_img, w_img
    return pk.pack(), meta


# ------------------------------ fused kernel -------------------------------- #

def _make_decoder_kernel(meta):
    blocks = meta["blocks"]

    def kernel(x_ref, p_ref, o_ref):
        def ld(handle):
            off, r, c = handle
            return p_ref[off:off + r, 0:c]          # static, 16-row-aligned slice

        def mm(a, b):
            # bf16 x bf16 MXU path, f32 accumulation.
            return jnp.dot(a.astype(jnp.bfloat16), b,
                           preferred_element_type=jnp.float32)

        # Activation layout: (batch*H, W*C) -- image rows (batch-major) on
        # sublanes, (column, channel) flattened on lanes (64 or 128 wide).
        act = x_ref[...]                             # (B*2, pd) f32

        for bm in blocks:
            half = bm["half"]                        # 64 at every stage
            h = bm["h_out"]                          # per-sample rows (power of 2)

            # --- ConvTranspose2d(k=2, s=2) ---------------------------------
            y = mm(act, ld(bm["m"]))                 # (R, 128)  channel mix + col up
            dup = mm(ld(bm["d"]), y)                 # (2R, 128) row duplication
            rows = dup.shape[0]
            even = (jax.lax.broadcasted_iota(jnp.int32, (rows, half), 0) & 1) == 0
            z = jnp.where(even, dup[:, :half], dup[:, half:2 * half]) + ld(bm["bt"])

            # --- ResidualBlock: relu(z + conv2(relu(conv1(z)))) -------------
            # TODO(synk): nn.Dropout(p=0.1) layers are identity (inference).
            def shift3(v):
                # X3 = [v(row-1) | v(row) | v(row+1)] with per-sample zero pad.
                c = v.shape[1]
                zr = jnp.zeros((1, c), v.dtype)
                vm = jnp.concatenate([zr, v[:rows - 1]], axis=0)    # v[i-1]
                vp = jnp.concatenate([v[1:], zr], axis=0)           # v[i+1]
                ridx = jax.lax.broadcasted_iota(jnp.int32, (rows, c), 0) & (h - 1)
                vm = jnp.where(ridx == 0, 0.0, vm)                  # sample top row
                vp = jnp.where(ridx == h - 1, 0.0, vp)              # sample bottom row
                return jnp.concatenate([vm, v, vp], axis=1)         # (rows, 3c)

            hid = jnp.maximum(mm(shift3(z), ld(bm["g1"])) + ld(bm["b1"]), 0.0)
            act = jnp.maximum(z + mm(shift3(hid), ld(bm["g2"])) + ld(bm["b2"]), 0.0)

        # --- final 1x1 conv: one matmul, lane-dense (B*H, 128) output slab.
        o_ref[...] = mm(act, ld(meta["final_g"])) + ld(meta["final_b"])

    return kernel


def build_decoder_forward(meta, in_channels, latent_dim):
    kernel = _make_decoder_kernel(meta)
    pd = latent_dim // 2
    h_out, w_out = meta["H"], meta["W"]
    bsz = meta["batch"]

    @jax.jit
    def forward(x, packed):
        assert x.shape[0] == bsz
        # torch.reshape(x, (B, pd, 2, 1)) is an (H=2, W=1, C=pd) NCHW image;
        # the kernel layout stacks the batch on sublanes: a0[b*2+i, c] = x[b, 2c+i].
        a0 = jnp.transpose(x.reshape(bsz, pd, 2), (0, 2, 1)).reshape(bsz * 2, pd)
        slab = pl.pallas_call(
            kernel,
            out_shape=jax.ShapeDtypeStruct((bsz * h_out, _LANES), jnp.float32),
        )(a0, packed)
        # slab[b*H + i, oc*W + j] -> NCHW (B, C, H, W); cheap XLA re-layout.
        out = slab[:, :in_channels * w_out].reshape(bsz, h_out, in_channels, w_out)
        return jnp.transpose(out, (0, 2, 1, 3))

    return forward


# ---------------------------- parameter init -------------------------------- #

def init_decoder_params(key, in_channels, latent_dim):
    pd = latent_dim // 2
    chans = [pd, pd // 2, pd // 4, pd // 8, pd // 16, pd // 32]

    def normal(k, shape, fan_in):
        return jax.random.normal(k, shape, jnp.float32) / jnp.sqrt(float(fan_in))

    params = {"blocks": []}
    for i in range(5):
        cin, cout = chans[i], chans[i + 1]
        key, k1, k2, k3, k4, k5, k6 = jax.random.split(key, 7)
        params["blocks"].append({
            "wt": normal(k1, (cin, cout, 2, 2), cin * 4),        # ConvTranspose2d
            "bt": 0.01 * jax.random.normal(k6, (cout,), jnp.float32),
            "res": {
                "w1": normal(k2, (2 * cout, cout, 3, 3), cout * 9),
                "b1": 0.01 * jax.random.normal(k3, (2 * cout,), jnp.float32),
                "w2": normal(k4, (cout, 2 * cout, 3, 3), 2 * cout * 9),
                "b2": 0.01 * jax.random.normal(k5, (cout,), jnp.float32),
            },
        })
    key, kc, kcb = jax.random.split(key, 3)
    params["channel"] = {
        "w": normal(kc, (in_channels, chans[5], 1, 1), chans[5]),
        "b": 0.01 * jax.random.normal(kcb, (in_channels,), jnp.float32),
    }
    return params


# ------------------------- pure-JAX reference check ------------------------- #

def decoder_reference(x, params, in_channels, latent_dim):
    """Pure-XLA reference with exact PyTorch semantics (inference mode)."""
    hi = jax.lax.Precision.HIGHEST
    pd = latent_dim // 2
    bsz = x.shape[0]

    def conv(a, w, b, pad):
        y = jax.lax.conv_general_dilated(
            a, w, window_strides=(1, 1), padding=((pad, pad), (pad, pad)),
            dimension_numbers=("NCHW", "OIHW", "NCHW"), precision=hi)
        return y + b[None, :, None, None]

    def convt(a, w, b):
        y = jnp.einsum("bchw,cokl->bohkwl", a, w, precision=hi)
        bb, co, hh, _, ww, _ = y.shape
        return y.reshape(bb, co, 2 * hh, 2 * ww) + b[None, :, None, None]

    a = x.reshape(bsz, pd, 2, 1)
    for blk in params["blocks"]:
        a = convt(a, blk["wt"], blk["bt"])
        hmid = jax.nn.relu(conv(a, blk["res"]["w1"], blk["res"]["b1"], 1))
        a = jax.nn.relu(a + conv(hmid, blk["res"]["w2"], blk["res"]["b2"], 1))
    return conv(a, params["channel"]["w"], params["channel"]["b"], 0)


# ----------------------------------- main ------------------------------------ #

if __name__ == "__main__":
    in_channels, latent_dim, batch = 3, 128, 2      # pd = 64, last-block C = 2
    key = jax.random.PRNGKey(0)
    kp, kx = jax.random.split(key)

    params = init_decoder_params(kp, in_channels, latent_dim)
    x = jax.random.normal(kx, (batch, latent_dim), jnp.float32)

    # One-time weight folding / bf16 packing (outside the per-call jitted graph).
    packed, meta = prepare_decoder_params(params, in_channels, latent_dim, batch)
    fwd = build_decoder_forward(meta, in_channels, latent_dim)

    out = fwd(x, packed)
    jax.block_until_ready(out)

    # spatial: (2,1) -> (4,2) -> (8,4) -> (16,8) -> (32,16) -> (64,32)
    assert out.shape == (batch, in_channels, 64, 32), out.shape
    assert out.dtype == jnp.float32

    ref = jax.jit(functools.partial(
        decoder_reference, in_channels=in_channels, latent_dim=latent_dim))(x, params)
    np.testing.assert_allclose(np.asarray(out), np.asarray(ref),
                               rtol=5e-2, atol=5e-2)
    print("KERNEL_OK")
</pallas_src>

<mosaic_0001>
module attributes {stable_mosaic.version = 11 : i64} {
  func.func @kernel(%arg0: memref<4x64xf32, #tpu.memory_space<vmem>>, %arg1: memref<3776x128xbf16, #tpu.memory_space<vmem>>, %arg2: memref<128x128xf32, #tpu.memory_space<vmem>>) attributes {dimension_semantics = [], scalar_prefetch = 0 : i64, scratch_operands = 0 : i64, tpu.core_type = #tpu.core_type<tc>} {
    %c0 = arith.constant 0 : index
    %c0_0 = arith.constant 0 : index
    %0 = vector.load %arg0[%c0, %c0_0] : memref<4x64xf32, #tpu.memory_space<vmem>>, vector<4x64xf32>
    %c0_1 = arith.constant 0 : index
    %c0_2 = arith.constant 0 : index
    %1 = vector.load %arg1[%c0_1, %c0_2] : memref<3776x128xbf16, #tpu.memory_space<vmem>>, vector<64x128xbf16>
    %2 = arith.truncf %0 : vector<4x64xf32> to vector<4x64xbf16>
    %cst = arith.constant dense<0.000000e+00> : vector<4x128xf32>
    %3 = tpu.matmul %2, %1, %cst {dimension_numbers = #tpu.dot_dimension_numbers<[1], [0], [0], [1], [0, 0, 1, 1], [], []>} : vector<4x64xbf16>, vector<64x128xbf16>, vector<4x128xf32> -> vector<4x128xf32>
    %c64 = arith.constant 64 : index
    %c0_3 = arith.constant 0 : index
    %4 = vector.load %arg1[%c64, %c0_3] : memref<3776x128xbf16, #tpu.memory_space<vmem>>, vector<8x4xbf16>
    %cst_4 = arith.constant dense<0.000000e+00> : vector<8x128xf32>
    %5 = tpu.matmul %4, %3, %cst_4 {dimension_numbers = #tpu.dot_dimension_numbers<[1], [0], [0], [1], [0, 0, 1, 1], [], []>} : vector<8x4xbf16>, vector<4x128xf32>, vector<8x128xf32> -> vector<8x128xf32>
    %6 = tpu.iota {dimensions = array<i32: 0>} : vector<8x64xi32>
    %c1_i32 = arith.constant 1 : i32
    %7 = vector.broadcast %c1_i32 : i32 to vector<8x64xi32>
    %8 = arith.andi %6, %7 : vector<8x64xi32>
    %c0_i32 = arith.constant 0 : i32
    %9 = vector.broadcast %c0_i32 : i32 to vector<8x64xi32>
    %10 = arith.cmpi eq, %8, %9 : vector<8x64xi32>
    %11 = vector.extract_strided_slice %5 {offsets = [0, 0], sizes = [8, 64], strides = [1, 1]} : vector<8x128xf32> to vector<8x64xf32>
    %12 = vector.extract_strided_slice %5 {offsets = [0, 64], sizes = [8, 64], strides = [1, 1]} : vector<8x128xf32> to vector<8x64xf32>
    %13 = arith.select %10, %11, %12 : vector<8x64xi1>, vector<8x64xf32>
    %c80 = arith.constant 80 : index
    %c0_5 = arith.constant 0 : index
    %14 = vector.load %arg1[%c80, %c0_5] : memref<3776x128xbf16, #tpu.memory_space<vmem>>, vector<1x64xbf16>
    %15 = arith.extf %14 : vector<1x64xbf16> to vector<1x64xf32>
    %16 = vector.broadcast %15 : vector<1x64xf32> to vector<8x64xf32>
    %17 = arith.addf %13, %16 : vector<8x64xf32>
    %cst_6 = arith.constant 0.000000e+00 : f32
    %18 = vector.broadcast %cst_6 : f32 to vector<1x64xf32>
    %19 = vector.extract_strided_slice %17 {offsets = [0, 0], sizes = [7, 64], strides = [1, 1]} : vector<8x64xf32> to vector<7x64xf32>
    %20 = tpu.concatenate %18, %19 in 0 : vector<1x64xf32>, vector<7x64xf32> -> vector<8x64xf32>
    %21 = vector.extract_strided_slice %17 {offsets = [1, 0], sizes = [7, 64], strides = [1, 1]} : vector<8x64xf32> to vector<7x64xf32>
    %22 = tpu.concatenate %21, %18 in 0 : vector<7x64xf32>, vector<1x64xf32> -> vector<8x64xf32>
    %23 = tpu.iota {dimensions = array<i32: 0>} : vector<8x64xi32>
    %c3_i32 = arith.constant 3 : i32
    %24 = vector.broadcast %c3_i32 : i32 to vector<8x64xi32>
    %25 = arith.andi %23, %24 : vector<8x64xi32>
    %c0_i32_7 = arith.constant 0 : i32
    %26 = vector.broadcast %c0_i32_7 : i32 to vector<8x64xi32>
    %27 = arith.cmpi eq, %25, %26 : vector<8x64xi32>
    %cst_8 = arith.constant 0.000000e+00 : f32
    %28 = vector.broadcast %cst_8 : f32 to vector<8x64xf32>
    %29 = arith.select %27, %28, %20 : vector<8x64xi1>, vector<8x64xf32>
    %c3_i32_9 = arith.constant 3 : i32
    %30 = vector.broadcast %c3_i32_9 : i32 to vector<8x64xi32>
    %31 = arith.cmpi eq, %25, %30 : vector<8x64xi32>
    %cst_10 = arith.constant 0.000000e+00 : f32
    %32 = vector.broadcast %cst_10 : f32 to vector<8x64xf32>
    %33 = arith.select %31, %32, %22 : vector<8x64xi1>, vector<8x64xf32>
    %34 = tpu.concatenate %29, %17, %33 in 1 : vector<8x64xf32>, vector<8x64xf32>, vector<8x64xf32> -> vector<8x192xf32>
    %c96 = arith.constant 96 : index
    %c0_11 = arith.constant 0 : index
    %35 = vector.load %arg1[%c96, %c0_11] : memref<3776x128xbf16, #tpu.memory_space<vmem>>, vector<192x128xbf16>
    %36 = arith.truncf %34 : vector<8x192xf32> to vector<8x192xbf16>
    %cst_12 = arith.constant dense<0.000000e+00> : vector<8x128xf32>
    %37 = tpu.matmul %36, %35, %cst_12 {dimension_numbers = #tpu.dot_dimension_numbers<[1], [0], [0], [1], [0, 0, 1, 1], [], []>} : vector<8x192xbf16>, vector<192x128xbf16>, vector<8x128xf32> -> vector<8x128xf32>
    %c288 = arith.constant 288 : index
    %c0_13 = arith.constant 0 : index
    %38 = vector.load %arg1[%c288, %c0_13] : memref<3776x128xbf16, #tpu.memory_space<vmem>>, vector<1x128xbf16>
    %39 = arith.extf %38 : vector<1x128xbf16> to vector<1x128xf32>
    %40 = vector.broadcast %39 : vector<1x128xf32> to vector<8x128xf32>
    %41 = arith.addf %37, %40 : vector<8x128xf32>
    %cst_14 = arith.constant 0.000000e+00 : f32
    %42 = vector.broadcast %cst_14 : f32 to vector<8x128xf32>
    %43 = arith.maximumf %41, %42 : vector<8x128xf32>
    %cst_15 = arith.constant 0.000000e+00 : f32
    %44 = vector.broadcast %cst_15 : f32 to vector<1x128xf32>
    %45 = vector.extract_strided_slice %43 {offsets = [0, 0], sizes = [7, 128], strides = [1, 1]} : vector<8x128xf32> to vector<7x128xf32>
    %46 = tpu.concatenate %44, %45 in 0 : vector<1x128xf32>, vector<7x128xf32> -> vector<8x128xf32>
    %47 = vector.extract_strided_slice %43 {offsets = [1, 0], sizes = [7, 128], strides = [1, 1]} : vector<8x128xf32> to vector<7x128xf32>
    %48 = tpu.concatenate %47, %44 in 0 : vector<7x128xf32>, vector<1x128xf32> -> vector<8x128xf32>
    %49 = tpu.iota {dimensions = array<i32: 0>} : vector<8x128xi32>
    %c3_i32_16 = arith.constant 3 : i32
    %50 = vector.broadcast %c3_i32_16 : i32 to vector<8x128xi32>
    %51 = arith.andi %49, %50 : vector<8x128xi32>
    %c0_i32_17 = arith.constant 0 : i32
    %52 = vector.broadcast %c0_i32_17 : i32 to vector<8x128xi32>
    %53 = arith.cmpi eq, %51, %52 : vector<8x128xi32>
    %cst_18 = arith.constant 0.000000e+00 : f32
    %54 = vector.broadcast %cst_18 : f32 to vector<8x128xf32>
    %55 = arith.select %53, %54, %46 : vector<8x128xi1>, vector<8x128xf32>
    %c3_i32_19 = arith.constant 3 : i32
    %56 = vector.broadcast %c3_i32_19 : i32 to vector<8x128xi32>
    %57 = arith.cmpi eq, %51, %56 : vector<8x128xi32>
    %cst_20 = arith.constant 0.000000e+00 : f32
    %58 = vector.broadcast %cst_20 : f32 to vector<8x128xf32>
    %59 = arith.select %57, %58, %48 : vector<8x128xi1>, vector<8x128xf32>
    %60 = tpu.concatenate %55, %43, %59 in 1 : vector<8x128xf32>, vector<8x128xf32>, vector<8x128xf32> -> vector<8x384xf32>
    %c304 = arith.constant 304 : index
    %c0_21 = arith.constant 0 : index
    %61 = vector.load %arg1[%c304, %c0_21] : memref<3776x128xbf16, #tpu.memory_space<vmem>>, vector<384x64xbf16>
    %62 = arith.truncf %60 : vector<8x384xf32> to vector<8x384xbf16>
    %cst_22 = arith.constant dense<0.000000e+00> : vector<8x64xf32>
    %63 = tpu.matmul %62, %61, %cst_22 {dimension_numbers = #tpu.dot_dimension_numbers<[1], [0], [0], [1], [0, 0, 1, 1], [], []>} : vector<8x384xbf16>, vector<384x64xbf16>, vector<8x64xf32> -> vector<8x64xf32>
    %64 = arith.addf %17, %63 : vector<8x64xf32>
    %c688 = arith.constant 688 : index
    %c0_23 = arith.constant 0 : index
    %65 = vector.load %arg1[%c688, %c0_23] : memref<3776x128xbf16, #tpu.memory_space<vmem>>, vector<1x64xbf16>
    %66 = arith.extf %65 : vector<1x64xbf16> to vector<1x64xf32>
    %67 = vector.broadcast %66 : vector<1x64xf32> to vector<8x64xf32>
    %68 = arith.addf %64, %67 : vector<8x64xf32>
    %cst_24 = arith.constant 0.000000e+00 : f32
    %69 = vector.broadcast %cst_24 : f32 to vector<8x64xf32>
    %70 = arith.maximumf %68, %69 : vector<8x64xf32>
    %c704 = arith.constant 704 : index
    %c0_25 = arith.constant 0 : index
    %71 = vector.load %arg1[%c704, %c0_25] : memref<3776x128xbf16, #tpu.memory_space<vmem>>, vector<64x128xbf16>
    %72 = arith.truncf %70 : vector<8x64xf32> to vector<8x64xbf16>
    %cst_26 = arith.constant dense<0.000000e+00> : vector<8x128xf32>
    %73 = tpu.matmul %72, %71, %cst_26 {dimension_numbers = #tpu.dot_dimension_numbers<[1], [0], [0], [1], [0, 0, 1, 1], [], []>} : vector<8x64xbf16>, vector<64x128xbf16>, vector<8x128xf32> -> vector<8x128xf32>
    %c768 = arith.constant 768 : index
    %c0_27 = arith.constant 0 : index
    %74 = vector.load %arg1[%c768, %c0_27] : memref<3776x128xbf16, #tpu.memory_space<vmem>>, vector<16x8xbf16>
    %cst_28 = arith.constant dense<0.000000e+00> : vector<16x128xf32>
    %75 = tpu.matmul %74, %73, %cst_28 {dimension_numbers = #tpu.dot_dimension_numbers<[1], [0], [0], [1], [0, 0, 1, 1], [], []>} : vector<16x8xbf16>, vector<8x128xf32>, vector<16x128xf32> -> vector<16x128xf32>
    %76 = tpu.iota {dimensions = array<i32: 0>} : vector<16x64xi32>
    %c1_i32_29 = arith.constant 1 : i32
    %77 = vector.broadcast %c1_i32_29 : i32 to vector<16x64xi32>
    %78 = arith.andi %76, %77 : vector<16x64xi32>
    %c0_i32_30 = arith.constant 0 : i32
    %79 = vector.broadcast %c0_i32_30 : i32 to vector<16x64xi32>
    %80 = arith.cmpi eq, %78, %79 : vector<16x64xi32>
    %81 = vector.extract_strided_slice %75 {offsets = [0, 0], sizes = [16, 64], strides = [1, 1]} : vector<16x128xf32> to vector<16x64xf32>
    %82 = vector.extract_strided_slice %75 {offsets = [0, 64], sizes = [16, 64], strides = [1, 1]} : vector<16x128xf32> to vector<16x64xf32>
    %83 = arith.select %80, %81, %82 : vector<16x64xi1>, vector<16x64xf32>
    %c784 = arith.constant 784 : index
    %c0_31 = arith.constant 0 : index
    %84 = vector.load %arg1[%c784, %c0_31] : memref<3776x128xbf16, #tpu.memory_space<vmem>>, vector<1x64xbf16>
    %85 = arith.extf %84 : vector<1x64xbf16> to vector<1x64xf32>
    %86 = vector.broadcast %85 : vector<1x64xf32> to vector<16x64xf32>
    %87 = arith.addf %83, %86 : vector<16x64xf32>
    %cst_32 = arith.constant 0.000000e+00 : f32
    %88 = vector.broadcast %cst_32 : f32 to vector<1x64xf32>
    %89 = vector.extract_strided_slice %87 {offsets = [0, 0], sizes = [15, 64], strides = [1, 1]} : vector<16x64xf32> to vector<15x64xf32>
    %90 = tpu.concatenate %88, %89 in 0 : vector<1x64xf32>, vector<15x64xf32> -> vector<16x64xf32>
    %91 = vector.extract_strided_slice %87 {offsets = [1, 0], sizes = [15, 64], strides = [1, 1]} : vector<16x64xf32> to vector<15x64xf32>
    %92 = tpu.concatenate %91, %88 in 0 : vector<15x64xf32>, vector<1x64xf32> -> vector<16x64xf32>
    %93 = tpu.iota {dimensions = array<i32: 0>} : vector<16x64xi32>
    %c7_i32 = arith.constant 7 : i32
    %94 = vector.broadcast %c7_i32 : i32 to vector<16x64xi32>
    %95 = arith.andi %93, %94 : vector<16x64xi32>
    %c0_i32_33 = arith.constant 0 : i32
    %96 = vector.broadcast %c0_i32_33 : i32 to vector<16x64xi32>
    %97 = arith.cmpi eq, %95, %96 : vector<16x64xi32>
    %cst_34 = arith.constant 0.000000e+00 : f32
    %98 = vector.broadcast %cst_34 : f32 to vector<16x64xf32>
    %99 = arith.select %97, %98, %90 : vector<16x64xi1>, vector<16x64xf32>
    %c7_i32_35 = arith.constant 7 : i32
    %100 = vector.broadcast %c7_i32_35 : i32 to vector<16x64xi32>
    %101 = arith.cmpi eq, %95, %100 : vector<16x64xi32>
    %cst_36 = arith.constant 0.000000e+00 : f32
    %102 = vector.broadcast %cst_36 : f32 to vector<16x64xf32>
    %103 = arith.select %101, %102, %92 : vector<16x64xi1>, vector<16x64xf32>
    %104 = tpu.concatenate %99, %87, %103 in 1 : vector<16x64xf32>, vector<16x64xf32>, vector<16x64xf32> -> vector<16x192xf32>
    %c800 = arith.constant 800 : index
    %c0_37 = arith.constant 0 : index
    %105 = vector.load %arg1[%c800, %c0_37] : memref<3776x128xbf16, #tpu.memory_space<vmem>>, vector<192x128xbf16>
    %106 = arith.truncf %104 : vector<16x192xf32> to vector<16x192xbf16>
    %cst_38 = arith.constant dense<0.000000e+00> : vector<16x128xf32>
    %107 = tpu.matmul %106, %105, %cst_38 {dimension_numbers = #tpu.dot_dimension_numbers<[1], [0], [0], [1], [0, 0, 1, 1], [], []>} : vector<16x192xbf16>, vector<192x128xbf16>, vector<16x128xf32> -> vector<16x128xf32>
    %c992 = arith.constant 992 : index
    %c0_39 = arith.constant 0 : index
    %108 = vector.load %arg1[%c992, %c0_39] : memref<3776x128xbf16, #tpu.memory_space<vmem>>, vector<1x128xbf16>
    %109 = arith.extf %108 : vector<1x128xbf16> to vector<1x128xf32>
    %110 = vector.broadcast %109 : vector<1x128xf32> to vector<16x128xf32>
    %111 = arith.addf %107, %110 : vector<16x128xf32>
    %cst_40 = arith.constant 0.000000e+00 : f32
    %112 = vector.broadcast %cst_40 : f32 to vector<16x128xf32>
    %113 = arith.maximumf %111, %112 : vector<16x128xf32>
    %cst_41 = arith.constant 0.000000e+00 : f32
    %114 = vector.broadcast %cst_41 : f32 to vector<1x128xf32>
    %115 = vector.extract_strided_slice %113 {offsets = [0, 0], sizes = [15, 128], strides = [1, 1]} : vector<16x128xf32> to vector<15x128xf32>
    %116 = tpu.concatenate %114, %115 in 0 : vector<1x128xf32>, vector<15x128xf32> -> vector<16x128xf32>
    %117 = vector.extract_strided_slice %113 {offsets = [1, 0], sizes = [15, 128], strides = [1, 1]} : vector<16x128xf32> to vector<15x128xf32>
    %118 = tpu.concatenate %117, %114 in 0 : vector<15x128xf32>, vector<1x128xf32> -> vector<16x128xf32>
    %119 = tpu.iota {dimensions = array<i32: 0>} : vector<16x128xi32>
    %c7_i32_42 = arith.constant 7 : i32
    %120 = vector.broadcast %c7_i32_42 : i32 to vector<16x128xi32>
    %121 = arith.andi %119, %120 : vector<16x128xi32>
    %c0_i32_43 = arith.constant 0 : i32
    %122 = vector.broadcast %c0_i32_43 : i32 to vector<16x128xi32>
    %123 = arith.cmpi eq, %121, %122 : vector<16x128xi32>
    %cst_44 = arith.constant 0.000000e+00 : f32
    %124 = vector.broadcast %cst_44 : f32 to vector<16x128xf32>
    %125 = arith.select %123, %124, %116 : vector<16x128xi1>, vector<16x128xf32>
    %c7_i32_45 = arith.constant 7 : i32
    %126 = vector.broadcast %c7_i32_45 : i32 to vector<16x128xi32>
    %127 = arith.cmpi eq, %121, %126 : vector<16x128xi32>
    %cst_46 = arith.constant 0.000000e+00 : f32
    %128 = vector.broadcast %cst_46 : f32 to vector<16x128xf32>
    %129 = arith.select %127, %128, %118 : vector<16x128xi1>, vector<16x128xf32>
    %130 = tpu.concatenate %125, %113, %129 in 1 : vector<16x128xf32>, vector<16x128xf32>, vector<16x128xf32> -> vector<16x384xf32>
    %c1008 = arith.constant 1008 : index
    %c0_47 = arith.constant 0 : index
    %131 = vector.load %arg1[%c1008, %c0_47] : memref<3776x128xbf16, #tpu.memory_space<vmem>>, vector<384x64xbf16>
    %132 = arith.truncf %130 : vector<16x384xf32> to vector<16x384xbf16>
    %cst_48 = arith.constant dense<0.000000e+00> : vector<16x64xf32>
    %133 = tpu.matmul %132, %131, %cst_48 {dimension_numbers = #tpu.dot_dimension_numbers<[1], [0], [0], [1], [0, 0, 1, 1], [], []>} : vector<16x384xbf16>, vector<384x64xbf16>, vector<16x64xf32> -> vector<16x64xf32>
    %134 = arith.addf %87, %133 : vector<16x64xf32>
    %c1392 = arith.constant 1392 : index
    %c0_49 = arith.constant 0 : index
    %135 = vector.load %arg1[%c1392, %c0_49] : memref<3776x128xbf16, #tpu.memory_space<vmem>>, vector<1x64xbf16>
    %136 = arith.extf %135 : vector<1x64xbf16> to vector<1x64xf32>
    %137 = vector.broadcast %136 : vector<1x64xf32> to vector<16x64xf32>
    %138 = arith.addf %134, %137 : vector<16x64xf32>
    %cst_50 = arith.constant 0.000000e+00 : f32
    %139 = vector.broadcast %cst_50 : f32 to vector<16x64xf32>
    %140 = arith.maximumf %138, %139 : vector<16x64xf32>
    %c1408 = arith.constant 1408 : index
    %c0_51 = arith.constant 0 : index
    %141 = vector.load %arg1[%c1408, %c0_51] : memref<3776x128xbf16, #tpu.memory_space<vmem>>, vector<64x128xbf16>
    %142 = arith.truncf %140 : vector<16x64xf32> to vector<16x64xbf16>
    %cst_52 = arith.constant dense<0.000000e+00> : vector<16x128xf32>
    %143 = tpu.matmul %142, %141, %cst_52 {dimension_numbers = #tpu.dot_dimension_numbers<[1], [0], [0], [1], [0, 0, 1, 1], [], []>} : vector<16x64xbf16>, vector<64x128xbf16>, vector<16x128xf32> -> vector<16x128xf32>
    %c1472 = arith.constant 1472 : index
    %c0_53 = arith.constant 0 : index
    %144 = vector.load %arg1[%c1472, %c0_53] : memref<3776x128xbf16, #tpu.memory_space<vmem>>, vector<32x16xbf16>
    %cst_54 = arith.constant dense<0.000000e+00> : vector<32x128xf32>
    %145 = tpu.matmul %144, %143, %cst_54 {dimension_numbers = #tpu.dot_dimension_numbers<[1], [0], [0], [1], [0, 0, 1, 1], [], []>} : vector<32x16xbf16>, vector<16x128xf32>, vector<32x128xf32> -> vector<32x128xf32>
    %146 = tpu.iota {dimensions = array<i32: 0>} : vector<32x64xi32>
    %c1_i32_55 = arith.constant 1 : i32
    %147 = vector.broadcast %c1_i32_55 : i32 to vector<32x64xi32>
    %148 = arith.andi %146, %147 : vector<32x64xi32>
    %c0_i32_56 = arith.constant 0 : i32
    %149 = vector.broadcast %c0_i32_56 : i32 to vector<32x64xi32>
    %150 = arith.cmpi eq, %148, %149 : vector<32x64xi32>
    %151 = vector.extract_strided_slice %145 {offsets = [0, 0], sizes = [32, 64], strides = [1, 1]} : vector<32x128xf32> to vector<32x64xf32>
    %152 = vector.extract_strided_slice %145 {offsets = [0, 64], sizes = [32, 64], strides = [1, 1]} : vector<32x128xf32> to vector<32x64xf32>
    %153 = arith.select %150, %151, %152 : vector<32x64xi1>, vector<32x64xf32>
    %c1504 = arith.constant 1504 : index
    %c0_57 = arith.constant 0 : index
    %154 = vector.load %arg1[%c1504, %c0_57] : memref<3776x128xbf16, #tpu.memory_space<vmem>>, vector<1x64xbf16>
    %155 = arith.extf %154 : vector<1x64xbf16> to vector<1x64xf32>
    %156 = vector.broadcast %155 : vector<1x64xf32> to vector<32x64xf32>
    %157 = arith.addf %153, %156 : vector<32x64xf32>
    %cst_58 = arith.constant 0.000000e+00 : f32
    %158 = vector.broadcast %cst_58 : f32 to vector<1x64xf32>
    %159 = vector.extract_strided_slice %157 {offsets = [0, 0], sizes = [31, 64], strides = [1, 1]} : vector<32x64xf32> to vector<31x64xf32>
    %160 = tpu.concatenate %158, %159 in 0 : vector<1x64xf32>, vector<31x64xf32> -> vector<32x64xf32>
    %161 = vector.extract_strided_slice %157 {offsets = [1, 0], sizes = [31, 64], strides = [1, 1]} : vector<32x64xf32> to vector<31x64xf32>
    %162 = tpu.concatenate %161, %158 in 0 : vector<31x64xf32>, vector<1x64xf32> -> vector<32x64xf32>
    %163 = tpu.iota {dimensions = array<i32: 0>} : vector<32x64xi32>
    %c15_i32 = arith.constant 15 : i32
    %164 = vector.broadcast %c15_i32 : i32 to vector<32x64xi32>
    %165 = arith.andi %163, %164 : vector<32x64xi32>
    %c0_i32_59 = arith.constant 0 : i32
    %166 = vector.broadcast %c0_i32_59 : i32 to vector<32x64xi32>
    %167 = arith.cmpi eq, %165, %166 : vector<32x64xi32>
    %cst_60 = arith.constant 0.000000e+00 : f32
    %168 = vector.broadcast %cst_60 : f32 to vector<32x64xf32>
    %169 = arith.select %167, %168, %160 : vector<32x64xi1>, vector<32x64xf32>
    %c15_i32_61 = arith.constant 15 : i32
    %170 = vector.broadcast %c15_i32_61 : i32 to vector<32x64xi32>
    %171 = arith.cmpi eq, %165, %170 : vector<32x64xi32>
    %cst_62 = arith.constant 0.000000e+00 : f32
    %172 = vector.broadcast %cst_62 : f32 to vector<32x64xf32>
    %173 = arith.select %171, %172, %162 : vector<32x64xi1>, vector<32x64xf32>
    %174 = tpu.concatenate %169, %157, %173 in 1 : vector<32x64xf32>, vector<32x64xf32>, vector<32x64xf32> -> vector<32x192xf32>
    %c1520 = arith.constant 1520 : index
    %c0_63 = arith.constant 0 : index
    %175 = vector.load %arg1[%c1520, %c0_63] : memref<3776x128xbf16, #tpu.memory_space<vmem>>, vector<192x128xbf16>
    %176 = arith.truncf %174 : vector<32x192xf32> to vector<32x192xbf16>
    %cst_64 = arith.constant dense<0.000000e+00> : vector<32x128xf32>
    %177 = tpu.matmul %176, %175, %cst_64 {dimension_numbers = #tpu.dot_dimension_numbers<[1], [0], [0], [1], [0, 0, 1, 1], [], []>} : vector<32x192xbf16>, vector<192x128xbf16>, vector<32x128xf32> -> vector<32x128xf32>
    %c1712 = arith.constant 1712 : index
    %c0_65 = arith.constant 0 : index
    %178 = vector.load %arg1[%c1712, %c0_65] : memref<3776x128xbf16, #tpu.memory_space<vmem>>, vector<1x128xbf16>
    %179 = arith.extf %178 : vector<1x128xbf16> to vector<1x128xf32>
    %180 = vector.broadcast %179 : vector<1x128xf32> to vector<32x128xf32>
    %181 = arith.addf %177, %180 : vector<32x128xf32>
    %cst_66 = arith.constant 0.000000e+00 : f32
    %182 = vector.broadcast %cst_66 : f32 to vector<32x128xf32>
    %183 = arith.maximumf %181, %182 : vector<32x128xf32>
    %cst_67 = arith.constant 0.000000e+00 : f32
    %184 = vector.broadcast %cst_67 : f32 to vector<1x128xf32>
    %185 = vector.extract_strided_slice %183 {offsets = [0, 0], sizes = [31, 128], strides = [1, 1]} : vector<32x128xf32> to vector<31x128xf32>
    %186 = tpu.concatenate %184, %185 in 0 : vector<1x128xf32>, vector<31x128xf32> -> vector<32x128xf32>
    %187 = vector.extract_strided_slice %183 {offsets = [1, 0], sizes = [31, 128], strides = [1, 1]} : vector<32x128xf32> to vector<31x128xf32>
    %188 = tpu.concatenate %187, %184 in 0 : vector<31x128xf32>, vector<1x128xf32> -> vector<32x128xf32>
    %189 = tpu.iota {dimensions = array<i32: 0>} : vector<32x128xi32>
    %c15_i32_68 = arith.constant 15 : i32
    %190 = vector.broadcast %c15_i32_68 : i32 to vector<32x128xi32>
    %191 = arith.andi %189, %190 : vector<32x128xi32>
    %c0_i32_69 = arith.constant 0 : i32
    %192 = vector.broadcast %c0_i32_69 : i32 to vector<32x128xi32>
    %193 = arith.cmpi eq, %191, %192 : vector<32x128xi32>
    %cst_70 = arith.constant 0.000000e+00 : f32
    %194 = vector.broadcast %cst_70 : f32 to vector<32x128xf32>
    %195 = arith.select %193, %194, %186 : vector<32x128xi1>, vector<32x128xf32>
    %c15_i32_71 = arith.constant 15 : i32
    %196 = vector.broadcast %c15_i32_71 : i32 to vector<32x128xi32>
    %197 = arith.cmpi eq, %191, %196 : vector<32x128xi32>
    %cst_72 = arith.constant 0.000000e+00 : f32
    %198 = vector.broadcast %cst_72 : f32 to vector<32x128xf32>
    %199 = arith.select %197, %198, %188 : vector<32x128xi1>, vector<32x128xf32>
    %200 = tpu.concatenate %195, %183, %199 in 1 : vector<32x128xf32>, vector<32x128xf32>, vector<32x128xf32> -> vector<32x384xf32>
    %c1728 = arith.constant 1728 : index
    %c0_73 = arith.constant 0 : index
    %201 = vector.load %arg1[%c1728, %c0_73] : memref<3776x128xbf16, #tpu.memory_space<vmem>>, vector<384x64xbf16>
    %202 = arith.truncf %200 : vector<32x384xf32> to vector<32x384xbf16>
    %cst_74 = arith.constant dense<0.000000e+00> : vector<32x64xf32>
    %203 = tpu.matmul %202, %201, %cst_74 {dimension_numbers = #tpu.dot_dimension_numbers<[1], [0], [0], [1], [0, 0, 1, 1], [], []>} : vector<32x384xbf16>, vector<384x64xbf16>, vector<32x64xf32> -> vector<32x64xf32>
    %204 = arith.addf %157, %203 : vector<32x64xf32>
    %c2112 = arith.constant 2112 : index
    %c0_75 = arith.constant 0 : index
    %205 = vector.load %arg1[%c2112, %c0_75] : memref<3776x128xbf16, #tpu.memory_space<vmem>>, vector<1x64xbf16>
    %206 = arith.extf %205 : vector<1x64xbf16> to vector<1x64xf32>
    %207 = vector.broadcast %206 : vector<1x64xf32> to vector<32x64xf32>
    %208 = arith.addf %204, %207 : vector<32x64xf32>
    %cst_76 = arith.constant 0.000000e+00 : f32
    %209 = vector.broadcast %cst_76 : f32 to vector<32x64xf32>
    %210 = arith.maximumf %208, %209 : vector<32x64xf32>
    %c2128 = arith.constant 2128 : index
    %c0_77 = arith.constant 0 : index
    %211 = vector.load %arg1[%c2128, %c0_77] : memref<3776x128xbf16, #tpu.memory_space<vmem>>, vector<64x128xbf16>
    %212 = arith.truncf %210 : vector<32x64xf32> to vector<32x64xbf16>
    %cst_78 = arith.constant dense<0.000000e+00> : vector<32x128xf32>
    %213 = tpu.matmul %212, %211, %cst_78 {dimension_numbers = #tpu.dot_dimension_numbers<[1], [0], [0], [1], [0, 0, 1, 1], [], []>} : vector<32x64xbf16>, vector<64x128xbf16>, vector<32x128xf32> -> vector<32x128xf32>
    %c2192 = arith.constant 2192 : index
    %c0_79 = arith.constant 0 : index
    %214 = vector.load %arg1[%c2192, %c0_79] : memref<3776x128xbf16, #tpu.memory_space<vmem>>, vector<64x32xbf16>
    %cst_80 = arith.constant dense<0.000000e+00> : vector<64x128xf32>
    %215 = tpu.matmul %214, %213, %cst_80 {dimension_numbers = #tpu.dot_dimension_numbers<[1], [0], [0], [1], [0, 0, 1, 1], [], []>} : vector<64x32xbf16>, vector<32x128xf32>, vector<64x128xf32> -> vector<64x128xf32>
    %216 = tpu.iota {dimensions = array<i32: 0>} : vector<64x64xi32>
    %c1_i32_81 = arith.constant 1 : i32
    %217 = vector.broadcast %c1_i32_81 : i32 to vector<64x64xi32>
    %218 = arith.andi %216, %217 : vector<64x64xi32>
    %c0_i32_82 = arith.constant 0 : i32
    %219 = vector.broadcast %c0_i32_82 : i32 to vector<64x64xi32>
    %220 = arith.cmpi eq, %218, %219 : vector<64x64xi32>
    %221 = vector.extract_strided_slice %215 {offsets = [0, 0], sizes = [64, 64], strides = [1, 1]} : vector<64x128xf32> to vector<64x64xf32>
    %222 = vector.extract_strided_slice %215 {offsets = [0, 64], sizes = [64, 64], strides = [1, 1]} : vector<64x128xf32> to vector<64x64xf32>
    %223 = arith.select %220, %221, %222 : vector<64x64xi1>, vector<64x64xf32>
    %c2256 = arith.constant 2256 : index
    %c0_83 = arith.constant 0 : index
    %224 = vector.load %arg1[%c2256, %c0_83] : memref<3776x128xbf16, #tpu.memory_space<vmem>>, vector<1x64xbf16>
    %225 = arith.extf %224 : vector<1x64xbf16> to vector<1x64xf32>
    %226 = vector.broadcast %225 : vector<1x64xf32> to vector<64x64xf32>
    %227 = arith.addf %223, %226 : vector<64x64xf32>
    %cst_84 = arith.constant 0.000000e+00 : f32
    %228 = vector.broadcast %cst_84 : f32 to vector<1x64xf32>
    %229 = vector.extract_strided_slice %227 {offsets = [0, 0], sizes = [63, 64], strides = [1, 1]} : vector<64x64xf32> to vector<63x64xf32>
    %230 = tpu.concatenate %228, %229 in 0 : vector<1x64xf32>, vector<63x64xf32> -> vector<64x64xf32>
    %231 = vector.extract_strided_slice %227 {offsets = [1, 0], sizes = [63, 64], strides = [1, 1]} : vector<64x64xf32> to vector<63x64xf32>
    %232 = tpu.concatenate %231, %228 in 0 : vector<63x64xf32>, vector<1x64xf32> -> vector<64x64xf32>
    %233 = tpu.iota {dimensions = array<i32: 0>} : vector<64x64xi32>
    %c31_i32 = arith.constant 31 : i32
    %234 = vector.broadcast %c31_i32 : i32 to vector<64x64xi32>
    %235 = arith.andi %233, %234 : vector<64x64xi32>
    %c0_i32_85 = arith.constant 0 : i32
    %236 = vector.broadcast %c0_i32_85 : i32 to vector<64x64xi32>
    %237 = arith.cmpi eq, %235, %236 : vector<64x64xi32>
    %cst_86 = arith.constant 0.000000e+00 : f32
    %238 = vector.broadcast %cst_86 : f32 to vector<64x64xf32>
    %239 = arith.select %237, %238, %230 : vector<64x64xi1>, vector<64x64xf32>
    %c31_i32_87 = arith.constant 31 : i32
    %240 = vector.broadcast %c31_i32_87 : i32 to vector<64x64xi32>
    %241 = arith.cmpi eq, %235, %240 : vector<64x64xi32>
    %cst_88 = arith.constant 0.000000e+00 : f32
    %242 = vector.broadcast %cst_88 : f32 to vector<64x64xf32>
    %243 = arith.select %241, %242, %232 : vector<64x64xi1>, vector<64x64xf32>
    %244 = tpu.concatenate %239, %227, %243 in 1 : vector<64x64xf32>, vector<64x64xf32>, vector<64x64xf32> -> vector<64x192xf32>
    %c2272 = arith.constant 2272 : index
    %c0_89 = arith.constant 0 : index
    %245 = vector.load %arg1[%c2272, %c0_89] : memref<3776x128xbf16, #tpu.memory_space<vmem>>, vector<192x128xbf16>
    %246 = arith.truncf %244 : vector<64x192xf32> to vector<64x192xbf16>
    %cst_90 = arith.constant dense<0.000000e+00> : vector<64x128xf32>
    %247 = tpu.matmul %246, %245, %cst_90 {dimension_numbers = #tpu.dot_dimension_numbers<[1], [0], [0], [1], [0, 0, 1, 1], [], []>} : vector<64x192xbf16>, vector<192x128xbf16>, vector<64x128xf32> -> vector<64x128xf32>
    %c2464 = arith.constant 2464 : index
    %c0_91 = arith.constant 0 : index
    %248 = vector.load %arg1[%c2464, %c0_91] : memref<3776x128xbf16, #tpu.memory_space<vmem>>, vector<1x128xbf16>
    %249 = arith.extf %248 : vector<1x128xbf16> to vector<1x128xf32>
    %250 = vector.broadcast %249 : vector<1x128xf32> to vector<64x128xf32>
    %251 = arith.addf %247, %250 : vector<64x128xf32>
    %cst_92 = arith.constant 0.000000e+00 : f32
    %252 = vector.broadcast %cst_92 : f32 to vector<64x128xf32>
    %253 = arith.maximumf %251, %252 : vector<64x128xf32>
    %cst_93 = arith.constant 0.000000e+00 : f32
    %254 = vector.broadcast %cst_93 : f32 to vector<1x128xf32>
    %255 = vector.extract_strided_slice %253 {offsets = [0, 0], sizes = [63, 128], strides = [1, 1]} : vector<64x128xf32> to vector<63x128xf32>
    %256 = tpu.concatenate %254, %255 in 0 : vector<1x128xf32>, vector<63x128xf32> -> vector<64x128xf32>
    %257 = vector.extract_strided_slice %253 {offsets = [1, 0], sizes = [63, 128], strides = [1, 1]} : vector<64x128xf32> to vector<63x128xf32>
    %258 = tpu.concatenate %257, %254 in 0 : vector<63x128xf32>, vector<1x128xf32> -> vector<64x128xf32>
    %259 = tpu.iota {dimensions = array<i32: 0>} : vector<64x128xi32>
    %c31_i32_94 = arith.constant 31 : i32
    %260 = vector.broadcast %c31_i32_94 : i32 to vector<64x128xi32>
    %261 = arith.andi %259, %260 : vector<64x128xi32>
    %c0_i32_95 = arith.constant 0 : i32
    %262 = vector.broadcast %c0_i32_95 : i32 to vector<64x128xi32>
    %263 = arith.cmpi eq, %261, %262 : vector<64x128xi32>
    %cst_96 = arith.constant 0.000000e+00 : f32
    %264 = vector.broadcast %cst_96 : f32 to vector<64x128xf32>
    %265 = arith.select %263, %264, %256 : vector<64x128xi1>, vector<64x128xf32>
    %c31_i32_97 = arith.constant 31 : i32
    %266 = vector.broadcast %c31_i32_97 : i32 to vector<64x128xi32>
    %267 = arith.cmpi eq, %261, %266 : vector<64x128xi32>
    %cst_98 = arith.constant 0.000000e+00 : f32
    %268 = vector.broadcast %cst_98 : f32 to vector<64x128xf32>
    %269 = arith.select %267, %268, %258 : vector<64x128xi1>, vector<64x128xf32>
    %270 = tpu.concatenate %265, %253, %269 in 1 : vector<64x128xf32>, vector<64x128xf32>, vector<64x128xf32> -> vector<64x384xf32>
    %c2480 = arith.constant 2480 : index
    %c0_99 = arith.constant 0 : index
    %271 = vector.load %arg1[%c2480, %c0_99] : memref<3776x128xbf16, #tpu.memory_space<vmem>>, vector<384x64xbf16>
    %272 = arith.truncf %270 : vector<64x384xf32> to vector<64x384xbf16>
    %cst_100 = arith.constant dense<0.000000e+00> : vector<64x64xf32>
    %273 = tpu.matmul %272, %271, %cst_100 {dimension_numbers = #tpu.dot_dimension_numbers<[1], [0], [0], [1], [0, 0, 1, 1], [], []>} : vector<64x384xbf16>, vector<384x64xbf16>, vector<64x64xf32> -> vector<64x64xf32>
    %274 = arith.addf %227, %273 : vector<64x64xf32>
    %c2864 = arith.constant 2864 : index
    %c0_101 = arith.constant 0 : index
    %275 = vector.load %arg1[%c2864, %c0_101] : memref<3776x128xbf16, #tpu.memory_space<vmem>>, vector<1x64xbf16>
    %276 = arith.extf %275 : vector<1x64xbf16> to vector<1x64xf32>
    %277 = vector.broadcast %276 : vector<1x64xf32> to vector<64x64xf32>
    %278 = arith.addf %274, %277 : vector<64x64xf32>
    %cst_102 = arith.constant 0.000000e+00 : f32
    %279 = vector.broadcast %cst_102 : f32 to vector<64x64xf32>
    %280 = arith.maximumf %278, %279 : vector<64x64xf32>
    %c2880 = arith.constant 2880 : index
    %c0_103 = arith.constant 0 : index
    %281 = vector.load %arg1[%c2880, %c0_103] : memref<3776x128xbf16, #tpu.memory_space<vmem>>, vector<64x128xbf16>
    %282 = arith.truncf %280 : vector<64x64xf32> to vector<64x64xbf16>
    %cst_104 = arith.constant dense<0.000000e+00> : vector<64x128xf32>
    %283 = tpu.matmul %282, %281, %cst_104 {dimension_numbers = #tpu.dot_dimension_numbers<[1], [0], [0], [1], [0, 0, 1, 1], [], []>} : vector<64x64xbf16>, vector<64x128xbf16>, vector<64x128xf32> -> vector<64x128xf32>
    %c2944 = arith.constant 2944 : index
    %c0_105 = arith.constant 0 : index
    %284 = vector.load %arg1[%c2944, %c0_105] : memref<3776x128xbf16, #tpu.memory_space<vmem>>, vector<128x64xbf16>
    %cst_106 = arith.constant dense<0.000000e+00> : vector<128x128xf32>
    %285 = tpu.matmul %284, %283, %cst_106 {dimension_numbers = #tpu.dot_dimension_numbers<[1], [0], [0], [1], [0, 0, 1, 1], [], []>} : vector<128x64xbf16>, vector<64x128xf32>, vector<128x128xf32> -> vector<128x128xf32>
    %286 = tpu.iota {dimensions = array<i32: 0>} : vector<128x64xi32>
    %c1_i32_107 = arith.constant 1 : i32
    %287 = vector.broadcast %c1_i32_107 : i32 to vector<128x64xi32>
    %288 = arith.andi %286, %287 : vector<128x64xi32>
    %c0_i32_108 = arith.constant 0 : i32
    %289 = vector.broadcast %c0_i32_108 : i32 to vector<128x64xi32>
    %290 = arith.cmpi eq, %288, %289 : vector<128x64xi32>
    %291 = vector.extract_strided_slice %285 {offsets = [0, 0], sizes = [128, 64], strides = [1, 1]} : vector<128x128xf32> to vector<128x64xf32>
    %292 = vector.extract_strided_slice %285 {offsets = [0, 64], sizes = [128, 64], strides = [1, 1]} : vector<128x128xf32> to vector<128x64xf32>
    %293 = arith.select %290, %291, %292 : vector<128x64xi1>, vector<128x64xf32>
    %c3072 = arith.constant 3072 : index
    %c0_109 = arith.constant 0 : index
    %294 = vector.load %arg1[%c3072, %c0_109] : memref<3776x128xbf16, #tpu.memory_space<vmem>>, vector<1x64xbf16>
    %295 = arith.extf %294 : vector<1x64xbf16> to vector<1x64xf32>
    %296 = vector.broadcast %295 : vector<1x64xf32> to vector<128x64xf32>
    %297 = arith.addf %293, %296 : vector<128x64xf32>
    %cst_110 = arith.constant 0.000000e+00 : f32
    %298 = vector.broadcast %cst_110 : f32 to vector<1x64xf32>
    %299 = vector.extract_strided_slice %297 {offsets = [0, 0], sizes = [127, 64], strides = [1, 1]} : vector<128x64xf32> to vector<127x64xf32>
    %300 = tpu.concatenate %298, %299 in 0 : vector<1x64xf32>, vector<127x64xf32> -> vector<128x64xf32>
    %301 = vector.extract_strided_slice %297 {offsets = [1, 0], sizes = [127, 64], strides = [1, 1]} : vector<128x64xf32> to vector<127x64xf32>
    %302 = tpu.concatenate %301, %298 in 0 : vector<127x64xf32>, vector<1x64xf32> -> vector<128x64xf32>
    %303 = tpu.iota {dimensions = array<i32: 0>} : vector<128x64xi32>
    %c63_i32 = arith.constant 63 : i32
    %304 = vector.broadcast %c63_i32 : i32 to vector<128x64xi32>
    %305 = arith.andi %303, %304 : vector<128x64xi32>
    %c0_i32_111 = arith.constant 0 : i32
    %306 = vector.broadcast %c0_i32_111 : i32 to vector<128x64xi32>
    %307 = arith.cmpi eq, %305, %306 : vector<128x64xi32>
    %cst_112 = arith.constant 0.000000e+00 : f32
    %308 = vector.broadcast %cst_112 : f32 to vector<128x64xf32>
    %309 = arith.select %307, %308, %300 : vector<128x64xi1>, vector<128x64xf32>
    %c63_i32_113 = arith.constant 63 : i32
    %310 = vector.broadcast %c63_i32_113 : i32 to vector<128x64xi32>
    %311 = arith.cmpi eq, %305, %310 : vector<128x64xi32>
    %cst_114 = arith.constant 0.000000e+00 : f32
    %312 = vector.broadcast %cst_114 : f32 to vector<128x64xf32>
    %313 = arith.select %311, %312, %302 : vector<128x64xi1>, vector<128x64xf32>
    %314 = tpu.concatenate %309, %297, %313 in 1 : vector<128x64xf32>, vector<128x64xf32>, vector<128x64xf32> -> vector<128x192xf32>
    %c3088 = arith.constant 3088 : index
    %c0_115 = arith.constant 0 : index
    %315 = vector.load %arg1[%c3088, %c0_115] : memref<3776x128xbf16, #tpu.memory_space<vmem>>, vector<192x128xbf16>
    %316 = arith.truncf %314 : vector<128x192xf32> to vector<128x192xbf16>
    %cst_116 = arith.constant dense<0.000000e+00> : vector<128x128xf32>
    %317 = tpu.matmul %316, %315, %cst_116 {dimension_numbers = #tpu.dot_dimension_numbers<[1], [0], [0], [1], [0, 0, 1, 1], [], []>} : vector<128x192xbf16>, vector<192x128xbf16>, vector<128x128xf32> -> vector<128x128xf32>
    %c3280 = arith.constant 3280 : index
    %c0_117 = arith.constant 0 : index
    %318 = vector.load %arg1[%c3280, %c0_117] : memref<3776x128xbf16, #tpu.memory_space<vmem>>, vector<1x128xbf16>
    %319 = arith.extf %318 : vector<1x128xbf16> to vector<1x128xf32>
    %320 = vector.broadcast %319 : vector<1x128xf32> to vector<128x128xf32>
    %321 = arith.addf %317, %320 : vector<128x128xf32>
    %cst_118 = arith.constant 0.000000e+00 : f32
    %322 = vector.broadcast %cst_118 : f32 to vector<128x128xf32>
    %323 = arith.maximumf %321, %322 : vector<128x128xf32>
    %cst_119 = arith.constant 0.000000e+00 : f32
    %324 = vector.broadcast %cst_119 : f32 to vector<1x128xf32>
    %325 = vector.extract_strided_slice %323 {offsets = [0, 0], sizes = [127, 128], strides = [1, 1]} : vector<128x128xf32> to vector<127x128xf32>
    %326 = tpu.concatenate %324, %325 in 0 : vector<1x128xf32>, vector<127x128xf32> -> vector<128x128xf32>
    %327 = vector.extract_strided_slice %323 {offsets = [1, 0], sizes = [127, 128], strides = [1, 1]} : vector<128x128xf32> to vector<127x128xf32>
    %328 = tpu.concatenate %327, %324 in 0 : vector<127x128xf32>, vector<1x128xf32> -> vector<128x128xf32>
    %329 = tpu.iota {dimensions = array<i32: 0>} : vector<128x128xi32>
    %c63_i32_120 = arith.constant 63 : i32
    %330 = vector.broadcast %c63_i32_120 : i32 to vector<128x128xi32>
    %331 = arith.andi %329, %330 : vector<128x128xi32>
    %c0_i32_121 = arith.constant 0 : i32
    %332 = vector.broadcast %c0_i32_121 : i32 to vector<128x128xi32>
    %333 = arith.cmpi eq, %331, %332 : vector<128x128xi32>
    %cst_122 = arith.constant 0.000000e+00 : f32
    %334 = vector.broadcast %cst_122 : f32 to vector<128x128xf32>
    %335 = arith.select %333, %334, %326 : vector<128x128xi1>, vector<128x128xf32>
    %c63_i32_123 = arith.constant 63 : i32
    %336 = vector.broadcast %c63_i32_123 : i32 to vector<128x128xi32>
    %337 = arith.cmpi eq, %331, %336 : vector<128x128xi32>
    %cst_124 = arith.constant 0.000000e+00 : f32
    %338 = vector.broadcast %cst_124 : f32 to vector<128x128xf32>
    %339 = arith.select %337, %338, %328 : vector<128x128xi1>, vector<128x128xf32>
    %340 = tpu.concatenate %335, %323, %339 in 1 : vector<128x128xf32>, vector<128x128xf32>, vector<128x128xf32> -> vector<128x384xf32>
    %c3296 = arith.constant 3296 : index
    %c0_125 = arith.constant 0 : index
    %341 = vector.load %arg1[%c3296, %c0_125] : memref<3776x128xbf16, #tpu.memory_space<vmem>>, vector<384x64xbf16>
    %342 = arith.truncf %340 : vector<128x384xf32> to vector<128x384xbf16>
    %cst_126 = arith.constant dense<0.000000e+00> : vector<128x64xf32>
    %343 = tpu.matmul %342, %341, %cst_126 {dimension_numbers = #tpu.dot_dimension_numbers<[1], [0], [0], [1], [0, 0, 1, 1], [], []>} : vector<128x384xbf16>, vector<384x64xbf16>, vector<128x64xf32> -> vector<128x64xf32>
    %344 = arith.addf %297, %343 : vector<128x64xf32>
    %c3680 = arith.constant 3680 : index
    %c0_127 = arith.constant 0 : index
    %345 = vector.load %arg1[%c3680, %c0_127] : memref<3776x128xbf16, #tpu.memory_space<vmem>>, vector<1x64xbf16>
    %346 = arith.extf %345 : vector<1x64xbf16> to vector<1x64xf32>
    %347 = vector.broadcast %346 : vector<1x64xf32> to vector<128x64xf32>
    %348 = arith.addf %344, %347 : vector<128x64xf32>
    %cst_128 = arith.constant 0.000000e+00 : f32
    %349 = vector.broadcast %cst_128 : f32 to vector<128x64xf32>
    %350 = arith.maximumf %348, %349 : vector<128x64xf32>
    %c3696 = arith.constant 3696 : index
    %c0_129 = arith.constant 0 : index
    %351 = vector.load %arg1[%c3696, %c0_129] : memref<3776x128xbf16, #tpu.memory_space<vmem>>, vector<64x128xbf16>
    %352 = arith.truncf %350 : vector<128x64xf32> to vector<128x64xbf16>
    %cst_130 = arith.constant dense<0.000000e+00> : vector<128x128xf32>
    %353 = tpu.matmul %352, %351, %cst_130 {dimension_numbers = #tpu.dot_dimension_numbers<[1], [0], [0], [1], [0, 0, 1, 1], [], []>} : vector<128x64xbf16>, vector<64x128xbf16>, vector<128x128xf32> -> vector<128x128xf32>
    %c3760 = arith.constant 3760 : index
    %c0_131 = arith.constant 0 : index
    %354 = vector.load %arg1[%c3760, %c0_131] : memref<3776x128xbf16, #tpu.memory_space<vmem>>, vector<1x128xbf16>
    %355 = arith.extf %354 : vector<1x128xbf16> to vector<1x128xf32>
    %356 = vector.broadcast %355 : vector<1x128xf32> to vector<128x128xf32>
    %357 = arith.addf %353, %356 : vector<128x128xf32>
    %c0_132 = arith.constant 0 : index
    %c0_133 = arith.constant 0 : index
    %358 = vector.load %arg2[%c0_132, %c0_133] : memref<128x128xf32, #tpu.memory_space<vmem>>, vector<128x128xf32>
    tpu.vector_store %arg2[%c0_132, %c0_133], %357 {strides = array<i32>} : memref<128x128xf32, #tpu.memory_space<vmem>>, vector<128x128xf32>,
    return
  }
}

</mosaic_0001>

<llo_original>
// kernel: forward.1
$region0: #{forward.1}
  #allocation0 [shape = 'u32[]', space=smem, size = 0x4, offset = 0x4, fixed_abs, tag = 'smem constant byte address 0x4 - core index']
  #allocation1 [shape = 'u32[144,128]{1,0:T(1,128)}', space=vmem, size = 0x12000, scoped, tag = 'internal scratch']
  %s0 = inlined_call_operand.vmem [shape: f32[4,64], index: 0, kind: input, shape index: {}]
  %s1 = inlined_call_operand.hbm [shape: bf16[3776,128], index: 1, kind: input, shape index: {}]
  %s2 = inlined_call_operand.vmem [shape: f32[128,128], index: 2, kind: output, shape index: {}]
  %s3 = sld [smem:[#allocation0]]
  $region22: #{forward.1} parent=0
    _
  %s5 = ssub.s32 1, %s3
  %s6 = scalar_select 0, %s5, %s3
  $region1: #{forward.1} parent=0
    #allocation2 [shape = 'u8[966656]{0}', space=vmem, size = 0xec000, scoped, tag = 'input window, operand 1, single buffered']
    #allocation3 [shape = 's32[1]{0}', space=sflag, size = 0x4, scoped, tag = 'scoped memory for forward.1']
    %7 = vsyncpa [#allocation3], 0
    // Predicated region
    $region2: #{forward.1} parent=1 // pred_check
      _
    $region3: #{forward.1} parent=1 // pred_check_branch
      %9 = sbr.rel (0) target = $region5
    $region4: #{forward.1} parent=1 // pred_region
      _
    $region5: #{forward.1} parent=1 // pred_fallthru
      _
    // Predicated region
    $region6: #{forward.1} parent=1 // pred_check
      _
    $region7: #{forward.1} parent=1 // pred_check_branch
      %11 = sbr.rel (0) target = $region9
    $region8: #{forward.1} parent=1 // pred_region
      %s13 = ssub.s32 30208, 30208
      %14 = vsyncadd [#allocation3], %s13
      %s15 = sshll.u32 [#allocation2], 4
      %s16 = int_to_ptr.vmem [resolvable:$true] %s15
      %21 = dma.hbm_to_vmem [thread:$0]  %s1, 30208, %s16, [#allocation3], 64, 64, 4
    $region9: #{forward.1} parent=1 // pred_fallthru
      _
    // Predicated region
    $region10: #{forward.1} parent=1 // pred_check
      _
    $region11: #{forward.1} parent=1 // pred_check_branch
      %23 = sbr.rel (0) target = $region13
    $region12: #{forward.1} parent=1 // pred_region
      %24 = dma.done [#allocation3], 30208
    $region13: #{forward.1} parent=1 // pred_fallthru
      _
    %v26 = vld [vmem:[%s0] sm:$0xf]
    %v27 = vld [vmem:[#allocation2] sm:$0xf]
    %v28 = vld [vmem:[#allocation2 + $0x4] sm:$0xf]
    %v29 = vld [vmem:[#allocation2 + $0x8] sm:$0xf]
    %v30 = vld [vmem:[#allocation2 + $0xc] sm:$0xf]
    %v31 = vld [vmem:[#allocation2 + $0x10] sm:$0xf]
    %v32 = vld [vmem:[#allocation2 + $0x14] sm:$0xf]
    %v33 = vld [vmem:[#allocation2 + $0x18] sm:$0xf]
    %v34 = vld [vmem:[#allocation2 + $0x1c] sm:$0xf]
    %v35 = vpack.c.bf16 %v26, %v26
    %v44 = vunpack.c.l.b16 %v27
    %v45 = vunpack.c.l.b16 %v28
    %v46 = vunpack.c.l.b16 %v29
    %v47 = vunpack.c.l.b16 %v30
    %v48 = vunpack.c.l.b16 %v31
    %v49 = vunpack.c.l.b16 %v32
    %v50 = vunpack.c.l.b16 %v33
    %v51 = vunpack.c.l.b16 %v34
    %v52 = vpack.c.b16 %v45, %v44
    %v53 = vpack.c.b16 %v47, %v46
    %v54 = vpack.c.b16 %v49, %v48
    %v55 = vpack.c.b16 %v51, %v50
    %vm60 = vcmask 523264
    %v62 = vsel %vm60, %v35, 0
    %64 = vmatprep.subr.bf16.mxu0 0
    %65 = vmatpush1.bf16.msra.mxu0 0
    %66 = vmatprep.subr.bf16.mxu0 0
    %67 = vmatpush1.bf16.msra.mxu0 0
    %68 = vmatprep.subr.bf16.mxu0 0
    %69 = vmatpush1.bf16.msra.mxu0 0
    %70 = vmatprep.subr.bf16.mxu0 0
    %71 = vmatpush1.bf16.msra.mxu0 0
    %72 = vmatprep.subr.bf16.mxu0 0
    %73 = vmatpush1.bf16.msra.mxu0 %v55
    %74 = vmatprep.subr.bf16.mxu0 0
    %75 = vmatpush1.bf16.msra.mxu0 %v54
    %76 = vmatprep.subr.bf16.mxu0 0
    %77 = vmatpush1.bf16.msra.mxu0 %v53
    %78 = vmatprep.subr.bf16.mxu0 0
    %79 = vmatpush1.bf16.msra.mxu0 %v52
    %80 = vmatprep.subr.bf16.mxu0 0
    %81 = vmatpush2.bf16.msra.mxu0 0
    %82 = vmatprep.subr.bf16.mxu0 0
    %83 = vmatpush2.bf16.msra.mxu0 0
    %84 = vmatprep.subr.bf16.mxu0 0
    %85 = vmatpush2.bf16.msra.mxu0 0
    %86 = vmatprep.subr.bf16.mxu0 0
    %87 = vmatpush2.bf16.msra.mxu0 0
    %88 = vmatprep.subr.bf16.mxu0 0
    %89 = vmatpush2.bf16.msra.mxu0 0
    %90 = vmatprep.subr.bf16.mxu0 0
    %91 = vmatpush2.bf16.msra.mxu0 0
    %92 = vmatprep.subr.bf16.mxu0 0
    %93 = vmatpush2.bf16.msra.mxu0 0
    %94 = vmatprep.subr.bf16.mxu0 0
    %95 = vmatpush2.bf16.msra.mxu0 0
    %96 = vmatprep.mubr.bf16.mxu0 0
    %97 = vmatmul.mubr.bf16.gmra.mxu0 %v62
    %v98 = vpop.f32.mrf.mxu0
    %v99 = vadd.f32 0.0, %v98
    %v100 = vpop.f32.mrf.mxu0
    %v101 = vpop.f32.mrf.mxu0
    %v102 = vpop.f32.mrf.mxu0
    %103 = vdwg.mxu0
    %v104 = vld [vmem:[#allocation2 + $0x20] sm:$0xf]
    %vm105 = vcmask 31744
    %v107 = vsel %vm105, %v104, 0
    %vm109 = vcmask 1043456
    %v111 = vsel %vm109, %v99, 0
    %113 = vmatprep.subr.mxu0 0.0
    %114 = vmatpush1.msra.mxu0 0.0
    %115 = vmatprep.subr.mxu0 0.0
    %116 = vmatpush1.msra.mxu0 0.0
    %117 = vmatprep.subr.mxu0 0.0
    %118 = vmatpush1.msra.mxu0 0.0
    %119 = vmatprep.subr.mxu0 0.0
    %120 = vmatpush1.msra.mxu0 0.0
    %121 = vmatprep.subr.mxu0 0.0
    %122 = vmatpush1.msra.mxu0 0.0
    %123 = vmatprep.subr.mxu0 0.0
    %124 = vmatpush1.msra.mxu0 0.0
    %125 = vmatprep.subr.mxu0 0.0
    %126 = vmatpush1.msra.mxu0 0.0
    %127 = vmatprep.subr.mxu0 0.0
    %128 = vmatpush1.msra.mxu0 0.0
    %129 = vmatprep.subr.mxu0 0.0
    %130 = vmatpush1.msra.mxu0 0.0
    %131 = vmatprep.subr.mxu0 0.0
    %132 = vmatpush1.msra.mxu0 0.0
    %133 = vmatprep.subr.mxu0 0.0
    %134 = vmatpush1.msra.mxu0 0.0
    %135 = vmatprep.subr.mxu0 0.0
    %136 = vmatpush1.msra.mxu0 0.0
    %137 = vmatprep.subr.mxu0 0.0
    %138 = vmatpush1.msra.mxu0 0.0
    %139 = vmatprep.subr.mxu0 0.0
    %140 = vmatpush1.msra.mxu0 0.0
    %141 = vmatprep.subr.mxu0 0.0
    %142 = vmatpush1.msra.mxu0 0.0
    %143 = vmatprep.subr.mxu0 0.0
    %144 = vmatpush1.msra.mxu0 %v111
    %145 = vmatprep.subr.mxu0 0.0
    %146 = vmatpush2.msra.mxu0 0.0
    %147 = vmatprep.subr.mxu0 0.0
    %148 = vmatpush2.msra.mxu0 0.0
    %149 = vmatprep.subr.mxu0 0.0
    %150 = vmatpush2.msra.mxu0 0.0
    %151 = vmatprep.subr.mxu0 0.0
    %152 = vmatpush2.msra.mxu0 0.0
    %153 = vmatprep.subr.mxu0 0.0
    %154 = vmatpush2.msra.mxu0 0.0
    %155 = vmatprep.subr.mxu0 0.0
    %156 = vmatpush2.msra.mxu0 0.0
    %157 = vmatprep.subr.mxu0 0.0
    %158 = vmatpush2.msra.mxu0 0.0
    %159 = vmatprep.subr.mxu0 0.0
    %160 = vmatpush2.msra.mxu0 0.0
    %161 = vmatprep.subr.mxu0 0.0
    %162 = vmatpush2.msra.mxu0 0.0
    %163 = vmatprep.subr.mxu0 0.0
    %164 = vmatpush2.msra.mxu0 0.0
    %165 = vmatprep.subr.mxu0 0.0
    %166 = vmatpush2.msra.mxu0 0.0
    %167 = vmatprep.subr.mxu0 0.0
    %168 = vmatpush2.msra.mxu0 0.0
    %169 = vmatprep.subr.mxu0 0.0
    %170 = vmatpush2.msra.mxu0 0.0
    %171 = vmatprep.subr.mxu0 0.0
    %172 = vmatpush2.msra.mxu0 0.0
    %173 = vmatprep.subr.mxu0 0.0
    %174 = vmatpush2.msra.mxu0 0.0
    %175 = vmatprep.subr.mxu0 0.0
    %176 = vmatpush2.msra.mxu0 0.0
    %177 = vmatprep.mubr.bf16.mxu0 0
    %178 = vmatmul.mubr.bf16.gmra.mxu0 %v107
    %v179 = vpop.f32.mrf.mxu0
    %v180 = vadd.f32 0.0, %v179
    %v181 = vpop.f32.mrf.mxu0
    %v182 = vpop.f32.mrf.mxu0
    %v183 = vpop.f32.mrf.mxu0
    %184 = vdwg.mxu0
    %v185 = vlaneseq
    %v186 = vshrl.u32 %v185, 7
    %v187 = vand.u32 %v186, 1
    %vm188 = vcmp.eq.s32.totalorder %v187, 0
    %190 = vrot.lane.b32.xlu0 %v180, 64
    %v191 = vpop.permute.xlu0 %190
    %v193 = vsel %vm188, %v180, %v191
    %v194 = vld [vmem:[#allocation2 + $0x28] sm:$0x1]
    %v195 = vunpack.c.l.bf16 %v194
    %v196 = vlaneseq
    %v197 = vshrl.u32 %v196, 7
    %v198 = vsub.s32 0, %v197
    %v199 = vrot.slane %v195, %v198
    %v200 = vadd.f32 %v193, %v199
    %v202 = vrot.slane %v200, 7
    %vm204 = vcmask 1040384
    %v205 = vsel %vm204, 0.0, %v202
    %v206 = vrot.slane %v200, 1
    %vm208 = vcmask 1046528
    %v209 = vsel %vm208, %v206, 0.0
    %v210 = vand.u32 %v186, 3
    %vm211 = vcmp.eq.s32.totalorder %v210, 0
    %v212 = vsel %vm211, 0.0, %v205
    %vm213 = vcmp.eq.s32.totalorder %v210, 3
    %v214 = vsel %vm213, 0.0, %v209
    %215 = vrot.lane.b32.xlu0 %v200, 64
    %v216 = vpop.permute.xlu0 %215
    %v218 = vsel %vm60, %v212, %v216
    %v219 = vld [vmem:[#allocation2 + $0x30] sm:$0xf]
    %v220 = vld [vmem:[#allocation2 + $0x34] sm:$0xf]
    %v221 = vld [vmem:[#allocation2 + $0x38] sm:$0xf]
    %v222 = vld [vmem:[#allocation2 + $0x3c] sm:$0xf]
    %v223 = vld [vmem:[#allocation2 + $0x40] sm:$0xf]
    %v224 = vld [vmem:[#allocation2 + $0x44] sm:$0xf]
    %v225 = vld [vmem:[#allocation2 + $0x48] sm:$0xf]
    %v226 = vld [vmem:[#allocation2 + $0x4c] sm:$0xf]
    %v227 = vld [vmem:[#allocation2 + $0x50] sm:$0xf]
    %v228 = vld [vmem:[#allocation2 + $0x54] sm:$0xf]
    %v229 = vld [vmem:[#allocation2 + $0x58] sm:$0xf]
    %v230 = vld [vmem:[#allocation2 + $0x5c] sm:$0xf]
    %v231 = vld [vmem:[#allocation2 + $0x60] sm:$0xf]
    %v232 = vld [vmem:[#allocation2 + $0x64] sm:$0xf]
    %v233 = vld [vmem:[#allocation2 + $0x68] sm:$0xf]
    %v234 = vld [vmem:[#allocation2 + $0x6c] sm:$0xf]
    %v235 = vld [vmem:[#allocation2 + $0x70] sm:$0xf]
    %v236 = vld [vmem:[#allocation2 + $0x74] sm:$0xf]
    %v237 = vld [vmem:[#allocation2 + $0x78] sm:$0xf]
    %v238 = vld [vmem:[#allocation2 + $0x7c] sm:$0xf]
    %v239 = vld [vmem:[#allocation2 + $0x80] sm:$0xf]
    %v240 = vld [vmem:[#allocation2 + $0x84] sm:$0xf]
    %v241 = vld [vmem:[#allocation2 + $0x88] sm:$0xf]
    %v242 = vld [vmem:[#allocation2 + $0x8c] sm:$0xf]
    %v243 = vpack.c.bf16 %v218, %v218
    %v244 = vpack.c.bf16 %v214, %v214
    %v245 = vld [vmem:[#allocation2 + $0x90] sm:$0x1]
    %v246 = vunpack.c.l.bf16 %v245
    %v247 = vlaneseq
    %v248 = vshrl.u32 %v247, 7
    %v249 = vsub.s32 0, %v248
    %v250 = vrot.slane %v246, %v249
    %v275 = vunpack.c.l.b16 %v219
    %v276 = vunpack.c.l.b16 %v220
    %v277 = vunpack.c.l.b16 %v221
    %v278 = vunpack.c.l.b16 %v222
    %v279 = vunpack.c.l.b16 %v223
    %v280 = vunpack.c.l.b16 %v224
    %v281 = vunpack.c.l.b16 %v225
    %v282 = vunpack.c.l.b16 %v226
    %v283 = vunpack.c.l.b16 %v227
    %v284 = vunpack.c.l.b16 %v228
    %v285 = vunpack.c.l.b16 %v229
    %v286 = vunpack.c.l.b16 %v230
    %v287 = vunpack.c.l.b16 %v231
    %v288 = vunpack.c.l.b16 %v232
    %v289 = vunpack.c.l.b16 %v233
    %v290 = vunpack.c.l.b16 %v234
    %v291 = vunpack.c.l.b16 %v235
    %v292 = vunpack.c.l.b16 %v236
    %v293 = vunpack.c.l.b16 %v237
    %v294 = vunpack.c.l.b16 %v238
    %v295 = vunpack.c.l.b16 %v239
    %v296 = vunpack.c.l.b16 %v240
    %v297 = vunpack.c.l.b16 %v241
    %v298 = vunpack.c.l.b16 %v242
    %v299 = vpack.c.b16 %v276, %v275
    %v300 = vpack.c.b16 %v278, %v277
    %v301 = vpack.c.b16 %v280, %v279
    %v302 = vpack.c.b16 %v282, %v281
    %v303 = vpack.c.b16 %v284, %v283
    %v304 = vpack.c.b16 %v286, %v285
    %v305 = vpack.c.b16 %v288, %v287
    %v306 = vpack.c.b16 %v290, %v289
    %v307 = vpack.c.b16 %v292, %v291
    %v308 = vpack.c.b16 %v294, %v293
    %v309 = vpack.c.b16 %v296, %v295
    %v310 = vpack.c.b16 %v298, %v297
    %v324 = vsel %vm60, %v244, 0
    %326 = vmatprep.subr.bf16.mxu0 0
    %327 = vmatpush1.bf16.msra.mxu0 %v306
    %328 = vmatprep.subr.bf16.mxu0 0
    %329 = vmatpush1.bf16.msra.mxu0 %v305
    %330 = vmatprep.subr.bf16.mxu0 0
    %331 = vmatpush1.bf16.msra.mxu0 %v304
    %332 = vmatprep.subr.bf16.mxu0 0
    %333 = vmatpush1.bf16.msra.mxu0 %v303
    %334 = vmatprep.subr.bf16.mxu0 0
    %335 = vmatpush1.bf16.msra.mxu0 %v302
    %336 = vmatprep.subr.bf16.mxu0 0
    %337 = vmatpush1.bf16.msra.mxu0 %v301
    %338 = vmatprep.subr.bf16.mxu0 0
    %339 = vmatpush1.bf16.msra.mxu0 %v300
    %340 = vmatprep.subr.bf16.mxu0 0
    %341 = vmatpush1.bf16.msra.mxu0 %v299
    %342 = vmatprep.subr.bf16.mxu0 0
    %343 = vmatpush2.bf16.msra.mxu0 0
    %344 = vmatprep.subr.bf16.mxu0 0
    %345 = vmatpush2.bf16.msra.mxu0 0
    %346 = vmatprep.subr.bf16.mxu0 0
    %347 = vmatpush2.bf16.msra.mxu0 0
    %348 = vmatprep.subr.bf16.mxu0 0
    %349 = vmatpush2.bf16.msra.mxu0 0
    %350 = vmatprep.subr.bf16.mxu0 0
    %351 = vmatpush2.bf16.msra.mxu0 %v310
    %352 = vmatprep.subr.bf16.mxu0 0
    %353 = vmatpush2.bf16.msra.mxu0 %v309
    %354 = vmatprep.subr.bf16.mxu0 0
    %355 = vmatpush2.bf16.msra.mxu0 %v308
    %356 = vmatprep.subr.bf16.mxu0 0
    %357 = vmatpush2.bf16.msra.mxu0 %v307
    %358 = vmatprep.mubr.bf16.mxu0 %v324
    %359 = vmatmul.mubr.bf16.gmra.mxu0 %v243
    %v360 = vpop.f32.mrf.mxu0
    %v361 = vadd.f32 %v250, %v360
    %v362 = vpop.f32.mrf.mxu0
    %v363 = vpop.f32.mrf.mxu0
    %v364 = vpop.f32.mrf.mxu0
    %365 = vdwg.mxu0
    %v366 = vmax.f32 %v361, 0.0
    %v368 = vrot.slane %v366, 7
    %v370 = vsel %vm204, 0.0, %v368
    %v371 = vrot.slane %v366, 1
    %v373 = vsel %vm208, %v371, 0.0
    %v374 = vsel %vm211, 0.0, %v370
    %v375 = vsel %vm213, 0.0, %v373
    %v376 = vld [vmem:[#allocation2 + $0x98] sm:$0xf]
    %v377 = vld [vmem:[#allocation2 + $0x9c] sm:$0xf]
    %v378 = vld [vmem:[#allocation2 + $0xa0] sm:$0xf]
    %v379 = vld [vmem:[#allocation2 + $0xa4] sm:$0xf]
    %v380 = vld [vmem:[#allocation2 + $0xa8] sm:$0xf]
    %v381 = vld [vmem:[#allocation2 + $0xac] sm:$0xf]
    %v382 = vld [vmem:[#allocation2 + $0xb0] sm:$0xf]
    %v383 = vld [vmem:[#allocation2 + $0xb4] sm:$0xf]
    %v384 = vld [vmem:[#allocation2 + $0xb8] sm:$0xf]
    %v385 = vld [vmem:[#allocation2 + $0xbc] sm:$0xf]
    %v386 = vld [vmem:[#allocation2 + $0xc0] sm:$0xf]
    %v387 = vld [vmem:[#allocation2 + $0xc4] sm:$0xf]
    %v388 = vld [vmem:[#allocation2 + $0xc8] sm:$0xf]
    %v389 = vld [vmem:[#allocation2 + $0xcc] sm:$0xf]
    %v390 = vld [vmem:[#allocation2 + $0xd0] sm:$0xf]
    %v391 = vld [vmem:[#allocation2 + $0xd4] sm:$0xf]
    %v392 = vld [vmem:[#allocation2 + $0xd8] sm:$0xf]
    %v393 = vld [vmem:[#allocation2 + $0xdc] sm:$0xf]
    %v394 = vld [vmem:[#allocation2 + $0xe0] sm:$0xf]
    %v395 = vld [vmem:[#allocation2 + $0xe4] sm:$0xf]
    %v396 = vld [vmem:[#allocation2 + $0xe8] sm:$0xf]
    %v397 = vld [vmem:[#allocation2 + $0xec] sm:$0xf]
    %v398 = vld [vmem:[#allocation2 + $0xf0] sm:$0xf]
    %v399 = vld [vmem:[#allocation2 + $0xf4] sm:$0xf]
    %v400 = vld [vmem:[#allocation2 + $0xf8] sm:$0xf]
    %v401 = vld [vmem:[#allocation2 + $0xfc] sm:$0xf]
    %v402 = vld [vmem:[#allocation2 + $0x100] sm:$0xf]
    %v403 = vld [vmem:[#allocation2 + $0x104] sm:$0xf]
    %v404 = vld [vmem:[#allocation2 + $0x108] sm:$0xf]
    %v405 = vld [vmem:[#allocation2 + $0x10c] sm:$0xf]
    %v406 = vld [vmem:[#allocation2 + $0x110] sm:$0xf]
    %v407 = vld [vmem:[#allocation2 + $0x114] sm:$0xf]
    %v408 = vld [vmem:[#allocation2 + $0x118] sm:$0xf]
    %v409 = vld [vmem:[#allocation2 + $0x11c] sm:$0xf]
    %v410 = vld [vmem:[#allocation2 + $0x120] sm:$0xf]
    %v411 = vld [vmem:[#allocation2 + $0x124] sm:$0xf]
    %v412 = vld [vmem:[#allocation2 + $0x128] sm:$0xf]
    %v413 = vld [vmem:[#allocation2 + $0x12c] sm:$0xf]
    %v414 = vld [vmem:[#allocation2 + $0x130] sm:$0xf]
    %v415 = vld [vmem:[#allocation2 + $0x134] sm:$0xf]
    %v416 = vld [vmem:[#allocation2 + $0x138] sm:$0xf]
    %v417 = vld [vmem:[#allocation2 + $0x13c] sm:$0xf]
    %v418 = vld [vmem:[#allocation2 + $0x140] sm:$0xf]
    %v419 = vld [vmem:[#allocation2 + $0x144] sm:$0xf]
    %v420 = vld [vmem:[#allocation2 + $0x148] sm:$0xf]
    %v421 = vld [vmem:[#allocation2 + $0x14c] sm:$0xf]
    %v422 = vld [vmem:[#allocation2 + $0x150] sm:$0xf]
    %v423 = vld [vmem:[#allocation2 + $0x154] sm:$0xf]
    %v424 = vpack.c.bf16 %v374, %v374
    %v425 = vpack.c.bf16 %v366, %v366
    %v426 = vpack.c.bf16 %v375, %v375
    %v475 = vunpack.c.l.b16 %v376
    %v476 = vunpack.c.l.b16 %v377
    %v477 = vunpack.c.l.b16 %v378
    %v478 = vunpack.c.l.b16 %v379
    %v479 = vunpack.c.l.b16 %v380
    %v480 = vunpack.c.l.b16 %v381
    %v481 = vunpack.c.l.b16 %v382
    %v482 = vunpack.c.l.b16 %v383
    %v483 = vunpack.c.l.b16 %v384
    %v484 = vunpack.c.l.b16 %v385
    %v485 = vunpack.c.l.b16 %v386
    %v486 = vunpack.c.l.b16 %v387
    %v487 = vunpack.c.l.b16 %v388
    %v488 = vunpack.c.l.b16 %v389
    %v489 = vunpack.c.l.b16 %v390
    %v490 = vunpack.c.l.b16 %v391
    %v491 = vunpack.c.l.b16 %v392
    %v492 = vunpack.c.l.b16 %v393
    %v493 = vunpack.c.l.b16 %v394
    %v494 = vunpack.c.l.b16 %v395
    %v495 = vunpack.c.l.b16 %v396
    %v496 = vunpack.c.l.b16 %v397
    %v497 = vunpack.c.l.b16 %v398
    %v498 = vunpack.c.l.b16 %v399
    %v499 = vunpack.c.l.b16 %v400
    %v500 = vunpack.c.l.b16 %v401
    %v501 = vunpack.c.l.b16 %v402
    %v502 = vunpack.c.l.b16 %v403
    %v503 = vunpack.c.l.b16 %v404
    %v504 = vunpack.c.l.b16 %v405
    %v505 = vunpack.c.l.b16 %v406
    %v506 = vunpack.c.l.b16 %v407
    %v507 = vunpack.c.l.b16 %v408
    %v508 = vunpack.c.l.b16 %v409
    %v509 = vunpack.c.l.b16 %v410
    %v510 = vunpack.c.l.b16 %v411
    %v511 = vunpack.c.l.b16 %v412
    %v512 = vunpack.c.l.b16 %v413
    %v513 = vunpack.c.l.b16 %v414
    %v514 = vunpack.c.l.b16 %v415
    %v515 = vunpack.c.l.b16 %v416
    %v516 = vunpack.c.l.b16 %v417
    %v517 = vunpack.c.l.b16 %v418
    %v518 = vunpack.c.l.b16 %v419
    %v519 = vunpack.c.l.b16 %v420
    %v520 = vunpack.c.l.b16 %v421
    %v521 = vunpack.c.l.b16 %v422
    %v522 = vunpack.c.l.b16 %v423
    %v523 = vpack.c.b16 %v476, %v475
    %v524 = vpack.c.b16 %v478, %v477
    %v525 = vpack.c.b16 %v480, %v479
    %v526 = vpack.c.b16 %v482, %v481
    %v527 = vpack.c.b16 %v484, %v483
    %v528 = vpack.c.b16 %v486, %v485
    %v529 = vpack.c.b16 %v488, %v487
    %v530 = vpack.c.b16 %v490, %v489
    %v531 = vpack.c.b16 %v492, %v491
    %v532 = vpack.c.b16 %v494, %v493
    %v533 = vpack.c.b16 %v496, %v495
    %v534 = vpack.c.b16 %v498, %v497
    %v535 = vpack.c.b16 %v500, %v499
    %v536 = vpack.c.b16 %v502, %v501
    %v537 = vpack.c.b16 %v504, %v503
    %v538 = vpack.c.b16 %v506, %v505
    %v539 = vpack.c.b16 %v508, %v507
    %v540 = vpack.c.b16 %v510, %v509
    %v541 = vpack.c.b16 %v512, %v511
    %v542 = vpack.c.b16 %v514, %v513
    %v543 = vpack.c.b16 %v516, %v515
    %v544 = vpack.c.b16 %v518, %v517
    %v545 = vpack.c.b16 %v520, %v519
    %v546 = vpack.c.b16 %v522, %v521
    %571 = vmatprep.subr.bf16.mxu0 0
    %572 = vmatpush1.bf16.msra.mxu0 %v530
    %573 = vmatprep.subr.bf16.mxu0 0
    %574 = vmatpush1.bf16.msra.mxu0 %v529
    %575 = vmatprep.subr.bf16.mxu0 0
    %576 = vmatpush1.bf16.msra.mxu0 %v528
    %577 = vmatprep.subr.bf16.mxu0 0
    %578 = vmatpush1.bf16.msra.mxu0 %v527
    %579 = vmatprep.subr.bf16.mxu0 0
    %580 = vmatpush1.bf16.msra.mxu0 %v526
    %581 = vmatprep.subr.bf16.mxu0 0
    %582 = vmatpush1.bf16.msra.mxu0 %v525
    %583 = vmatprep.subr.bf16.mxu0 0
    %584 = vmatpush1.bf16.msra.mxu0 %v524
    %585 = vmatprep.subr.bf16.mxu0 0
    %586 = vmatpush1.bf16.msra.mxu0 %v523
    %587 = vmatprep.subr.bf16.mxu0 0
    %588 = vmatpush2.bf16.msra.mxu0 %v538
    %589 = vmatprep.subr.bf16.mxu0 0
    %590 = vmatpush2.bf16.msra.mxu0 %v537
    %591 = vmatprep.subr.bf16.mxu0 0
    %592 = vmatpush2.bf16.msra.mxu0 %v536
    %593 = vmatprep.subr.bf16.mxu0 0
    %594 = vmatpush2.bf16.msra.mxu0 %v535
    %595 = vmatprep.subr.bf16.mxu0 0
    %596 = vmatpush2.bf16.msra.mxu0 %v534
    %597 = vmatprep.subr.bf16.mxu0 0
    %598 = vmatpush2.bf16.msra.mxu0 %v533
    %599 = vmatprep.subr.bf16.mxu0 0
    %600 = vmatpush2.bf16.msra.mxu0 %v532
    %601 = vmatprep.subr.bf16.mxu0 0
    %602 = vmatpush2.bf16.msra.mxu0 %v531
    %603 = vmatprep.mubr.bf16.mxu0 %v425
    %604 = vmatmul.mubr.bf16.gmra.mxu0 %v424
    %v605 = vpop.f32.mrf.mxu0
    %v606 = vadd.f32 0.0, %v605
    %v607 = vpop.f32.mrf.mxu0
    %v608 = vpop.f32.mrf.mxu0
    %v609 = vpop.f32.mrf.mxu0
    %610 = vdwg.mxu0
    %611 = vmatprep.subr.bf16.mxu0 0
    %612 = vmatpush1.bf16.msra.mxu0 %v546
    %613 = vmatprep.subr.bf16.mxu0 0
    %614 = vmatpush1.bf16.msra.mxu0 %v545
    %615 = vmatprep.subr.bf16.mxu0 0
    %616 = vmatpush1.bf16.msra.mxu0 %v544
    %617 = vmatprep.subr.bf16.mxu0 0
    %618 = vmatpush1.bf16.msra.mxu0 %v543
    %619 = vmatprep.subr.bf16.mxu0 0
    %620 = vmatpush1.bf16.msra.mxu0 %v542
    %621 = vmatprep.subr.bf16.mxu0 0
    %622 = vmatpush1.bf16.msra.mxu0 %v541
    %623 = vmatprep.subr.bf16.mxu0 0
    %624 = vmatpush1.bf16.msra.mxu0 %v540
    %625 = vmatprep.subr.bf16.mxu0 0
    %626 = vmatpush1.bf16.msra.mxu0 %v539
    %627 = vmatprep.subr.bf16.mxu0 0
    %628 = vmatpush2.bf16.msra.mxu0 0
    %629 = vmatprep.subr.bf16.mxu0 0
    %630 = vmatpush2.bf16.msra.mxu0 0
    %631 = vmatprep.subr.bf16.mxu0 0
    %632 = vmatpush2.bf16.msra.mxu0 0
    %633 = vmatprep.subr.bf16.mxu0 0
    %634 = vmatpush2.bf16.msra.mxu0 0
    %635 = vmatprep.subr.bf16.mxu0 0
    %636 = vmatpush2.bf16.msra.mxu0 0
    %637 = vmatprep.subr.bf16.mxu0 0
    %638 = vmatpush2.bf16.msra.mxu0 0
    %639 = vmatprep.subr.bf16.mxu0 0
    %640 = vmatpush2.bf16.msra.mxu0 0
    %641 = vmatprep.subr.bf16.mxu0 0
    %642 = vmatpush2.bf16.msra.mxu0 0
    %643 = vmatprep.mubr.bf16.mxu0 0
    %644 = vmatmul.mubr.bf16.gmra.mxu0 %v426
    %v645 = vpop.f32.mrf.mxu0
    %v646 = vadd.f32 %v606, %v645
    %v647 = vpop.f32.mrf.mxu0
    %v648 = vpop.f32.mrf.mxu0
    %v649 = vpop.f32.mrf.mxu0
    %650 = vdwg.mxu0
    %v651 = vadd.f32 %v200, %v646
    %v652 = vld [vmem:[#allocation2 + $0x158] sm:$0x1]
    %v653 = vunpack.c.l.bf16 %v652
    %v654 = vlaneseq
    %v655 = vshrl.u32 %v654, 7
    %v656 = vsub.s32 0, %v655
    %v657 = vrot.slane %v653, %v656
    %v658 = vadd.f32 %v651, %v657
    %v659 = vmax.f32 %v658, 0.0
    %v660 = vld [vmem:[#allocation2 + $0x160] sm:$0xf]
    %v661 = vld [vmem:[#allocation2 + $0x164] sm:$0xf]
    %v662 = vld [vmem:[#allocation2 + $0x168] sm:$0xf]
    %v663 = vld [vmem:[#allocation2 + $0x16c] sm:$0xf]
    %v664 = vld [vmem:[#allocation2 + $0x170] sm:$0xf]
    %v665 = vld [vmem:[#allocation2 + $0x174] sm:$0xf]
    %v666 = vld [vmem:[#allocation2 + $0x178] sm:$0xf]
    %v667 = vld [vmem:[#allocation2 + $0x17c] sm:$0xf]
    %v668 = vpack.c.bf16 %v659, %v659
    %v677 = vunpack.c.l.b16 %v660
    %v678 = vunpack.c.l.b16 %v661
    %v679 = vunpack.c.l.b16 %v662
    %v680 = vunpack.c.l.b16 %v663
    %v681 = vunpack.c.l.b16 %v664
    %v682 = vunpack.c.l.b16 %v665
    %v683 = vunpack.c.l.b16 %v666
    %v684 = vunpack.c.l.b16 %v667
    %v685 = vpack.c.b16 %v678, %v677
    %v686 = vpack.c.b16 %v680, %v679
    %v687 = vpack.c.b16 %v682, %v681
    %v688 = vpack.c.b16 %v684, %v683
    %v694 = vsel %vm60, %v668, 0
    %696 = vmatprep.subr.bf16.mxu0 0
    %697 = vmatpush1.bf16.msra.mxu0 0
    %698 = vmatprep.subr.bf16.mxu0 0
    %699 = vmatpush1.bf16.msra.mxu0 0
    %700 = vmatprep.subr.bf16.mxu0 0
    %701 = vmatpush1.bf16.msra.mxu0 0
    %702 = vmatprep.subr.bf16.mxu0 0
    %703 = vmatpush1.bf16.msra.mxu0 0
    %704 = vmatprep.subr.bf16.mxu0 0
    %705 = vmatpush1.bf16.msra.mxu0 %v688
    %706 = vmatprep.subr.bf16.mxu0 0
    %707 = vmatpush1.bf16.msra.mxu0 %v687
    %708 = vmatprep.subr.bf16.mxu0 0
    %709 = vmatpush1.bf16.msra.mxu0 %v686
    %710 = vmatprep.subr.bf16.mxu0 0
    %711 = vmatpush1.bf16.msra.mxu0 %v685
    %712 = vmatprep.subr.bf16.mxu0 0
    %713 = vmatpush2.bf16.msra.mxu0 0
    %714 = vmatprep.subr.bf16.mxu0 0
    %715 = vmatpush2.bf16.msra.mxu0 0
    %716 = vmatprep.subr.bf16.mxu0 0
    %717 = vmatpush2.bf16.msra.mxu0 0
    %718 = vmatprep.subr.bf16.mxu0 0
    %719 = vmatpush2.bf16.msra.mxu0 0
    %720 = vmatprep.subr.bf16.mxu0 0
    %721 = vmatpush2.bf16.msra.mxu0 0
    %722 = vmatprep.subr.bf16.mxu0 0
    %723 = vmatpush2.bf16.msra.mxu0 0
    %724 = vmatprep.subr.bf16.mxu0 0
    %725 = vmatpush2.bf16.msra.mxu0 0
    %726 = vmatprep.subr.bf16.mxu0 0
    %727 = vmatpush2.bf16.msra.mxu0 0
    %728 = vmatprep.mubr.bf16.mxu0 0
    %729 = vmatmul.mubr.bf16.gmra.mxu0 %v694
    %v730 = vpop.f32.mrf.mxu0
    %v731 = vadd.f32 0.0, %v730
    %v732 = vpop.f32.mrf.mxu0
    %v733 = vpop.f32.mrf.mxu0
    %v734 = vpop.f32.mrf.mxu0
    %735 = vdwg.mxu0
    %v736 = vld [vmem:[#allocation2 + $0x180] sm:$0xf]
    %v737 = vld [vmem:[#allocation2 + $0x184] sm:$0xf]
    %v740 = vunpack.c.l.b16 %v736
    %v741 = vunpack.c.l.b16 %v737
    %v742 = vpack.c.b16 %v741, %v740
    %vm743 = vcmask 64512
    %v745 = vsel %vm743, %v742, 0
    %747 = vmatprep.subr.mxu0 0.0
    %748 = vmatpush1.msra.mxu0 0.0
    %749 = vmatprep.subr.mxu0 0.0
    %750 = vmatpush1.msra.mxu0 0.0
    %751 = vmatprep.subr.mxu0 0.0
    %752 = vmatpush1.msra.mxu0 0.0
    %753 = vmatprep.subr.mxu0 0.0
    %754 = vmatpush1.msra.mxu0 0.0
    %755 = vmatprep.subr.mxu0 0.0
    %756 = vmatpush1.msra.mxu0 0.0
    %757 = vmatprep.subr.mxu0 0.0
    %758 = vmatpush1.msra.mxu0 0.0
    %759 = vmatprep.subr.mxu0 0.0
    %760 = vmatpush1.msra.mxu0 0.0
    %761 = vmatprep.subr.mxu0 0.0
    %762 = vmatpush1.msra.mxu0 0.0
    %763 = vmatprep.subr.mxu0 0.0
    %764 = vmatpush1.msra.mxu0 0.0
    %765 = vmatprep.subr.mxu0 0.0
    %766 = vmatpush1.msra.mxu0 0.0
    %767 = vmatprep.subr.mxu0 0.0
    %768 = vmatpush1.msra.mxu0 0.0
    %769 = vmatprep.subr.mxu0 0.0
    %770 = vmatpush1.msra.mxu0 0.0
    %771 = vmatprep.subr.mxu0 0.0
    %772 = vmatpush1.msra.mxu0 0.0
    %773 = vmatprep.subr.mxu0 0.0
    %774 = vmatpush1.msra.mxu0 0.0
    %775 = vmatprep.subr.mxu0 0.0
    %776 = vmatpush1.msra.mxu0 0.0
    %777 = vmatprep.subr.mxu0 0.0
    %778 = vmatpush1.msra.mxu0 %v731
    %779 = vmatprep.subr.mxu0 0.0
    %780 = vmatpush2.msra.mxu0 0.0
    %781 = vmatprep.subr.mxu0 0.0
    %782 = vmatpush2.msra.mxu0 0.0
    %783 = vmatprep.subr.mxu0 0.0
    %784 = vmatpush2.msra.mxu0 0.0
    %785 = vmatprep.subr.mxu0 0.0
    %786 = vmatpush2.msra.mxu0 0.0
    %787 = vmatprep.subr.mxu0 0.0
    %788 = vmatpush2.msra.mxu0 0.0
    %789 = vmatprep.subr.mxu0 0.0
    %790 = vmatpush2.msra.mxu0 0.0
    %791 = vmatprep.subr.mxu0 0.0
    %792 = vmatpush2.msra.mxu0 0.0
    %793 = vmatprep.subr.mxu0 0.0
    %794 = vmatpush2.msra.mxu0 0.0
    %795 = vmatprep.subr.mxu0 0.0
    %796 = vmatpush2.msra.mxu0 0.0
    %797 = vmatprep.subr.mxu0 0.0
    %798 = vmatpush2.msra.mxu0 0.0
    %799 = vmatprep.subr.mxu0 0.0
    %800 = vmatpush2.msra.mxu0 0.0
    %801 = vmatprep.subr.mxu0 0.0
    %802 = vmatpush2.msra.mxu0 0.0
    %803 = vmatprep.subr.mxu0 0.0
    %804 = vmatpush2.msra.mxu0 0.0
    %805 = vmatprep.subr.mxu0 0.0
    %806 = vmatpush2.msra.mxu0 0.0
    %807 = vmatprep.subr.mxu0 0.0
    %808 = vmatpush2.msra.mxu0 0.0
    %809 = vmatprep.subr.mxu0 0.0
    %810 = vmatpush2.msra.mxu0 0.0
    %811 = vmatprep.mubr.bf16.mxu0 0
    %812 = vmatmul.mubr.bf16.gmra.mxu0 %v745
    %v813 = vpop.f32.mrf.mxu0
    %v814 = vadd.f32 0.0, %v813
    %v815 = vpop.f32.mrf.mxu0
    %v816 = vpop.f32.mrf.mxu0
    %v817 = vadd.f32 0.0, %v816
    %v818 = vpop.f32.mrf.mxu0
    %819 = vdwg.mxu0
    %v820 = vadd.s32 %v186, 8
    %v821 = vand.u32 %v820, 1
    %vm822 = vcmp.eq.s32.totalorder %v821, 0
    %825 = vrot.lane.b32.xlu0 %v814, 64
    %v826 = vpop.permute.xlu0 %825
    %827 = vrot.lane.b32.xlu0 %v817, 64
    %v828 = vpop.permute.xlu0 %827
    %v831 = vsel %vm188, %v814, %v826
    %v832 = vsel %vm822, %v817, %v828
    %v833 = vld [vmem:[#allocation2 + $0x188] sm:$0x1]
    %v834 = vunpack.c.l.bf16 %v833
    %v835 = vlaneseq
    %v836 = vshrl.u32 %v835, 7
    %v837 = vsub.s32 0, %v836
    %v838 = vrot.slane %v834, %v837
    %v839 = vadd.f32 %v831, %v838
    %v840 = vadd.f32 %v832, %v838
    %v843 = vrot.slane %v839, 7
    %v844 = vrot.slane %v840, 7
    %v845 = vsel %vm204, %v843, %v844
    %v848 = vsel %vm204, 0.0, %v843
    %v849 = vrot.slane %v839, 1
    %v850 = vrot.slane %v840, 1
    %v851 = vsel %vm208, %v849, %v850
    %v854 = vsel %vm208, %v850, 0.0
    %v855 = vand.u32 %v186, 7
    %v856 = vand.u32 %v820, 7
    %vm857 = vcmp.eq.s32.totalorder %v855, 0
    %vm858 = vcmp.eq.s32.totalorder %v856, 0
    %v859 = vsel %vm857, 0.0, %v848
    %v860 = vsel %vm858, 0.0, %v845
    %vm861 = vcmp.eq.s32.totalorder %v855, 7
    %vm862 = vcmp.eq.s32.totalorder %v856, 7
    %v863 = vsel %vm861, 0.0, %v851
    %v864 = vsel %vm862, 0.0, %v854
    %865 = vrot.lane.b32.xlu0 %v839, 64
    %v866 = vpop.permute.xlu0 %865
    %867 = vrot.lane.b32.xlu0 %v840, 64
    %v868 = vpop.permute.xlu0 %867
    %v871 = vsel %vm60, %v859, %v866
    %v872 = vsel %vm60, %v860, %v868
    %v873 = vld [vmem:[#allocation2 + $0x190] sm:$0xf]
    %v874 = vld [vmem:[#allocation2 + $0x194] sm:$0xf]
    %v875 = vld [vmem:[#allocation2 + $0x198] sm:$0xf]
    %v876 = vld [vmem:[#allocation2 + $0x19c] sm:$0xf]
    %v877 = vld [vmem:[#allocation2 + $0x1a0] sm:$0xf]
    %v878 = vld [vmem:[#allocation2 + $0x1a4] sm:$0xf]
    %v879 = vld [vmem:[#allocation2 + $0x1a8] sm:$0xf]
    %v880 = vld [vmem:[#allocation2 + $0x1ac] sm:$0xf]
    %v881 = vld [vmem:[#allocation2 + $0x1b0] sm:$0xf]
    %v882 = vld [vmem:[#allocation2 + $0x1b4] sm:$0xf]
    %v883 = vld [vmem:[#allocation2 + $0x1b8] sm:$0xf]
    %v884 = vld [vmem:[#allocation2 + $0x1bc] sm:$0xf]
    %v885 = vld [vmem:[#allocation2 + $0x1c0] sm:$0xf]
    %v886 = vld [vmem:[#allocation2 + $0x1c4] sm:$0xf]
    %v887 = vld [vmem:[#allocation2 + $0x1c8] sm:$0xf]
    %v888 = vld [vmem:[#allocation2 + $0x1cc] sm:$0xf]
    %v889 = vld [vmem:[#allocation2 + $0x1d0] sm:$0xf]
    %v890 = vld [vmem:[#allocation2 + $0x1d4] sm:$0xf]
    %v891 = vld [vmem:[#allocation2 + $0x1d8] sm:$0xf]
    %v892 = vld [vmem:[#allocation2 + $0x1dc] sm:$0xf]
    %v893 = vld [vmem:[#allocation2 + $0x1e0] sm:$0xf]
    %v894 = vld [vmem:[#allocation2 + $0x1e4] sm:$0xf]
    %v895 = vld [vmem:[#allocation2 + $0x1e8] sm:$0xf]
    %v896 = vld [vmem:[#allocation2 + $0x1ec] sm:$0xf]
    %v897 = vpack.c.bf16 %v872, %v871
    %v898 = vpack.c.bf16 %v864, %v863
    %v899 = vld [vmem:[#allocation2 + $0x1f0] sm:$0x1]
    %v900 = vunpack.c.l.bf16 %v899
    %v901 = vlaneseq
    %v902 = vshrl.u32 %v901, 7
    %v903 = vsub.s32 0, %v902
    %v904 = vrot.slane %v900, %v903
    %v929 = vunpack.c.l.b16 %v873
    %v930 = vunpack.c.l.b16 %v874
    %v931 = vunpack.c.l.b16 %v875
    %v932 = vunpack.c.l.b16 %v876
    %v933 = vunpack.c.l.b16 %v877
    %v934 = vunpack.c.l.b16 %v878
    %v935 = vunpack.c.l.b16 %v879
    %v936 = vunpack.c.l.b16 %v880
    %v937 = vunpack.c.l.b16 %v881
    %v938 = vunpack.c.l.b16 %v882
    %v939 = vunpack.c.l.b16 %v883
    %v940 = vunpack.c.l.b16 %v884
    %v941 = vunpack.c.l.b16 %v885
    %v942 = vunpack.c.l.b16 %v886
    %v943 = vunpack.c.l.b16 %v887
    %v944 = vunpack.c.l.b16 %v888
    %v945 = vunpack.c.l.b16 %v889
    %v946 = vunpack.c.l.b16 %v890
    %v947 = vunpack.c.l.b16 %v891
    %v948 = vunpack.c.l.b16 %v892
    %v949 = vunpack.c.l.b16 %v893
    %v950 = vunpack.c.l.b16 %v894
    %v951 = vunpack.c.l.b16 %v895
    %v952 = vunpack.c.l.b16 %v896
    %v953 = vpack.c.b16 %v930, %v929
    %v954 = vpack.c.b16 %v932, %v931
    %v955 = vpack.c.b16 %v934, %v933
    %v956 = vpack.c.b16 %v936, %v935
    %v957 = vpack.c.b16 %v938, %v937
    %v958 = vpack.c.b16 %v940, %v939
    %v959 = vpack.c.b16 %v942, %v941
    %v960 = vpack.c.b16 %v944, %v943
    %v961 = vpack.c.b16 %v946, %v945
    %v962 = vpack.c.b16 %v948, %v947
    %v963 = vpack.c.b16 %v950, %v949
    %v964 = vpack.c.b16 %v952, %v951
    %v978 = vsel %vm60, %v898, 0
    %980 = vmatprep.subr.bf16.mxu0 0
    %981 = vmatpush1.bf16.msra.mxu0 %v960
    %982 = vmatprep.subr.bf16.mxu0 0
    %983 = vmatpush1.bf16.msra.mxu0 %v959
    %984 = vmatprep.subr.bf16.mxu0 0
    %985 = vmatpush1.bf16.msra.mxu0 %v958
    %986 = vmatprep.subr.bf16.mxu0 0
    %987 = vmatpush1.bf16.msra.mxu0 %v957
    %988 = vmatprep.subr.bf16.mxu0 0
    %989 = vmatpush1.bf16.msra.mxu0 %v956
    %990 = vmatprep.subr.bf16.mxu0 0
    %991 = vmatpush1.bf16.msra.mxu0 %v955
    %992 = vmatprep.subr.bf16.mxu0 0
    %993 = vmatpush1.bf16.msra.mxu0 %v954
    %994 = vmatprep.subr.bf16.mxu0 0
    %995 = vmatpush1.bf16.msra.mxu0 %v953
    %996 = vmatprep.subr.bf16.mxu0 0
    %997 = vmatpush2.bf16.msra.mxu0 0
    %998 = vmatprep.subr.bf16.mxu0 0
    %999 = vmatpush2.bf16.msra.mxu0 0
    %1000 = vmatprep.subr.bf16.mxu0 0
    %1001 = vmatpush2.bf16.msra.mxu0 0
    %1002 = vmatprep.subr.bf16.mxu0 0
    %1003 = vmatpush2.bf16.msra.mxu0 0
    %1004 = vmatprep.subr.bf16.mxu0 0
    %1005 = vmatpush2.bf16.msra.mxu0 %v964
    %1006 = vmatprep.subr.bf16.mxu0 0
    %1007 = vmatpush2.bf16.msra.mxu0 %v963
    %1008 = vmatprep.subr.bf16.mxu0 0
    %1009 = vmatpush2.bf16.msra.mxu0 %v962
    %1010 = vmatprep.subr.bf16.mxu0 0
    %1011 = vmatpush2.bf16.msra.mxu0 %v961
    %1012 = vmatprep.mubr.bf16.mxu0 %v978
    %1013 = vmatmul.mubr.bf16.gmra.mxu0 %v897
    %v1014 = vpop.f32.mrf.mxu0
    %v1015 = vadd.f32 %v904, %v1014
    %v1016 = vpop.f32.mrf.mxu0
    %v1017 = vpop.f32.mrf.mxu0
    %v1018 = vadd.f32 %v904, %v1017
    %v1019 = vpop.f32.mrf.mxu0
    %1020 = vdwg.mxu0
    %v1021 = vmax.f32 %v1015, 0.0
    %v1022 = vmax.f32 %v1018, 0.0
    %v1025 = vrot.slane %v1021, 7
    %v1026 = vrot.slane %v1022, 7
    %v1027 = vsel %vm204, %v1025, %v1026
    %v1030 = vsel %vm204, 0.0, %v1025
    %v1031 = vrot.slane %v1021, 1
    %v1032 = vrot.slane %v1022, 1
    %v1033 = vsel %vm208, %v1031, %v1032
    %v1036 = vsel %vm208, %v1032, 0.0
    %v1037 = vsel %vm857, 0.0, %v1030
    %v1038 = vsel %vm858, 0.0, %v1027
    %v1039 = vsel %vm861, 0.0, %v1033
    %v1040 = vsel %vm862, 0.0, %v1036
    %v1041 = vld [vmem:[#allocation2 + $0x1f8] sm:$0xf]
    %v1042 = vld [vmem:[#allocation2 + $0x1fc] sm:$0xf]
    %v1043 = vld [vmem:[#allocation2 + $0x200] sm:$0xf]
    %v1044 = vld [vmem:[#allocation2 + $0x204] sm:$0xf]
    %v1045 = vld [vmem:[#allocation2 + $0x208] sm:$0xf]
    %v1046 = vld [vmem:[#allocation2 + $0x20c] sm:$0xf]
    %v1047 = vld [vmem:[#allocation2 + $0x210] sm:$0xf]
    %v1048 = vld [vmem:[#allocation2 + $0x214] sm:$0xf]
    %v1049 = vld [vmem:[#allocation2 + $0x218] sm:$0xf]
    %v1050 = vld [vmem:[#allocation2 + $0x21c] sm:$0xf]
    %v1051 = vld [vmem:[#allocation2 + $0x220] sm:$0xf]
    %v1052 = vld [vmem:[#allocation2 + $0x224] sm:$0xf]
    %v1053 = vld [vmem:[#allocation2 + $0x228] sm:$0xf]
    %v1054 = vld [vmem:[#allocation2 + $0x22c] sm:$0xf]
    %v1055 = vld [vmem:[#allocation2 + $0x230] sm:$0xf]
    %v1056 = vld [vmem:[#allocation2 + $0x234] sm:$0xf]
    %v1057 = vld [vmem:[#allocation2 + $0x238] sm:$0xf]
    %v1058 = vld [vmem:[#allocation2 + $0x23c] sm:$0xf]
    %v1059 = vld [vmem:[#allocation2 + $0x240] sm:$0xf]
    %v1060 = vld [vmem:[#allocation2 + $0x244] sm:$0xf]
    %v1061 = vld [vmem:[#allocation2 + $0x248] sm:$0xf]
    %v1062 = vld [vmem:[#allocation2 + $0x24c] sm:$0xf]
    %v1063 = vld [vmem:[#allocation2 + $0x250] sm:$0xf]
    %v1064 = vld [vmem:[#allocation2 + $0x254] sm:$0xf]
    %v1065 = vld [vmem:[#allocation2 + $0x258] sm:$0xf]
    %v1066 = vld [vmem:[#allocation2 + $0x25c] sm:$0xf]
    %v1067 = vld [vmem:[#allocation2 + $0x260] sm:$0xf]
    %v1068 = vld [vmem:[#allocation2 + $0x264] sm:$0xf]
    %v1069 = vld [vmem:[#allocation2 + $0x268] sm:$0xf]
    %v1070 = vld [vmem:[#allocation2 + $0x26c] sm:$0xf]
    %v1071 = vld [vmem:[#allocation2 + $0x270] sm:$0xf]
    %v1072 = vld [vmem:[#allocation2 + $0x274] sm:$0xf]
    %v1073 = vld [vmem:[#allocation2 + $0x278] sm:$0xf]
    %v1074 = vld [vmem:[#allocation2 + $0x27c] sm:$0xf]
    %v1075 = vld [vmem:[#allocation2 + $0x280] sm:$0xf]
    %v1076 = vld [vmem:[#allocation2 + $0x284] sm:$0xf]
    %v1077 = vld [vmem:[#allocation2 + $0x288] sm:$0xf]
    %v1078 = vld [vmem:[#allocation2 + $0x28c] sm:$0xf]
    %v1079 = vld [vmem:[#allocation2 + $0x290] sm:$0xf]
    %v1080 = vld [vmem:[#allocation2 + $0x294] sm:$0xf]
    %v1081 = vld [vmem:[#allocation2 + $0x298] sm:$0xf]
    %v1082 = vld [vmem:[#allocation2 + $0x29c] sm:$0xf]
    %v1083 = vld [vmem:[#allocation2 + $0x2a0] sm:$0xf]
    %v1084 = vld [vmem:[#allocation2 + $0x2a4] sm:$0xf]
    %v1085 = vld [vmem:[#allocation2 + $0x2a8] sm:$0xf]
    %v1086 = vld [vmem:[#allocation2 + $0x2ac] sm:$0xf]
    %v1087 = vld [vmem:[#allocation2 + $0x2b0] sm:$0xf]
    %v1088 = vld [vmem:[#allocation2 + $0x2b4] sm:$0xf]
    %v1089 = vpack.c.bf16 %v1038, %v1037
    %v1090 = vpack.c.bf16 %v1022, %v1021
    %v1091 = vpack.c.bf16 %v1040, %v1039
    %v1140 = vunpack.c.l.b16 %v1041
    %v1141 = vunpack.c.l.b16 %v1042
    %v1142 = vunpack.c.l.b16 %v1043
    %v1143 = vunpack.c.l.b16 %v1044
    %v1144 = vunpack.c.l.b16 %v1045
    %v1145 = vunpack.c.l.b16 %v1046
    %v1146 = vunpack.c.l.b16 %v1047
    %v1147 = vunpack.c.l.b16 %v1048
    %v1148 = vunpack.c.l.b16 %v1049
    %v1149 = vunpack.c.l.b16 %v1050
    %v1150 = vunpack.c.l.b16 %v1051
    %v1151 = vunpack.c.l.b16 %v1052
    %v1152 = vunpack.c.l.b16 %v1053
    %v1153 = vunpack.c.l.b16 %v1054
    %v1154 = vunpack.c.l.b16 %v1055
    %v1155 = vunpack.c.l.b16 %v1056
    %v1156 = vunpack.c.l.b16 %v1057
    %v1157 = vunpack.c.l.b16 %v1058
    %v1158 = vunpack.c.l.b16 %v1059
    %v1159 = vunpack.c.l.b16 %v1060
    %v1160 = vunpack.c.l.b16 %v1061
    %v1161 = vunpack.c.l.b16 %v1062
    %v1162 = vunpack.c.l.b16 %v1063
    %v1163 = vunpack.c.l.b16 %v1064
    %v1164 = vunpack.c.l.b16 %v1065
    %v1165 = vunpack.c.l.b16 %v1066
    %v1166 = vunpack.c.l.b16 %v1067
    %v1167 = vunpack.c.l.b16 %v1068
    %v1168 = vunpack.c.l.b16 %v1069
    %v1169 = vunpack.c.l.b16 %v1070
    %v1170 = vunpack.c.l.b16 %v1071
    %v1171 = vunpack.c.l.b16 %v1072
    %v1172 = vunpack.c.l.b16 %v1073
    %v1173 = vunpack.c.l.b16 %v1074
    %v1174 = vunpack.c.l.b16 %v1075
    %v1175 = vunpack.c.l.b16 %v1076
    %v1176 = vunpack.c.l.b16 %v1077
    %v1177 = vunpack.c.l.b16 %v1078
    %v1178 = vunpack.c.l.b16 %v1079
    %v1179 = vunpack.c.l.b16 %v1080
    %v1180 = vunpack.c.l.b16 %v1081
    %v1181 = vunpack.c.l.b16 %v1082
    %v1182 = vunpack.c.l.b16 %v1083
    %v1183 = vunpack.c.l.b16 %v1084
    %v1184 = vunpack.c.l.b16 %v1085
    %v1185 = vunpack.c.l.b16 %v1086
    %v1186 = vunpack.c.l.b16 %v1087
    %v1187 = vunpack.c.l.b16 %v1088
    %v1188 = vpack.c.b16 %v1141, %v1140
    %v1189 = vpack.c.b16 %v1143, %v1142
    %v1190 = vpack.c.b16 %v1145, %v1144
    %v1191 = vpack.c.b16 %v1147, %v1146
    %v1192 = vpack.c.b16 %v1149, %v1148
    %v1193 = vpack.c.b16 %v1151, %v1150
    %v1194 = vpack.c.b16 %v1153, %v1152
    %v1195 = vpack.c.b16 %v1155, %v1154
    %v1196 = vpack.c.b16 %v1157, %v1156
    %v1197 = vpack.c.b16 %v1159, %v1158
    %v1198 = vpack.c.b16 %v1161, %v1160
    %v1199 = vpack.c.b16 %v1163, %v1162
    %v1200 = vpack.c.b16 %v1165, %v1164
    %v1201 = vpack.c.b16 %v1167, %v1166
    %v1202 = vpack.c.b16 %v1169, %v1168
    %v1203 = vpack.c.b16 %v1171, %v1170
    %v1204 = vpack.c.b16 %v1173, %v1172
    %v1205 = vpack.c.b16 %v1175, %v1174
    %v1206 = vpack.c.b16 %v1177, %v1176
    %v1207 = vpack.c.b16 %v1179, %v1178
    %v1208 = vpack.c.b16 %v1181, %v1180
    %v1209 = vpack.c.b16 %v1183, %v1182
    %v1210 = vpack.c.b16 %v1185, %v1184
    %v1211 = vpack.c.b16 %v1187, %v1186
    %1236 = vmatprep.subr.bf16.mxu0 0
    %1237 = vmatpush1.bf16.msra.mxu0 %v1195
    %1238 = vmatprep.subr.bf16.mxu0 0
    %1239 = vmatpush1.bf16.msra.mxu0 %v1194
    %1240 = vmatprep.subr.bf16.mxu0 0
    %1241 = vmatpush1.bf16.msra.mxu0 %v1193
    %1242 = vmatprep.subr.bf16.mxu0 0
    %1243 = vmatpush1.bf16.msra.mxu0 %v1192
    %1244 = vmatprep.subr.bf16.mxu0 0
    %1245 = vmatpush1.bf16.msra.mxu0 %v1191
    %1246 = vmatprep.subr.bf16.mxu0 0
    %1247 = vmatpush1.bf16.msra.mxu0 %v1190
    %1248 = vmatprep.subr.bf16.mxu0 0
    %1249 = vmatpush1.bf16.msra.mxu0 %v1189
    %1250 = vmatprep.subr.bf16.mxu0 0
    %1251 = vmatpush1.bf16.msra.mxu0 %v1188
    %1252 = vmatprep.subr.bf16.mxu0 0
    %1253 = vmatpush2.bf16.msra.mxu0 %v1203
    %1254 = vmatprep.subr.bf16.mxu0 0
    %1255 = vmatpush2.bf16.msra.mxu0 %v1202
    %1256 = vmatprep.subr.bf16.mxu0 0
    %1257 = vmatpush2.bf16.msra.mxu0 %v1201
    %1258 = vmatprep.subr.bf16.mxu0 0
    %1259 = vmatpush2.bf16.msra.mxu0 %v1200
    %1260 = vmatprep.subr.bf16.mxu0 0
    %1261 = vmatpush2.bf16.msra.mxu0 %v1199
    %1262 = vmatprep.subr.bf16.mxu0 0
    %1263 = vmatpush2.bf16.msra.mxu0 %v1198
    %1264 = vmatprep.subr.bf16.mxu0 0
    %1265 = vmatpush2.bf16.msra.mxu0 %v1197
    %1266 = vmatprep.subr.bf16.mxu0 0
    %1267 = vmatpush2.bf16.msra.mxu0 %v1196
    %1268 = vmatprep.mubr.bf16.mxu0 %v1090
    %1269 = vmatmul.mubr.bf16.gmra.mxu0 %v1089
    %v1270 = vpop.f32.mrf.mxu0
    %v1271 = vadd.f32 0.0, %v1270
    %v1272 = vpop.f32.mrf.mxu0
    %v1273 = vpop.f32.mrf.mxu0
    %v1274 = vadd.f32 0.0, %v1273
    %v1275 = vpop.f32.mrf.mxu0
    %1276 = vdwg.mxu0
    %1277 = vmatprep.subr.bf16.mxu0 0
    %1278 = vmatpush1.bf16.msra.mxu0 %v1211
    %1279 = vmatprep.subr.bf16.mxu0 0
    %1280 = vmatpush1.bf16.msra.mxu0 %v1210
    %1281 = vmatprep.subr.bf16.mxu0 0
    %1282 = vmatpush1.bf16.msra.mxu0 %v1209
    %1283 = vmatprep.subr.bf16.mxu0 0
    %1284 = vmatpush1.bf16.msra.mxu0 %v1208
    %1285 = vmatprep.subr.bf16.mxu0 0
    %1286 = vmatpush1.bf16.msra.mxu0 %v1207
    %1287 = vmatprep.subr.bf16.mxu0 0
    %1288 = vmatpush1.bf16.msra.mxu0 %v1206
    %1289 = vmatprep.subr.bf16.mxu0 0
    %1290 = vmatpush1.bf16.msra.mxu0 %v1205
    %1291 = vmatprep.subr.bf16.mxu0 0
    %1292 = vmatpush1.bf16.msra.mxu0 %v1204
    %1293 = vmatprep.subr.bf16.mxu0 0
    %1294 = vmatpush2.bf16.msra.mxu0 0
    %1295 = vmatprep.subr.bf16.mxu0 0
    %1296 = vmatpush2.bf16.msra.mxu0 0
    %1297 = vmatprep.subr.bf16.mxu0 0
    %1298 = vmatpush2.bf16.msra.mxu0 0
    %1299 = vmatprep.subr.bf16.mxu0 0
    %1300 = vmatpush2.bf16.msra.mxu0 0
    %1301 = vmatprep.subr.bf16.mxu0 0
    %1302 = vmatpush2.bf16.msra.mxu0 0
    %1303 = vmatprep.subr.bf16.mxu0 0
    %1304 = vmatpush2.bf16.msra.mxu0 0
    %1305 = vmatprep.subr.bf16.mxu0 0
    %1306 = vmatpush2.bf16.msra.mxu0 0
    %1307 = vmatprep.subr.bf16.mxu0 0
    %1308 = vmatpush2.bf16.msra.mxu0 0
    %1309 = vmatprep.mubr.bf16.mxu0 0
    %1310 = vmatmul.mubr.bf16.gmra.mxu0 %v1091
    %v1311 = vpop.f32.mrf.mxu0
    %v1312 = vadd.f32 %v1271, %v1311
    %v1313 = vpop.f32.mrf.mxu0
    %v1314 = vpop.f32.mrf.mxu0
    %v1315 = vadd.f32 %v1274, %v1314
    %v1316 = vpop.f32.mrf.mxu0
    %1317 = vdwg.mxu0
    %v1318 = vadd.f32 %v839, %v1312
    %v1319 = vadd.f32 %v840, %v1315
    %v1320 = vld [vmem:[#allocation2 + $0x2b8] sm:$0x1]
    %v1321 = vunpack.c.l.bf16 %v1320
    %v1322 = vlaneseq
    %v1323 = vshrl.u32 %v1322, 7
    %v1324 = vsub.s32 0, %v1323
    %v1325 = vrot.slane %v1321, %v1324
    %v1326 = vadd.f32 %v1318, %v1325
    %v1327 = vadd.f32 %v1319, %v1325
    %v1328 = vmax.f32 %v1326, 0.0
    %v1329 = vmax.f32 %v1327, 0.0
    %v1330 = vld [vmem:[#allocation2 + $0x2c0] sm:$0xf]
    %v1331 = vld [vmem:[#allocation2 + $0x2c4] sm:$0xf]
    %v1332 = vld [vmem:[#allocation2 + $0x2c8] sm:$0xf]
    %v1333 = vld [vmem:[#allocation2 + $0x2cc] sm:$0xf]
    %v1334 = vld [vmem:[#allocation2 + $0x2d0] sm:$0xf]
    %v1335 = vld [vmem:[#allocation2 + $0x2d4] sm:$0xf]
    %v1336 = vld [vmem:[#allocation2 + $0x2d8] sm:$0xf]
    %v1337 = vld [vmem:[#allocation2 + $0x2dc] sm:$0xf]
    %v1338 = vpack.c.bf16 %v1329, %v1328
    %v1347 = vunpack.c.l.b16 %v1330
    %v1348 = vunpack.c.l.b16 %v1331
    %v1349 = vunpack.c.l.b16 %v1332
    %v1350 = vunpack.c.l.b16 %v1333
    %v1351 = vunpack.c.l.b16 %v1334
    %v1352 = vunpack.c.l.b16 %v1335
    %v1353 = vunpack.c.l.b16 %v1336
    %v1354 = vunpack.c.l.b16 %v1337
    %v1355 = vpack.c.b16 %v1348, %v1347
    %v1356 = vpack.c.b16 %v1350, %v1349
    %v1357 = vpack.c.b16 %v1352, %v1351
    %v1358 = vpack.c.b16 %v1354, %v1353
    %v1364 = vsel %vm60, %v1338, 0
    %1366 = vmatprep.subr.bf16.mxu0 0
    %1367 = vmatpush1.bf16.msra.mxu0 0
    %1368 = vmatprep.subr.bf16.mxu0 0
    %1369 = vmatpush1.bf16.msra.mxu0 0
    %1370 = vmatprep.subr.bf16.mxu0 0
    %1371 = vmatpush1.bf16.msra.mxu0 0
    %1372 = vmatprep.subr.bf16.mxu0 0
    %1373 = vmatpush1.bf16.msra.mxu0 0
    %1374 = vmatprep.subr.bf16.mxu0 0
    %1375 = vmatpush1.bf16.msra.mxu0 %v1358
    %1376 = vmatprep.subr.bf16.mxu0 0
    %1377 = vmatpush1.bf16.msra.mxu0 %v1357
    %1378 = vmatprep.subr.bf16.mxu0 0
    %1379 = vmatpush1.bf16.msra.mxu0 %v1356
    %1380 = vmatprep.subr.bf16.mxu0 0
    %1381 = vmatpush1.bf16.msra.mxu0 %v1355
    %1382 = vmatprep.subr.bf16.mxu0 0
    %1383 = vmatpush2.bf16.msra.mxu0 0
    %1384 = vmatprep.subr.bf16.mxu0 0
    %1385 = vmatpush2.bf16.msra.mxu0 0
    %1386 = vmatprep.subr.bf16.mxu0 0
    %1387 = vmatpush2.bf16.msra.mxu0 0
    %1388 = vmatprep.subr.bf16.mxu0 0
    %1389 = vmatpush2.bf16.msra.mxu0 0
    %1390 = vmatprep.subr.bf16.mxu0 0
    %1391 = vmatpush2.bf16.msra.mxu0 0
    %1392 = vmatprep.subr.bf16.mxu0 0
    %1393 = vmatpush2.bf16.msra.mxu0 0
    %1394 = vmatprep.subr.bf16.mxu0 0
    %1395 = vmatpush2.bf16.msra.mxu0 0
    %1396 = vmatprep.subr.bf16.mxu0 0
    %1397 = vmatpush2.bf16.msra.mxu0 0
    %1398 = vmatprep.mubr.bf16.mxu0 0
    %1399 = vmatmul.mubr.bf16.gmra.mxu0 %v1364
    %v1400 = vpop.f32.mrf.mxu0
    %v1401 = vadd.f32 0.0, %v1400
    %v1402 = vpop.f32.mrf.mxu0
    %v1403 = vpop.f32.mrf.mxu0
    %v1404 = vadd.f32 0.0, %v1403
    %v1405 = vpop.f32.mrf.mxu0
    %1406 = vdwg.mxu0
    %v1407 = vld [vmem:[#allocation2 + $0x2e0] sm:$0xf]
    %v1408 = vld [vmem:[#allocation2 + $0x2e4] sm:$0xf]
    %v1409 = vld [vmem:[#allocation2 + $0x2e8] sm:$0xf]
    %v1410 = vld [vmem:[#allocation2 + $0x2ec] sm:$0xf]
    %v1415 = vunpack.c.l.b16 %v1407
    %v1416 = vunpack.c.l.b16 %v1408
    %v1417 = vunpack.c.l.b16 %v1409
    %v1418 = vunpack.c.l.b16 %v1410
    %v1419 = vpack.c.b16 %v1416, %v1415
    %v1420 = vpack.c.b16 %v1418, %v1417
    %vm1421 = vcmask 130048
    %v1423 = vsel %vm1421, %v1419, 0
    %v1426 = vsel %vm1421, %v1420, 0
    %1428 = vmatprep.subr.mxu0 0.0
    %1429 = vmatpush1.msra.mxu0 0.0
    %1430 = vmatprep.subr.mxu0 0.0
    %1431 = vmatpush1.msra.mxu0 0.0
    %1432 = vmatprep.subr.mxu0 0.0
    %1433 = vmatpush1.msra.mxu0 0.0
    %1434 = vmatprep.subr.mxu0 0.0
    %1435 = vmatpush1.msra.mxu0 0.0
    %1436 = vmatprep.subr.mxu0 0.0
    %1437 = vmatpush1.msra.mxu0 0.0
    %1438 = vmatprep.subr.mxu0 0.0
    %1439 = vmatpush1.msra.mxu0 0.0
    %1440 = vmatprep.subr.mxu0 0.0
    %1441 = vmatpush1.msra.mxu0 0.0
    %1442 = vmatprep.subr.mxu0 0.0
    %1443 = vmatpush1.msra.mxu0 0.0
    %1444 = vmatprep.subr.mxu0 0.0
    %1445 = vmatpush1.msra.mxu0 0.0
    %1446 = vmatprep.subr.mxu0 0.0
    %1447 = vmatpush1.msra.mxu0 0.0
    %1448 = vmatprep.subr.mxu0 0.0
    %1449 = vmatpush1.msra.mxu0 0.0
    %1450 = vmatprep.subr.mxu0 0.0
    %1451 = vmatpush1.msra.mxu0 0.0
    %1452 = vmatprep.subr.mxu0 0.0
    %1453 = vmatpush1.msra.mxu0 0.0
    %1454 = vmatprep.subr.mxu0 0.0
    %1455 = vmatpush1.msra.mxu0 0.0
    %1456 = vmatprep.subr.mxu0 0.0
    %1457 = vmatpush1.msra.mxu0 %v1404
    %1458 = vmatprep.subr.mxu0 0.0
    %1459 = vmatpush1.msra.mxu0 %v1401
    %1460 = vmatprep.subr.mxu0 0.0
    %1461 = vmatpush2.msra.mxu0 0.0
    %1462 = vmatprep.subr.mxu0 0.0
    %1463 = vmatpush2.msra.mxu0 0.0
    %1464 = vmatprep.subr.mxu0 0.0
    %1465 = vmatpush2.msra.mxu0 0.0
    %1466 = vmatprep.subr.mxu0 0.0
    %1467 = vmatpush2.msra.mxu0 0.0
    %1468 = vmatprep.subr.mxu0 0.0
    %1469 = vmatpush2.msra.mxu0 0.0
    %1470 = vmatprep.subr.mxu0 0.0
    %1471 = vmatpush2.msra.mxu0 0.0
    %1472 = vmatprep.subr.mxu0 0.0
    %1473 = vmatpush2.msra.mxu0 0.0
    %1474 = vmatprep.subr.mxu0 0.0
    %1475 = vmatpush2.msra.mxu0 0.0
    %1476 = vmatprep.subr.mxu0 0.0
    %1477 = vmatpush2.msra.mxu0 0.0
    %1478 = vmatprep.subr.mxu0 0.0
    %1479 = vmatpush2.msra.mxu0 0.0
    %1480 = vmatprep.subr.mxu0 0.0
    %1481 = vmatpush2.msra.mxu0 0.0
    %1482 = vmatprep.subr.mxu0 0.0
    %1483 = vmatpush2.msra.mxu0 0.0
    %1484 = vmatprep.subr.mxu0 0.0
    %1485 = vmatpush2.msra.mxu0 0.0
    %1486 = vmatprep.subr.mxu0 0.0
    %1487 = vmatpush2.msra.mxu0 0.0
    %1488 = vmatprep.subr.mxu0 0.0
    %1489 = vmatpush2.msra.mxu0 0.0
    %1490 = vmatprep.subr.mxu0 0.0
    %1491 = vmatpush2.msra.mxu0 0.0
    %1492 = vmatprep.mubr.bf16.mxu0 0
    %1493 = vmatmul.mubr.bf16.gmra.mxu0 %v1423
    %v1494 = vpop.f32.mrf.mxu0
    %v1495 = vadd.f32 0.0, %v1494
    %v1496 = vpop.f32.mrf.mxu0
    %v1497 = vpop.f32.mrf.mxu0
    %v1498 = vadd.f32 0.0, %v1497
    %v1499 = vpop.f32.mrf.mxu0
    %1500 = vmatprep.mubr.bf16.mxu0 0
    %1501 = vmatmul.mubr.bf16.gmra.mxu0 %v1426
    %v1502 = vpop.f32.mrf.mxu0
    %v1503 = vadd.f32 0.0, %v1502
    %v1504 = vpop.f32.mrf.mxu0
    %v1505 = vpop.f32.mrf.mxu0
    %v1506 = vadd.f32 0.0, %v1505
    %v1507 = vpop.f32.mrf.mxu0
    %1508 = vdwg.mxu0
    %v1509 = vadd.s32 %v186, 16
    %v1510 = vadd.s32 %v186, 24
    %v1511 = vand.u32 %v1509, 1
    %v1512 = vand.u32 %v1510, 1
    %vm1513 = vcmp.eq.s32.totalorder %v1511, 0
    %vm1514 = vcmp.eq.s32.totalorder %v1512, 0
    %1519 = vrot.lane.b32.xlu0 %v1495, 64
    %v1520 = vpop.permute.xlu0 %1519
    %1521 = vrot.lane.b32.xlu0 %v1498, 64
    %v1522 = vpop.permute.xlu0 %1521
    %1523 = vrot.lane.b32.xlu0 %v1503, 64
    %v1524 = vpop.permute.xlu0 %1523
    %1525 = vrot.lane.b32.xlu0 %v1506, 64
    %v1526 = vpop.permute.xlu0 %1525
    %v1531 = vsel %vm188, %v1495, %v1520
    %v1532 = vsel %vm822, %v1498, %v1522
    %v1533 = vsel %vm1513, %v1503, %v1524
    %v1534 = vsel %vm1514, %v1506, %v1526
    %v1535 = vld [vmem:[#allocation2 + $0x2f0] sm:$0x1]
    %v1536 = vunpack.c.l.bf16 %v1535
    %v1537 = vlaneseq
    %v1538 = vshrl.u32 %v1537, 7
    %v1539 = vsub.s32 0, %v1538
    %v1540 = vrot.slane %v1536, %v1539
    %v1541 = vadd.f32 %v1531, %v1540
    %v1542 = vadd.f32 %v1532, %v1540
    %v1543 = vadd.f32 %v1533, %v1540
    %v1544 = vadd.f32 %v1534, %v1540
    %v1549 = vrot.slane %v1541, 7
    %v1550 = vrot.slane %v1542, 7
    %v1551 = vsel %vm204, %v1549, %v1550
    %v1552 = vrot.slane %v1543, 7
    %v1553 = vsel %vm204, %v1550, %v1552
    %v1554 = vrot.slane %v1544, 7
    %v1555 = vsel %vm204, %v1552, %v1554
    %v1560 = vsel %vm204, 0.0, %v1549
    %v1561 = vrot.slane %v1541, 1
    %v1562 = vrot.slane %v1542, 1
    %v1563 = vsel %vm208, %v1561, %v1562
    %v1564 = vrot.slane %v1543, 1
    %v1565 = vsel %vm208, %v1562, %v1564
    %v1566 = vrot.slane %v1544, 1
    %v1567 = vsel %vm208, %v1564, %v1566
    %v1572 = vsel %vm208, %v1566, 0.0
    %v1573 = vand.u32 %v186, 15
    %v1574 = vand.u32 %v820, 15
    %v1575 = vand.u32 %v1509, 15
    %v1576 = vand.u32 %v1510, 15
    %vm1577 = vcmp.eq.s32.totalorder %v1573, 0
    %vm1578 = vcmp.eq.s32.totalorder %v1574, 0
    %vm1579 = vcmp.eq.s32.totalorder %v1575, 0
    %vm1580 = vcmp.eq.s32.totalorder %v1576, 0
    %v1581 = vsel %vm1577, 0.0, %v1560
    %v1582 = vsel %vm1578, 0.0, %v1551
    %v1583 = vsel %vm1579, 0.0, %v1553
    %v1584 = vsel %vm1580, 0.0, %v1555
    %vm1585 = vcmp.eq.s32.totalorder %v1573, 15
    %vm1586 = vcmp.eq.s32.totalorder %v1574, 15
    %vm1587 = vcmp.eq.s32.totalorder %v1575, 15
    %vm1588 = vcmp.eq.s32.totalorder %v1576, 15
    %v1589 = vsel %vm1585, 0.0, %v1563
    %v1590 = vsel %vm1586, 0.0, %v1565
    %v1591 = vsel %vm1587, 0.0, %v1567
    %v1592 = vsel %vm1588, 0.0, %v1572
    %1593 = vrot.lane.b32.xlu0 %v1541, 64
    %v1594 = vpop.permute.xlu0 %1593
    %1595 = vrot.lane.b32.xlu0 %v1542, 64
    %v1596 = vpop.permute.xlu0 %1595
    %1597 = vrot.lane.b32.xlu0 %v1543, 64
    %v1598 = vpop.permute.xlu0 %1597
    %1599 = vrot.lane.b32.xlu0 %v1544, 64
    %v1600 = vpop.permute.xlu0 %1599
    %v1605 = vsel %vm60, %v1581, %v1594
    %v1606 = vsel %vm60, %v1582, %v1596
    %v1607 = vsel %vm60, %v1583, %v1598
    %v1608 = vsel %vm60, %v1584, %v1600
    %v1609 = vld [vmem:[#allocation2 + $0x2f8] sm:$0xf]
    %v1610 = vld [vmem:[#allocation2 + $0x2fc] sm:$0xf]
    %v1611 = vld [vmem:[#allocation2 + $0x300] sm:$0xf]
    %v1612 = vld [vmem:[#allocation2 + $0x304] sm:$0xf]
    %v1613 = vld [vmem:[#allocation2 + $0x308] sm:$0xf]
    %v1614 = vld [vmem:[#allocation2 + $0x30c] sm:$0xf]
    %v1615 = vld [vmem:[#allocation2 + $0x310] sm:$0xf]
    %v1616 = vld [vmem:[#allocation2 + $0x314] sm:$0xf]
    %v1617 = vld [vmem:[#allocation2 + $0x318] sm:$0xf]
    %v1618 = vld [vmem:[#allocation2 + $0x31c] sm:$0xf]
    %v1619 = vld [vmem:[#allocation2 + $0x320] sm:$0xf]
    %v1620 = vld [vmem:[#allocation2 + $0x324] sm:$0xf]
    %v1621 = vld [vmem:[#allocation2 + $0x328] sm:$0xf]
    %v1622 = vld [vmem:[#allocation2 + $0x32c] sm:$0xf]
    %v1623 = vld [vmem:[#allocation2 + $0x330] sm:$0xf]
    %v1624 = vld [vmem:[#allocation2 + $0x334] sm:$0xf]
    %v1625 = vld [vmem:[#allocation2 + $0x338] sm:$0xf]
    %v1626 = vld [vmem:[#allocation2 + $0x33c] sm:$0xf]
    %v1627 = vld [vmem:[#allocation2 + $0x340] sm:$0xf]
    %v1628 = vld [vmem:[#allocation2 + $0x344] sm:$0xf]
    %v1629 = vld [vmem:[#allocation2 + $0x348] sm:$0xf]
    %v1630 = vld [vmem:[#allocation2 + $0x34c] sm:$0xf]
    %v1631 = vld [vmem:[#allocation2 + $0x350] sm:$0xf]
    %v1632 = vld [vmem:[#allocation2 + $0x354] sm:$0xf]
    %v1633 = vpack.c.bf16 %v1606, %v1605
    %v1634 = vpack.c.bf16 %v1590, %v1589
    %v1635 = vpack.c.bf16 %v1608, %v1607
    %v1636 = vpack.c.bf16 %v1592, %v1591
    %v1637 = vld [vmem:[#allocation2 + $0x358] sm:$0x1]
    %v1638 = vunpack.c.l.bf16 %v1637
    %v1639 = vlaneseq
    %v1640 = vshrl.u32 %v1639, 7
    %v1641 = vsub.s32 0, %v1640
    %v1642 = vrot.slane %v1638, %v1641
    %v1667 = vunpack.c.l.b16 %v1609
    %v1668 = vunpack.c.l.b16 %v1610
    %v1669 = vunpack.c.l.b16 %v1611
    %v1670 = vunpack.c.l.b16 %v1612
    %v1671 = vunpack.c.l.b16 %v1613
    %v1672 = vunpack.c.l.b16 %v1614
    %v1673 = vunpack.c.l.b16 %v1615
    %v1674 = vunpack.c.l.b16 %v1616
    %v1675 = vunpack.c.l.b16 %v1617
    %v1676 = vunpack.c.l.b16 %v1618
    %v1677 = vunpack.c.l.b16 %v1619
    %v1678 = vunpack.c.l.b16 %v1620
    %v1679 = vunpack.c.l.b16 %v1621
    %v1680 = vunpack.c.l.b16 %v1622
    %v1681 = vunpack.c.l.b16 %v1623
    %v1682 = vunpack.c.l.b16 %v1624
    %v1683 = vunpack.c.l.b16 %v1625
    %v1684 = vunpack.c.l.b16 %v1626
    %v1685 = vunpack.c.l.b16 %v1627
    %v1686 = vunpack.c.l.b16 %v1628
    %v1687 = vunpack.c.l.b16 %v1629
    %v1688 = vunpack.c.l.b16 %v1630
    %v1689 = vunpack.c.l.b16 %v1631
    %v1690 = vunpack.c.l.b16 %v1632
    %v1691 = vpack.c.b16 %v1668, %v1667
    %v1692 = vpack.c.b16 %v1670, %v1669
    %v1693 = vpack.c.b16 %v1672, %v1671
    %v1694 = vpack.c.b16 %v1674, %v1673
    %v1695 = vpack.c.b16 %v1676, %v1675
    %v1696 = vpack.c.b16 %v1678, %v1677
    %v1697 = vpack.c.b16 %v1680, %v1679
    %v1698 = vpack.c.b16 %v1682, %v1681
    %v1699 = vpack.c.b16 %v1684, %v1683
    %v1700 = vpack.c.b16 %v1686, %v1685
    %v1701 = vpack.c.b16 %v1688, %v1687
    %v1702 = vpack.c.b16 %v1690, %v1689
    %v1716 = vsel %vm60, %v1634, 0
    %v1719 = vsel %vm60, %v1636, 0
    %1721 = vmatprep.subr.bf16.mxu0 0
    %1722 = vmatpush1.bf16.msra.mxu0 %v1698
    %1723 = vmatprep.subr.bf16.mxu0 0
    %1724 = vmatpush1.bf16.msra.mxu0 %v1697
    %1725 = vmatprep.subr.bf16.mxu0 0
    %1726 = vmatpush1.bf16.msra.mxu0 %v1696
    %1727 = vmatprep.subr.bf16.mxu0 0
    %1728 = vmatpush1.bf16.msra.mxu0 %v1695
    %1729 = vmatprep.subr.bf16.mxu0 0
    %1730 = vmatpush1.bf16.msra.mxu0 %v1694
    %1731 = vmatprep.subr.bf16.mxu0 0
    %1732 = vmatpush1.bf16.msra.mxu0 %v1693
    %1733 = vmatprep.subr.bf16.mxu0 0
    %1734 = vmatpush1.bf16.msra.mxu0 %v1692
    %1735 = vmatprep.subr.bf16.mxu0 0
    %1736 = vmatpush1.bf16.msra.mxu0 %v1691
    %1737 = vmatprep.subr.bf16.mxu0 0
    %1738 = vmatpush2.bf16.msra.mxu0 0
    %1739 = vmatprep.subr.bf16.mxu0 0
    %1740 = vmatpush2.bf16.msra.mxu0 0
    %1741 = vmatprep.subr.bf16.mxu0 0
    %1742 = vmatpush2.bf16.msra.mxu0 0
    %1743 = vmatprep.subr.bf16.mxu0 0
    %1744 = vmatpush2.bf16.msra.mxu0 0
    %1745 = vmatprep.subr.bf16.mxu0 0
    %1746 = vmatpush2.bf16.msra.mxu0 %v1702
    %1747 = vmatprep.subr.bf16.mxu0 0
    %1748 = vmatpush2.bf16.msra.mxu0 %v1701
    %1749 = vmatprep.subr.bf16.mxu0 0
    %1750 = vmatpush2.bf16.msra.mxu0 %v1700
    %1751 = vmatprep.subr.bf16.mxu0 0
    %1752 = vmatpush2.bf16.msra.mxu0 %v1699
    %1753 = vmatprep.mubr.bf16.mxu0 %v1716
    %1754 = vmatmul.mubr.bf16.gmra.mxu0 %v1633
    %v1755 = vpop.f32.mrf.mxu0
    %v1756 = vadd.f32 %v1642, %v1755
    %v1757 = vpop.f32.mrf.mxu0
    %v1758 = vpop.f32.mrf.mxu0
    %v1759 = vadd.f32 %v1642, %v1758
    %v1760 = vpop.f32.mrf.mxu0
    %1761 = vmatprep.mubr.bf16.mxu0 %v1719
    %1762 = vmatmul.mubr.bf16.gmra.mxu0 %v1635
    %v1763 = vpop.f32.mrf.mxu0
    %v1764 = vadd.f32 %v1642, %v1763
    %v1765 = vpop.f32.mrf.mxu0
    %v1766 = vpop.f32.mrf.mxu0
    %v1767 = vadd.f32 %v1642, %v1766
    %v1768 = vpop.f32.mrf.mxu0
    %1769 = vdwg.mxu0
    %v1770 = vmax.f32 %v1756, 0.0
    %v1771 = vmax.f32 %v1759, 0.0
    %v1772 = vmax.f32 %v1764, 0.0
    %v1773 = vmax.f32 %v1767, 0.0
    %v1778 = vrot.slane %v1770, 7
    %v1779 = vrot.slane %v1771, 7
    %v1780 = vsel %vm204, %v1778, %v1779
    %v1781 = vrot.slane %v1772, 7
    %v1782 = vsel %vm204, %v1779, %v1781
    %v1783 = vrot.slane %v1773, 7
    %v1784 = vsel %vm204, %v1781, %v1783
    %v1789 = vsel %vm204, 0.0, %v1778
    %v1790 = vrot.slane %v1770, 1
    %v1791 = vrot.slane %v1771, 1
    %v1792 = vsel %vm208, %v1790, %v1791
    %v1793 = vrot.slane %v1772, 1
    %v1794 = vsel %vm208, %v1791, %v1793
    %v1795 = vrot.slane %v1773, 1
    %v1796 = vsel %vm208, %v1793, %v1795
    %v1801 = vsel %vm208, %v1795, 0.0
    %v1802 = vsel %vm1577, 0.0, %v1789
    %v1803 = vsel %vm1578, 0.0, %v1780
    %v1804 = vsel %vm1579, 0.0, %v1782
    %v1805 = vsel %vm1580, 0.0, %v1784
    %v1806 = vsel %vm1585, 0.0, %v1792
    %v1807 = vsel %vm1586, 0.0, %v1794
    %v1808 = vsel %vm1587, 0.0, %v1796
    %v1809 = vsel %vm1588, 0.0, %v1801
    %v1810 = vld [vmem:[#allocation2 + $0x360] sm:$0xf]
    %v1811 = vld [vmem:[#allocation2 + $0x364] sm:$0xf]
    %v1812 = vld [vmem:[#allocation2 + $0x368] sm:$0xf]
    %v1813 = vld [vmem:[#allocation2 + $0x36c] sm:$0xf]
    %v1814 = vld [vmem:[#allocation2 + $0x370] sm:$0xf]
    %v1815 = vld [vmem:[#allocation2 + $0x374] sm:$0xf]
    %v1816 = vld [vmem:[#allocation2 + $0x378] sm:$0xf]
    %v1817 = vld [vmem:[#allocation2 + $0x37c] sm:$0xf]
    %v1818 = vld [vmem:[#allocation2 + $0x380] sm:$0xf]
    %v1819 = vld [vmem:[#allocation2 + $0x384] sm:$0xf]
    %v1820 = vld [vmem:[#allocation2 + $0x388] sm:$0xf]
    %v1821 = vld [vmem:[#allocation2 + $0x38c] sm:$0xf]
    %v1822 = vld [vmem:[#allocation2 + $0x390] sm:$0xf]
    %v1823 = vld [vmem:[#allocation2 + $0x394] sm:$0xf]
    %v1824 = vld [vmem:[#allocation2 + $0x398] sm:$0xf]
    %v1825 = vld [vmem:[#allocation2 + $0x39c] sm:$0xf]
    %v1826 = vld [vmem:[#allocation2 + $0x3a0] sm:$0xf]
    %v1827 = vld [vmem:[#allocation2 + $0x3a4] sm:$0xf]
    %v1828 = vld [vmem:[#allocation2 + $0x3a8] sm:$0xf]
    %v1829 = vld [vmem:[#allocation2 + $0x3ac] sm:$0xf]
    %v1830 = vld [vmem:[#allocation2 + $0x3b0] sm:$0xf]
    %v1831 = vld [vmem:[#allocation2 + $0x3b4] sm:$0xf]
    %v1832 = vld [vmem:[#allocation2 + $0x3b8] sm:$0xf]
    %v1833 = vld [vmem:[#allocation2 + $0x3bc] sm:$0xf]
    %v1834 = vld [vmem:[#allocation2 + $0x3c0] sm:$0xf]
    %v1835 = vld [vmem:[#allocation2 + $0x3c4] sm:$0xf]
    %v1836 = vld [vmem:[#allocation2 + $0x3c8] sm:$0xf]
    %v1837 = vld [vmem:[#allocation2 + $0x3cc] sm:$0xf]
    %v1838 = vld [vmem:[#allocation2 + $0x3d0] sm:$0xf]
    %v1839 = vld [vmem:[#allocation2 + $0x3d4] sm:$0xf]
    %v1840 = vld [vmem:[#allocation2 + $0x3d8] sm:$0xf]
    %v1841 = vld [vmem:[#allocation2 + $0x3dc] sm:$0xf]
    %v1842 = vld [vmem:[#allocation2 + $0x3e0] sm:$0xf]
    %v1843 = vld [vmem:[#allocation2 + $0x3e4] sm:$0xf]
    %v1844 = vld [vmem:[#allocation2 + $0x3e8] sm:$0xf]
    %v1845 = vld [vmem:[#allocation2 + $0x3ec] sm:$0xf]
    %v1846 = vld [vmem:[#allocation2 + $0x3f0] sm:$0xf]
    %v1847 = vld [vmem:[#allocation2 + $0x3f4] sm:$0xf]
    %v1848 = vld [vmem:[#allocation2 + $0x3f8] sm:$0xf]
    %v1849 = vld [vmem:[#allocation2 + $0x3fc] sm:$0xf]
    %v1850 = vld [vmem:[#allocation2 + $0x400] sm:$0xf]
    %v1851 = vld [vmem:[#allocation2 + $0x404] sm:$0xf]
    %v1852 = vld [vmem:[#allocation2 + $0x408] sm:$0xf]
    %v1853 = vld [vmem:[#allocation2 + $0x40c] sm:$0xf]
    %v1854 = vld [vmem:[#allocation2 + $0x410] sm:$0xf]
    %v1855 = vld [vmem:[#allocation2 + $0x414] sm:$0xf]
    %v1856 = vld [vmem:[#allocation2 + $0x418] sm:$0xf]
    %v1857 = vld [vmem:[#allocation2 + $0x41c] sm:$0xf]
    %v1858 = vpack.c.bf16 %v1803, %v1802
    %v1859 = vpack.c.bf16 %v1771, %v1770
    %v1860 = vpack.c.bf16 %v1807, %v1806
    %v1861 = vpack.c.bf16 %v1805, %v1804
    %v1862 = vpack.c.bf16 %v1773, %v1772
    %v1863 = vpack.c.bf16 %v1809, %v1808
    %v1912 = vunpack.c.l.b16 %v1810
    %v1913 = vunpack.c.l.b16 %v1811
    %v1914 = vunpack.c.l.b16 %v1812
    %v1915 = vunpack.c.l.b16 %v1813
    %v1916 = vunpack.c.l.b16 %v1814
    %v1917 = vunpack.c.l.b16 %v1815
    %v1918 = vunpack.c.l.b16 %v1816
    %v1919 = vunpack.c.l.b16 %v1817
    %v1920 = vunpack.c.l.b16 %v1818
    %v1921 = vunpack.c.l.b16 %v1819
    %v1922 = vunpack.c.l.b16 %v1820
    %v1923 = vunpack.c.l.b16 %v1821
    %v1924 = vunpack.c.l.b16 %v1822
    %v1925 = vunpack.c.l.b16 %v1823
    %v1926 = vunpack.c.l.b16 %v1824
    %v1927 = vunpack.c.l.b16 %v1825
    %v1928 = vunpack.c.l.b16 %v1826
    %v1929 = vunpack.c.l.b16 %v1827
    %v1930 = vunpack.c.l.b16 %v1828
    %v1931 = vunpack.c.l.b16 %v1829
    %v1932 = vunpack.c.l.b16 %v1830
    %v1933 = vunpack.c.l.b16 %v1831
    %v1934 = vunpack.c.l.b16 %v1832
    %v1935 = vunpack.c.l.b16 %v1833
    %v1936 = vunpack.c.l.b16 %v1834
    %v1937 = vunpack.c.l.b16 %v1835
    %v1938 = vunpack.c.l.b16 %v1836
    %v1939 = vunpack.c.l.b16 %v1837
    %v1940 = vunpack.c.l.b16 %v1838
    %v1941 = vunpack.c.l.b16 %v1839
    %v1942 = vunpack.c.l.b16 %v1840
    %v1943 = vunpack.c.l.b16 %v1841
    %v1944 = vunpack.c.l.b16 %v1842
    %v1945 = vunpack.c.l.b16 %v1843
    %v1946 = vunpack.c.l.b16 %v1844
    %v1947 = vunpack.c.l.b16 %v1845
    %v1948 = vunpack.c.l.b16 %v1846
    %v1949 = vunpack.c.l.b16 %v1847
    %v1950 = vunpack.c.l.b16 %v1848
    %v1951 = vunpack.c.l.b16 %v1849
    %v1952 = vunpack.c.l.b16 %v1850
    %v1953 = vunpack.c.l.b16 %v1851
    %v1954 = vunpack.c.l.b16 %v1852
    %v1955 = vunpack.c.l.b16 %v1853
    %v1956 = vunpack.c.l.b16 %v1854
    %v1957 = vunpack.c.l.b16 %v1855
    %v1958 = vunpack.c.l.b16 %v1856
    %v1959 = vunpack.c.l.b16 %v1857
    %v1960 = vpack.c.b16 %v1913, %v1912
    %v1961 = vpack.c.b16 %v1915, %v1914
    %v1962 = vpack.c.b16 %v1917, %v1916
    %v1963 = vpack.c.b16 %v1919, %v1918
    %v1964 = vpack.c.b16 %v1921, %v1920
    %v1965 = vpack.c.b16 %v1923, %v1922
    %v1966 = vpack.c.b16 %v1925, %v1924
    %v1967 = vpack.c.b16 %v1927, %v1926
    %v1968 = vpack.c.b16 %v1929, %v1928
    %v1969 = vpack.c.b16 %v1931, %v1930
    %v1970 = vpack.c.b16 %v1933, %v1932
    %v1971 = vpack.c.b16 %v1935, %v1934
    %v1972 = vpack.c.b16 %v1937, %v1936
    %v1973 = vpack.c.b16 %v1939, %v1938
    %v1974 = vpack.c.b16 %v1941, %v1940
    %v1975 = vpack.c.b16 %v1943, %v1942
    %v1976 = vpack.c.b16 %v1945, %v1944
    %v1977 = vpack.c.b16 %v1947, %v1946
    %v1978 = vpack.c.b16 %v1949, %v1948
    %v1979 = vpack.c.b16 %v1951, %v1950
    %v1980 = vpack.c.b16 %v1953, %v1952
    %v1981 = vpack.c.b16 %v1955, %v1954
    %v1982 = vpack.c.b16 %v1957, %v1956
    %v1983 = vpack.c.b16 %v1959, %v1958
    %2008 = vmatprep.subr.bf16.mxu0 0
    %2009 = vmatpush1.bf16.msra.mxu0 %v1967
    %2010 = vmatprep.subr.bf16.mxu0 0
    %2011 = vmatpush1.bf16.msra.mxu0 %v1966
    %2012 = vmatprep.subr.bf16.mxu0 0
    %2013 = vmatpush1.bf16.msra.mxu0 %v1965
    %2014 = vmatprep.subr.bf16.mxu0 0
    %2015 = vmatpush1.bf16.msra.mxu0 %v1964
    %2016 = vmatprep.subr.bf16.mxu0 0
    %2017 = vmatpush1.bf16.msra.mxu0 %v1963
    %2018 = vmatprep.subr.bf16.mxu0 0
    %2019 = vmatpush1.bf16.msra.mxu0 %v1962
    %2020 = vmatprep.subr.bf16.mxu0 0
    %2021 = vmatpush1.bf16.msra.mxu0 %v1961
    %2022 = vmatprep.subr.bf16.mxu0 0
    %2023 = vmatpush1.bf16.msra.mxu0 %v1960
    %2024 = vmatprep.subr.bf16.mxu0 0
    %2025 = vmatpush2.bf16.msra.mxu0 %v1975
    %2026 = vmatprep.subr.bf16.mxu0 0
    %2027 = vmatpush2.bf16.msra.mxu0 %v1974
    %2028 = vmatprep.subr.bf16.mxu0 0
    %2029 = vmatpush2.bf16.msra.mxu0 %v1973
    %2030 = vmatprep.subr.bf16.mxu0 0
    %2031 = vmatpush2.bf16.msra.mxu0 %v1972
    %2032 = vmatprep.subr.bf16.mxu0 0
    %2033 = vmatpush2.bf16.msra.mxu0 %v1971
    %2034 = vmatprep.subr.bf16.mxu0 0
    %2035 = vmatpush2.bf16.msra.mxu0 %v1970
    %2036 = vmatprep.subr.bf16.mxu0 0
    %2037 = vmatpush2.bf16.msra.mxu0 %v1969
    %2038 = vmatprep.subr.bf16.mxu0 0
    %2039 = vmatpush2.bf16.msra.mxu0 %v1968
    %2040 = vmatprep.mubr.bf16.mxu0 %v1859
    %2041 = vmatmul.mubr.bf16.gmra.mxu0 %v1858
    %v2042 = vpop.f32.mrf.mxu0
    %v2043 = vadd.f32 0.0, %v2042
    %v2044 = vpop.f32.mrf.mxu0
    %v2045 = vpop.f32.mrf.mxu0
    %v2046 = vadd.f32 0.0, %v2045
    %v2047 = vpop.f32.mrf.mxu0
    %2048 = vmatprep.mubr.bf16.mxu0 %v1862
    %2049 = vmatmul.mubr.bf16.gmra.mxu0 %v1861
    %v2050 = vpop.f32.mrf.mxu0
    %v2051 = vadd.f32 0.0, %v2050
    %v2052 = vpop.f32.mrf.mxu0
    %v2053 = vpop.f32.mrf.mxu0
    %v2054 = vadd.f32 0.0, %v2053
    %v2055 = vpop.f32.mrf.mxu0
    %2056 = vdwg.mxu0
    %2057 = vmatprep.subr.bf16.mxu0 0
    %2058 = vmatpush1.bf16.msra.mxu0 %v1983
    %2059 = vmatprep.subr.bf16.mxu0 0
    %2060 = vmatpush1.bf16.msra.mxu0 %v1982
    %2061 = vmatprep.subr.bf16.mxu0 0
    %2062 = vmatpush1.bf16.msra.mxu0 %v1981
    %2063 = vmatprep.subr.bf16.mxu0 0
    %2064 = vmatpush1.bf16.msra.mxu0 %v1980
    %2065 = vmatprep.subr.bf16.mxu0 0
    %2066 = vmatpush1.bf16.msra.mxu0 %v1979
    %2067 = vmatprep.subr.bf16.mxu0 0
    %2068 = vmatpush1.bf16.msra.mxu0 %v1978
    %2069 = vmatprep.subr.bf16.mxu0 0
    %2070 = vmatpush1.bf16.msra.mxu0 %v1977
    %2071 = vmatprep.subr.bf16.mxu0 0
    %2072 = vmatpush1.bf16.msra.mxu0 %v1976
    %2073 = vmatprep.subr.bf16.mxu0 0
    %2074 = vmatpush2.bf16.msra.mxu0 0
    %2075 = vmatprep.subr.bf16.mxu0 0
    %2076 = vmatpush2.bf16.msra.mxu0 0
    %2077 = vmatprep.subr.bf16.mxu0 0
    %2078 = vmatpush2.bf16.msra.mxu0 0
    %2079 = vmatprep.subr.bf16.mxu0 0
    %2080 = vmatpush2.bf16.msra.mxu0 0
    %2081 = vmatprep.subr.bf16.mxu0 0
    %2082 = vmatpush2.bf16.msra.mxu0 0
    %2083 = vmatprep.subr.bf16.mxu0 0
    %2084 = vmatpush2.bf16.msra.mxu0 0
    %2085 = vmatprep.subr.bf16.mxu0 0
    %2086 = vmatpush2.bf16.msra.mxu0 0
    %2087 = vmatprep.subr.bf16.mxu0 0
    %2088 = vmatpush2.bf16.msra.mxu0 0
    %2089 = vmatprep.mubr.bf16.mxu0 0
    %2090 = vmatmul.mubr.bf16.gmra.mxu0 %v1860
    %v2091 = vpop.f32.mrf.mxu0
    %v2092 = vadd.f32 %v2043, %v2091
    %v2093 = vpop.f32.mrf.mxu0
    %v2094 = vpop.f32.mrf.mxu0
    %v2095 = vadd.f32 %v2046, %v2094
    %v2096 = vpop.f32.mrf.mxu0
    %2097 = vmatprep.mubr.bf16.mxu0 0
    %2098 = vmatmul.mubr.bf16.gmra.mxu0 %v1863
    %v2099 = vpop.f32.mrf.mxu0
    %v2100 = vadd.f32 %v2051, %v2099
    %v2101 = vpop.f32.mrf.mxu0
    %v2102 = vpop.f32.mrf.mxu0
    %v2103 = vadd.f32 %v2054, %v2102
    %v2104 = vpop.f32.mrf.mxu0
    %2105 = vdwg.mxu0
    %v2106 = vadd.f32 %v1541, %v2092
    %v2107 = vadd.f32 %v1542, %v2095
    %v2108 = vadd.f32 %v1543, %v2100
    %v2109 = vadd.f32 %v1544, %v2103
    %v2110 = vld [vmem:[#allocation2 + $0x420] sm:$0x1]
    %v2111 = vunpack.c.l.bf16 %v2110
    %v2112 = vlaneseq
    %v2113 = vshrl.u32 %v2112, 7
    %v2114 = vsub.s32 0, %v2113
    %v2115 = vrot.slane %v2111, %v2114
    %v2116 = vadd.f32 %v2106, %v2115
    %v2117 = vadd.f32 %v2107, %v2115
    %v2118 = vadd.f32 %v2108, %v2115
    %v2119 = vadd.f32 %v2109, %v2115
    %v2120 = vmax.f32 %v2116, 0.0
    %v2121 = vmax.f32 %v2117, 0.0
    %v2122 = vmax.f32 %v2118, 0.0
    %v2123 = vmax.f32 %v2119, 0.0
    %v2124 = vld [vmem:[#allocation2 + $0x428] sm:$0xf]
    %v2125 = vld [vmem:[#allocation2 + $0x42c] sm:$0xf]
    %v2126 = vld [vmem:[#allocation2 + $0x430] sm:$0xf]
    %v2127 = vld [vmem:[#allocation2 + $0x434] sm:$0xf]
    %v2128 = vld [vmem:[#allocation2 + $0x438] sm:$0xf]
    %v2129 = vld [vmem:[#allocation2 + $0x43c] sm:$0xf]
    %v2130 = vld [vmem:[#allocation2 + $0x440] sm:$0xf]
    %v2131 = vld [vmem:[#allocation2 + $0x444] sm:$0xf]
    %v2132 = vpack.c.bf16 %v2121, %v2120
    %v2133 = vpack.c.bf16 %v2123, %v2122
    %v2142 = vunpack.c.l.b16 %v2124
    %v2143 = vunpack.c.l.b16 %v2125
    %v2144 = vunpack.c.l.b16 %v2126
    %v2145 = vunpack.c.l.b16 %v2127
    %v2146 = vunpack.c.l.b16 %v2128
    %v2147 = vunpack.c.l.b16 %v2129
    %v2148 = vunpack.c.l.b16 %v2130
    %v2149 = vunpack.c.l.b16 %v2131
    %v2150 = vpack.c.b16 %v2143, %v2142
    %v2151 = vpack.c.b16 %v2145, %v2144
    %v2152 = vpack.c.b16 %v2147, %v2146
    %v2153 = vpack.c.b16 %v2149, %v2148
    %v2159 = vsel %vm60, %v2132, 0
    %v2162 = vsel %vm60, %v2133, 0
    %2164 = vmatprep.subr.bf16.mxu0 0
    %2165 = vmatpush1.bf16.msra.mxu0 0
    %2166 = vmatprep.subr.bf16.mxu0 0
    %2167 = vmatpush1.bf16.msra.mxu0 0
    %2168 = vmatprep.subr.bf16.mxu0 0
    %2169 = vmatpush1.bf16.msra.mxu0 0
    %2170 = vmatprep.subr.bf16.mxu0 0
    %2171 = vmatpush1.bf16.msra.mxu0 0
    %2172 = vmatprep.subr.bf16.mxu0 0
    %2173 = vmatpush1.bf16.msra.mxu0 %v2153
    %2174 = vmatprep.subr.bf16.mxu0 0
    %2175 = vmatpush1.bf16.msra.mxu0 %v2152
    %2176 = vmatprep.subr.bf16.mxu0 0
    %2177 = vmatpush1.bf16.msra.mxu0 %v2151
    %2178 = vmatprep.subr.bf16.mxu0 0
    %2179 = vmatpush1.bf16.msra.mxu0 %v2150
    %2180 = vmatprep.subr.bf16.mxu0 0
    %2181 = vmatpush2.bf16.msra.mxu0 0
    %2182 = vmatprep.subr.bf16.mxu0 0
    %2183 = vmatpush2.bf16.msra.mxu0 0
    %2184 = vmatprep.subr.bf16.mxu0 0
    %2185 = vmatpush2.bf16.msra.mxu0 0
    %2186 = vmatprep.subr.bf16.mxu0 0
    %2187 = vmatpush2.bf16.msra.mxu0 0
    %2188 = vmatprep.subr.bf16.mxu0 0
    %2189 = vmatpush2.bf16.msra.mxu0 0
    %2190 = vmatprep.subr.bf16.mxu0 0
    %2191 = vmatpush2.bf16.msra.mxu0 0
    %2192 = vmatprep.subr.bf16.mxu0 0
    %2193 = vmatpush2.bf16.msra.mxu0 0
    %2194 = vmatprep.subr.bf16.mxu0 0
    %2195 = vmatpush2.bf16.msra.mxu0 0
    %2196 = vmatprep.mubr.bf16.mxu0 0
    %2197 = vmatmul.mubr.bf16.gmra.mxu0 %v2159
    %v2198 = vpop.f32.mrf.mxu0
    %v2199 = vadd.f32 0.0, %v2198
    %v2200 = vpop.f32.mrf.mxu0
    %v2201 = vpop.f32.mrf.mxu0
    %v2202 = vadd.f32 0.0, %v2201
    %v2203 = vpop.f32.mrf.mxu0
    %2204 = vmatprep.mubr.bf16.mxu0 0
    %2205 = vmatmul.mubr.bf16.gmra.mxu0 %v2162
    %v2206 = vpop.f32.mrf.mxu0
    %v2207 = vadd.f32 0.0, %v2206
    %v2208 = vpop.f32.mrf.mxu0
    %v2209 = vpop.f32.mrf.mxu0
    %v2210 = vadd.f32 0.0, %v2209
    %v2211 = vpop.f32.mrf.mxu0
    %2212 = vdwg.mxu0
    %v2213 = vld [vmem:[#allocation2 + $0x448] sm:$0xf]
    %v2214 = vld [vmem:[#allocation2 + $0x44c] sm:$0xf]
    %v2215 = vld [vmem:[#allocation2 + $0x450] sm:$0xf]
    %v2216 = vld [vmem:[#allocation2 + $0x454] sm:$0xf]
    %v2217 = vld [vmem:[#allocation2 + $0x458] sm:$0xf]
    %v2218 = vld [vmem:[#allocation2 + $0x45c] sm:$0xf]
    %v2219 = vld [vmem:[#allocation2 + $0x460] sm:$0xf]
    %v2220 = vld [vmem:[#allocation2 + $0x464] sm:$0xf]
    %v2229 = vunpack.c.l.b16 %v2213
    %v2230 = vunpack.c.l.b16 %v2214
    %v2231 = vunpack.c.l.b16 %v2215
    %v2232 = vunpack.c.l.b16 %v2216
    %v2233 = vunpack.c.l.b16 %v2217
    %v2234 = vunpack.c.l.b16 %v2218
    %v2235 = vunpack.c.l.b16 %v2219
    %v2236 = vunpack.c.l.b16 %v2220
    %v2237 = vpack.c.b16 %v2230, %v2229
    %v2238 = vpack.c.b16 %v2232, %v2231
    %v2239 = vpack.c.b16 %v2234, %v2233
    %v2240 = vpack.c.b16 %v2236, %v2235
    %vm2241 = vcmask 261120
    %v2243 = vsel %vm2241, %v2237, 0
    %v2246 = vsel %vm2241, %v2238, 0
    %v2249 = vsel %vm2241, %v2239, 0
    %v2252 = vsel %vm2241, %v2240, 0
    %2254 = vmatprep.subr.mxu0 0.0
    %2255 = vmatpush1.msra.mxu0 0.0
    %2256 = vmatprep.subr.mxu0 0.0
    %2257 = vmatpush1.msra.mxu0 0.0
    %2258 = vmatprep.subr.mxu0 0.0
    %2259 = vmatpush1.msra.mxu0 0.0
    %2260 = vmatprep.subr.mxu0 0.0
    %2261 = vmatpush1.msra.mxu0 0.0
    %2262 = vmatprep.subr.mxu0 0.0
    %2263 = vmatpush1.msra.mxu0 0.0
    %2264 = vmatprep.subr.mxu0 0.0
    %2265 = vmatpush1.msra.mxu0 0.0
    %2266 = vmatprep.subr.mxu0 0.0
    %2267 = vmatpush1.msra.mxu0 0.0
    %2268 = vmatprep.subr.mxu0 0.0
    %2269 = vmatpush1.msra.mxu0 0.0
    %2270 = vmatprep.subr.mxu0 0.0
    %2271 = vmatpush1.msra.mxu0 0.0
    %2272 = vmatprep.subr.mxu0 0.0
    %2273 = vmatpush1.msra.mxu0 0.0
    %2274 = vmatprep.subr.mxu0 0.0
    %2275 = vmatpush1.msra.mxu0 0.0
    %2276 = vmatprep.subr.mxu0 0.0
    %2277 = vmatpush1.msra.mxu0 0.0
    %2278 = vmatprep.subr.mxu0 0.0
    %2279 = vmatpush1.msra.mxu0 %v2210
    %2280 = vmatprep.subr.mxu0 0.0
    %2281 = vmatpush1.msra.mxu0 %v2207
    %2282 = vmatprep.subr.mxu0 0.0
    %2283 = vmatpush1.msra.mxu0 %v2202
    %2284 = vmatprep.subr.mxu0 0.0
    %2285 = vmatpush1.msra.mxu0 %v2199
    %2286 = vmatprep.subr.mxu0 0.0
    %2287 = vmatpush2.msra.mxu0 0.0
    %2288 = vmatprep.subr.mxu0 0.0
    %2289 = vmatpush2.msra.mxu0 0.0
    %2290 = vmatprep.subr.mxu0 0.0
    %2291 = vmatpush2.msra.mxu0 0.0
    %2292 = vmatprep.subr.mxu0 0.0
    %2293 = vmatpush2.msra.mxu0 0.0
    %2294 = vmatprep.subr.mxu0 0.0
    %2295 = vmatpush2.msra.mxu0 0.0
    %2296 = vmatprep.subr.mxu0 0.0
    %2297 = vmatpush2.msra.mxu0 0.0
    %2298 = vmatprep.subr.mxu0 0.0
    %2299 = vmatpush2.msra.mxu0 0.0
    %2300 = vmatprep.subr.mxu0 0.0
    %2301 = vmatpush2.msra.mxu0 0.0
    %2302 = vmatprep.subr.mxu0 0.0
    %2303 = vmatpush2.msra.mxu0 0.0
    %2304 = vmatprep.subr.mxu0 0.0
    %2305 = vmatpush2.msra.mxu0 0.0
    %2306 = vmatprep.subr.mxu0 0.0
    %2307 = vmatpush2.msra.mxu0 0.0
    %2308 = vmatprep.subr.mxu0 0.0
    %2309 = vmatpush2.msra.mxu0 0.0
    %2310 = vmatprep.subr.mxu0 0.0
    %2311 = vmatpush2.msra.mxu0 0.0
    %2312 = vmatprep.subr.mxu0 0.0
    %2313 = vmatpush2.msra.mxu0 0.0
    %2314 = vmatprep.subr.mxu0 0.0
    %2315 = vmatpush2.msra.mxu0 0.0
    %2316 = vmatprep.subr.mxu0 0.0
    %2317 = vmatpush2.msra.mxu0 0.0
    %2318 = vmatprep.mubr.bf16.mxu0 0
    %2319 = vmatmul.mubr.bf16.gmra.mxu0 %v2243
    %v2320 = vpop.f32.mrf.mxu0
    %v2321 = vadd.f32 0.0, %v2320
    %v2322 = vpop.f32.mrf.mxu0
    %v2323 = vpop.f32.mrf.mxu0
    %v2324 = vadd.f32 0.0, %v2323
    %v2325 = vpop.f32.mrf.mxu0
    %2326 = vmatprep.mubr.bf16.mxu0 0
    %2327 = vmatmul.mubr.bf16.gmra.mxu0 %v2246
    %v2328 = vpop.f32.mrf.mxu0
    %v2329 = vadd.f32 0.0, %v2328
    %v2330 = vpop.f32.mrf.mxu0
    %v2331 = vpop.f32.mrf.mxu0
    %v2332 = vadd.f32 0.0, %v2331
    %v2333 = vpop.f32.mrf.mxu0
    %2334 = vmatprep.mubr.bf16.mxu0 0
    %2335 = vmatmul.mubr.bf16.gmra.mxu0 %v2249
    %v2336 = vpop.f32.mrf.mxu0
    %v2337 = vadd.f32 0.0, %v2336
    %v2338 = vpop.f32.mrf.mxu0
    %v2339 = vpop.f32.mrf.mxu0
    %v2340 = vadd.f32 0.0, %v2339
    %v2341 = vpop.f32.mrf.mxu0
    %2342 = vmatprep.mubr.bf16.mxu0 0
    %2343 = vmatmul.mubr.bf16.gmra.mxu0 %v2252
    %v2344 = vpop.f32.mrf.mxu0
    %v2345 = vadd.f32 0.0, %v2344
    %v2346 = vpop.f32.mrf.mxu0
    %v2347 = vpop.f32.mrf.mxu0
    %v2348 = vadd.f32 0.0, %v2347
    %v2349 = vpop.f32.mrf.mxu0
    %2350 = vdwg.mxu0
    %v2351 = vadd.s32 %v186, 32
    %v2352 = vadd.s32 %v186, 40
    %v2353 = vadd.s32 %v186, 48
    %v2354 = vadd.s32 %v186, 56
    %v2355 = vand.u32 %v2351, 1
    %v2356 = vand.u32 %v2352, 1
    %v2357 = vand.u32 %v2353, 1
    %v2358 = vand.u32 %v2354, 1
    %vm2359 = vcmp.eq.s32.totalorder %v2355, 0
    %vm2360 = vcmp.eq.s32.totalorder %v2356, 0
    %vm2361 = vcmp.eq.s32.totalorder %v2357, 0
    %vm2362 = vcmp.eq.s32.totalorder %v2358, 0
    %2371 = vrot.lane.b32.xlu0 %v2321, 64
    %v2372 = vpop.permute.xlu0 %2371
    %2373 = vrot.lane.b32.xlu0 %v2324, 64
    %v2374 = vpop.permute.xlu0 %2373
    %2375 = vrot.lane.b32.xlu0 %v2329, 64
    %v2376 = vpop.permute.xlu0 %2375
    %2377 = vrot.lane.b32.xlu0 %v2332, 64
    %v2378 = vpop.permute.xlu0 %2377
    %2379 = vrot.lane.b32.xlu0 %v2337, 64
    %v2380 = vpop.permute.xlu0 %2379
    %2381 = vrot.lane.b32.xlu0 %v2340, 64
    %v2382 = vpop.permute.xlu0 %2381
    %2383 = vrot.lane.b32.xlu0 %v2345, 64
    %v2384 = vpop.permute.xlu0 %2383
    %2385 = vrot.lane.b32.xlu0 %v2348, 64
    %v2386 = vpop.permute.xlu0 %2385
    %v2395 = vsel %vm188, %v2321, %v2372
    %v2396 = vsel %vm822, %v2324, %v2374
    %v2397 = vsel %vm1513, %v2329, %v2376
    %v2398 = vsel %vm1514, %v2332, %v2378
    %v2399 = vsel %vm2359, %v2337, %v2380
    %v2400 = vsel %vm2360, %v2340, %v2382
    %v2401 = vsel %vm2361, %v2345, %v2384
    %v2402 = vsel %vm2362, %v2348, %v2386
    %v2403 = vld [vmem:[#allocation2 + $0x468] sm:$0x1]
    %v2404 = vunpack.c.l.bf16 %v2403
    %v2405 = vlaneseq
    %v2406 = vshrl.u32 %v2405, 7
    %v2407 = vsub.s32 0, %v2406
    %v2408 = vrot.slane %v2404, %v2407
    %v2409 = vadd.f32 %v2395, %v2408
    %v2410 = vadd.f32 %v2396, %v2408
    %v2411 = vadd.f32 %v2397, %v2408
    %v2412 = vadd.f32 %v2398, %v2408
    %v2413 = vadd.f32 %v2399, %v2408
    %v2414 = vadd.f32 %v2400, %v2408
    %v2415 = vadd.f32 %v2401, %v2408
    %v2416 = vadd.f32 %v2402, %v2408
    %v2425 = vrot.slane %v2409, 7
    %v2426 = vrot.slane %v2410, 7
    %v2427 = vsel %vm204, %v2425, %v2426
    %v2428 = vrot.slane %v2411, 7
    %v2429 = vsel %vm204, %v2426, %v2428
    %v2430 = vrot.slane %v2412, 7
    %v2431 = vsel %vm204, %v2428, %v2430
    %v2432 = vrot.slane %v2413, 7
    %v2433 = vsel %vm204, %v2430, %v2432
    %v2434 = vrot.slane %v2414, 7
    %v2435 = vsel %vm204, %v2432, %v2434
    %v2436 = vrot.slane %v2415, 7
    %v2437 = vsel %vm204, %v2434, %v2436
    %v2438 = vrot.slane %v2416, 7
    %v2439 = vsel %vm204, %v2436, %v2438
    %v2448 = vsel %vm204, 0.0, %v2425
    %v2449 = vrot.slane %v2409, 1
    %v2450 = vrot.slane %v2410, 1
    %v2451 = vsel %vm208, %v2449, %v2450
    %v2452 = vrot.slane %v2411, 1
    %v2453 = vsel %vm208, %v2450, %v2452
    %v2454 = vrot.slane %v2412, 1
    %v2455 = vsel %vm208, %v2452, %v2454
    %v2456 = vrot.slane %v2413, 1
    %v2457 = vsel %vm208, %v2454, %v2456
    %v2458 = vrot.slane %v2414, 1
    %v2459 = vsel %vm208, %v2456, %v2458
    %v2460 = vrot.slane %v2415, 1
    %v2461 = vsel %vm208, %v2458, %v2460
    %v2462 = vrot.slane %v2416, 1
    %v2463 = vsel %vm208, %v2460, %v2462
    %v2472 = vsel %vm208, %v2462, 0.0
    %v2473 = vand.u32 %v186, 31
    %v2474 = vand.u32 %v820, 31
    %v2475 = vand.u32 %v1509, 31
    %v2476 = vand.u32 %v1510, 31
    %v2477 = vand.u32 %v2351, 31
    %v2478 = vand.u32 %v2352, 31
    %v2479 = vand.u32 %v2353, 31
    %v2480 = vand.u32 %v2354, 31
    %vm2481 = vcmp.eq.s32.totalorder %v2473, 0
    %vm2482 = vcmp.eq.s32.totalorder %v2474, 0
    %vm2483 = vcmp.eq.s32.totalorder %v2475, 0
    %vm2484 = vcmp.eq.s32.totalorder %v2476, 0
    %vm2485 = vcmp.eq.s32.totalorder %v2477, 0
    %vm2486 = vcmp.eq.s32.totalorder %v2478, 0
    %vm2487 = vcmp.eq.s32.totalorder %v2479, 0
    %vm2488 = vcmp.eq.s32.totalorder %v2480, 0
    %v2489 = vsel %vm2481, 0.0, %v2448
    %v2490 = vsel %vm2482, 0.0, %v2427
    %v2491 = vsel %vm2483, 0.0, %v2429
    %v2492 = vsel %vm2484, 0.0, %v2431
    %v2493 = vsel %vm2485, 0.0, %v2433
    %v2494 = vsel %vm2486, 0.0, %v2435
    %v2495 = vsel %vm2487, 0.0, %v2437
    %v2496 = vsel %vm2488, 0.0, %v2439
    %vm2497 = vcmp.eq.s32.totalorder %v2473, 31
    %vm2498 = vcmp.eq.s32.totalorder %v2474, 31
    %vm2499 = vcmp.eq.s32.totalorder %v2475, 31
    %vm2500 = vcmp.eq.s32.totalorder %v2476, 31
    %vm2501 = vcmp.eq.s32.totalorder %v2477, 31
    %vm2502 = vcmp.eq.s32.totalorder %v2478, 31
    %vm2503 = vcmp.eq.s32.totalorder %v2479, 31
    %vm2504 = vcmp.eq.s32.totalorder %v2480, 31
    %v2505 = vsel %vm2497, 0.0, %v2451
    %v2506 = vsel %vm2498, 0.0, %v2453
    %v2507 = vsel %vm2499, 0.0, %v2455
    %v2508 = vsel %vm2500, 0.0, %v2457
    %v2509 = vsel %vm2501, 0.0, %v2459
    %v2510 = vsel %vm2502, 0.0, %v2461
    %v2511 = vsel %vm2503, 0.0, %v2463
    %v2512 = vsel %vm2504, 0.0, %v2472
    %2513 = vrot.lane.b32.xlu0 %v2409, 64
    %v2514 = vpop.permute.xlu0 %2513
    %2515 = vrot.lane.b32.xlu0 %v2410, 64
    %v2516 = vpop.permute.xlu0 %2515
    %2517 = vrot.lane.b32.xlu0 %v2411, 64
    %v2518 = vpop.permute.xlu0 %2517
    %2519 = vrot.lane.b32.xlu0 %v2412, 64
    %v2520 = vpop.permute.xlu0 %2519
    %2521 = vrot.lane.b32.xlu0 %v2413, 64
    %v2522 = vpop.permute.xlu0 %2521
    %2523 = vrot.lane.b32.xlu0 %v2414, 64
    %v2524 = vpop.permute.xlu0 %2523
    %2525 = vrot.lane.b32.xlu0 %v2415, 64
    %v2526 = vpop.permute.xlu0 %2525
    %2527 = vrot.lane.b32.xlu0 %v2416, 64
    %v2528 = vpop.permute.xlu0 %2527
    %v2537 = vsel %vm60, %v2489, %v2514
    %v2538 = vsel %vm60, %v2490, %v2516
    %v2539 = vsel %vm60, %v2491, %v2518
    %v2540 = vsel %vm60, %v2492, %v2520
    %v2541 = vsel %vm60, %v2493, %v2522
    %v2542 = vsel %vm60, %v2494, %v2524
    %v2543 = vsel %vm60, %v2495, %v2526
    %v2544 = vsel %vm60, %v2496, %v2528
    %v2545 = vld [vmem:[#allocation2 + $0x470] sm:$0xf]
    %v2546 = vld [vmem:[#allocation2 + $0x474] sm:$0xf]
    %v2547 = vld [vmem:[#allocation2 + $0x478] sm:$0xf]
    %v2548 = vld [vmem:[#allocation2 + $0x47c] sm:$0xf]
    %v2549 = vld [vmem:[#allocation2 + $0x480] sm:$0xf]
    %v2550 = vld [vmem:[#allocation2 + $0x484] sm:$0xf]
    %v2551 = vld [vmem:[#allocation2 + $0x488] sm:$0xf]
    %v2552 = vld [vmem:[#allocation2 + $0x48c] sm:$0xf]
    %v2553 = vld [vmem:[#allocation2 + $0x490] sm:$0xf]
    %v2554 = vld [vmem:[#allocation2 + $0x494] sm:$0xf]
    %v2555 = vld [vmem:[#allocation2 + $0x498] sm:$0xf]
    %v2556 = vld [vmem:[#allocation2 + $0x49c] sm:$0xf]
    %v2557 = vld [vmem:[#allocation2 + $0x4a0] sm:$0xf]
    %v2558 = vld [vmem:[#allocation2 + $0x4a4] sm:$0xf]
    %v2559 = vld [vmem:[#allocation2 + $0x4a8] sm:$0xf]
    %v2560 = vld [vmem:[#allocation2 + $0x4ac] sm:$0xf]
    %v2561 = vld [vmem:[#allocation2 + $0x4b0] sm:$0xf]
    %v2562 = vld [vmem:[#allocation2 + $0x4b4] sm:$0xf]
    %v2563 = vld [vmem:[#allocation2 + $0x4b8] sm:$0xf]
    %v2564 = vld [vmem:[#allocation2 + $0x4bc] sm:$0xf]
    %v2565 = vld [vmem:[#allocation2 + $0x4c0] sm:$0xf]
    %v2566 = vld [vmem:[#allocation2 + $0x4c4] sm:$0xf]
    %v2567 = vld [vmem:[#allocation2 + $0x4c8] sm:$0xf]
    %v2568 = vld [vmem:[#allocation2 + $0x4cc] sm:$0xf]
    %v2569 = vpack.c.bf16 %v2538, %v2537
    %v2570 = vpack.c.bf16 %v2506, %v2505
    %v2571 = vpack.c.bf16 %v2540, %v2539
    %v2572 = vpack.c.bf16 %v2508, %v2507
    %v2573 = vpack.c.bf16 %v2542, %v2541
    %v2574 = vpack.c.bf16 %v2510, %v2509
    %v2575 = vpack.c.bf16 %v2544, %v2543
    %v2576 = vpack.c.bf16 %v2512, %v2511
    %v2577 = vld [vmem:[#allocation2 + $0x4d0] sm:$0x1]
    %v2578 = vunpack.c.l.bf16 %v2577
    %v2579 = vlaneseq
    %v2580 = vshrl.u32 %v2579, 7
    %v2581 = vsub.s32 0, %v2580
    %v2582 = vrot.slane %v2578, %v2581
    %v2607 = vunpack.c.l.b16 %v2545
    %v2608 = vunpack.c.l.b16 %v2546
    %v2609 = vunpack.c.l.b16 %v2547
    %v2610 = vunpack.c.l.b16 %v2548
    %v2611 = vunpack.c.l.b16 %v2549
    %v2612 = vunpack.c.l.b16 %v2550
    %v2613 = vunpack.c.l.b16 %v2551
    %v2614 = vunpack.c.l.b16 %v2552
    %v2615 = vunpack.c.l.b16 %v2553
    %v2616 = vunpack.c.l.b16 %v2554
    %v2617 = vunpack.c.l.b16 %v2555
    %v2618 = vunpack.c.l.b16 %v2556
    %v2619 = vunpack.c.l.b16 %v2557
    %v2620 = vunpack.c.l.b16 %v2558
    %v2621 = vunpack.c.l.b16 %v2559
    %v2622 = vunpack.c.l.b16 %v2560
    %v2623 = vunpack.c.l.b16 %v2561
    %v2624 = vunpack.c.l.b16 %v2562
    %v2625 = vunpack.c.l.b16 %v2563
    %v2626 = vunpack.c.l.b16 %v2564
    %v2627 = vunpack.c.l.b16 %v2565
    %v2628 = vunpack.c.l.b16 %v2566
    %v2629 = vunpack.c.l.b16 %v2567
    %v2630 = vunpack.c.l.b16 %v2568
    %v2631 = vpack.c.b16 %v2608, %v2607
    %v2632 = vpack.c.b16 %v2610, %v2609
    %v2633 = vpack.c.b16 %v2612, %v2611
    %v2634 = vpack.c.b16 %v2614, %v2613
    %v2635 = vpack.c.b16 %v2616, %v2615
    %v2636 = vpack.c.b16 %v2618, %v2617
    %v2637 = vpack.c.b16 %v2620, %v2619
    %v2638 = vpack.c.b16 %v2622, %v2621
    %v2639 = vpack.c.b16 %v2624, %v2623
    %v2640 = vpack.c.b16 %v2626, %v2625
    %v2641 = vpack.c.b16 %v2628, %v2627
    %v2642 = vpack.c.b16 %v2630, %v2629
    %v2656 = vsel %vm60, %v2570, 0
    %v2659 = vsel %vm60, %v2572, 0
    %v2662 = vsel %vm60, %v2574, 0
    %v2665 = vsel %vm60, %v2576, 0
    %2667 = vmatprep.subr.bf16.mxu0 0
    %2668 = vmatpush1.bf16.msra.mxu0 %v2638
    %2669 = vmatprep.subr.bf16.mxu0 0
    %2670 = vmatpush1.bf16.msra.mxu0 %v2637
    %2671 = vmatprep.subr.bf16.mxu0 0
    %2672 = vmatpush1.bf16.msra.mxu0 %v2636
    %2673 = vmatprep.subr.bf16.mxu0 0
    %2674 = vmatpush1.bf16.msra.mxu0 %v2635
    %2675 = vmatprep.subr.bf16.mxu0 0
    %2676 = vmatpush1.bf16.msra.mxu0 %v2634
    %2677 = vmatprep.subr.bf16.mxu0 0
    %2678 = vmatpush1.bf16.msra.mxu0 %v2633
    %2679 = vmatprep.subr.bf16.mxu0 0
    %2680 = vmatpush1.bf16.msra.mxu0 %v2632
    %2681 = vmatprep.subr.bf16.mxu0 0
    %2682 = vmatpush1.bf16.msra.mxu0 %v2631
    %2683 = vmatprep.subr.bf16.mxu0 0
    %2684 = vmatpush2.bf16.msra.mxu0 0
    %2685 = vmatprep.subr.bf16.mxu0 0
    %2686 = vmatpush2.bf16.msra.mxu0 0
    %2687 = vmatprep.subr.bf16.mxu0 0
    %2688 = vmatpush2.bf16.msra.mxu0 0
    %2689 = vmatprep.subr.bf16.mxu0 0
    %2690 = vmatpush2.bf16.msra.mxu0 0
    %2691 = vmatprep.subr.bf16.mxu0 0
    %2692 = vmatpush2.bf16.msra.mxu0 %v2642
    %2693 = vmatprep.subr.bf16.mxu0 0
    %2694 = vmatpush2.bf16.msra.mxu0 %v2641
    %2695 = vmatprep.subr.bf16.mxu0 0
    %2696 = vmatpush2.bf16.msra.mxu0 %v2640
    %2697 = vmatprep.subr.bf16.mxu0 0
    %2698 = vmatpush2.bf16.msra.mxu0 %v2639
    %2699 = vmatprep.mubr.bf16.mxu0 %v2656
    %2700 = vmatmul.mubr.bf16.gmra.mxu0 %v2569
    %v2701 = vpop.f32.mrf.mxu0
    %v2702 = vadd.f32 %v2582, %v2701
    %v2703 = vpop.f32.mrf.mxu0
    %v2704 = vpop.f32.mrf.mxu0
    %v2705 = vadd.f32 %v2582, %v2704
    %v2706 = vpop.f32.mrf.mxu0
    %2707 = vmatprep.mubr.bf16.mxu0 %v2659
    %2708 = vmatmul.mubr.bf16.gmra.mxu0 %v2571
    %v2709 = vpop.f32.mrf.mxu0
    %v2710 = vadd.f32 %v2582, %v2709
    %v2711 = vpop.f32.mrf.mxu0
    %v2712 = vpop.f32.mrf.mxu0
    %v2713 = vadd.f32 %v2582, %v2712
    %v2714 = vpop.f32.mrf.mxu0
    %2715 = vmatprep.mubr.bf16.mxu0 %v2662
    %2716 = vmatmul.mubr.bf16.gmra.mxu0 %v2573
    %v2717 = vpop.f32.mrf.mxu0
    %v2718 = vadd.f32 %v2582, %v2717
    %v2719 = vpop.f32.mrf.mxu0
    %v2720 = vpop.f32.mrf.mxu0
    %v2721 = vadd.f32 %v2582, %v2720
    %v2722 = vpop.f32.mrf.mxu0
    %2723 = vmatprep.mubr.bf16.mxu0 %v2665
    %2724 = vmatmul.mubr.bf16.gmra.mxu0 %v2575
    %v2725 = vpop.f32.mrf.mxu0
    %v2726 = vadd.f32 %v2582, %v2725
    %v2727 = vpop.f32.mrf.mxu0
    %v2728 = vpop.f32.mrf.mxu0
    %v2729 = vadd.f32 %v2582, %v2728
    %v2730 = vpop.f32.mrf.mxu0
    %2731 = vdwg.mxu0
    %v2732 = vmax.f32 %v2702, 0.0
    %v2733 = vmax.f32 %v2705, 0.0
    %v2734 = vmax.f32 %v2710, 0.0
    %v2735 = vmax.f32 %v2713, 0.0
    %v2736 = vmax.f32 %v2718, 0.0
    %v2737 = vmax.f32 %v2721, 0.0
    %v2738 = vmax.f32 %v2726, 0.0
    %v2739 = vmax.f32 %v2729, 0.0
    %v2748 = vrot.slane %v2732, 7
    %v2749 = vrot.slane %v2733, 7
    %v2750 = vsel %vm204, %v2748, %v2749
    %v2751 = vrot.slane %v2734, 7
    %v2752 = vsel %vm204, %v2749, %v2751
    %v2753 = vrot.slane %v2735, 7
    %v2754 = vsel %vm204, %v2751, %v2753
    %v2755 = vrot.slane %v2736, 7
    %v2756 = vsel %vm204, %v2753, %v2755
    %v2757 = vrot.slane %v2737, 7
    %v2758 = vsel %vm204, %v2755, %v2757
    %v2759 = vrot.slane %v2738, 7
    %v2760 = vsel %vm204, %v2757, %v2759
    %v2761 = vrot.slane %v2739, 7
    %v2762 = vsel %vm204, %v2759, %v2761
    %v2771 = vsel %vm204, 0.0, %v2748
    %v2772 = vrot.slane %v2732, 1
    %v2773 = vrot.slane %v2733, 1
    %v2774 = vsel %vm208, %v2772, %v2773
    %v2775 = vrot.slane %v2734, 1
    %v2776 = vsel %vm208, %v2773, %v2775
    %v2777 = vrot.slane %v2735, 1
    %v2778 = vsel %vm208, %v2775, %v2777
    %v2779 = vrot.slane %v2736, 1
    %v2780 = vsel %vm208, %v2777, %v2779
    %v2781 = vrot.slane %v2737, 1
    %v2782 = vsel %vm208, %v2779, %v2781
    %v2783 = vrot.slane %v2738, 1
    %v2784 = vsel %vm208, %v2781, %v2783
    %v2785 = vrot.slane %v2739, 1
    %v2786 = vsel %vm208, %v2783, %v2785
    %v2795 = vsel %vm208, %v2785, 0.0
    %v2796 = vsel %vm2481, 0.0, %v2771
    %v2797 = vsel %vm2482, 0.0, %v2750
    %v2798 = vsel %vm2483, 0.0, %v2752
    %v2799 = vsel %vm2484, 0.0, %v2754
    %v2800 = vsel %vm2485, 0.0, %v2756
    %v2801 = vsel %vm2486, 0.0, %v2758
    %v2802 = vsel %vm2487, 0.0, %v2760
    %v2803 = vsel %vm2488, 0.0, %v2762
    %v2804 = vsel %vm2497, 0.0, %v2774
    %v2805 = vsel %vm2498, 0.0, %v2776
    %v2806 = vsel %vm2499, 0.0, %v2778
    %v2807 = vsel %vm2500, 0.0, %v2780
    %v2808 = vsel %vm2501, 0.0, %v2782
    %v2809 = vsel %vm2502, 0.0, %v2784
    %v2810 = vsel %vm2503, 0.0, %v2786
    %v2811 = vsel %vm2504, 0.0, %v2795
    %v2812 = vld [vmem:[#allocation2 + $0x4d8] sm:$0xf]
    %v2813 = vld [vmem:[#allocation2 + $0x4dc] sm:$0xf]
    %v2814 = vld [vmem:[#allocation2 + $0x4e0] sm:$0xf]
    %v2815 = vld [vmem:[#allocation2 + $0x4e4] sm:$0xf]
    %v2816 = vld [vmem:[#allocation2 + $0x4e8] sm:$0xf]
    %v2817 = vld [vmem:[#allocation2 + $0x4ec] sm:$0xf]
    %v2818 = vld [vmem:[#allocation2 + $0x4f0] sm:$0xf]
    %v2819 = vld [vmem:[#allocation2 + $0x4f4] sm:$0xf]
    %v2820 = vld [vmem:[#allocation2 + $0x4f8] sm:$0xf]
    %v2821 = vld [vmem:[#allocation2 + $0x4fc] sm:$0xf]
    %v2822 = vld [vmem:[#allocation2 + $0x500] sm:$0xf]
    %v2823 = vld [vmem:[#allocation2 + $0x504] sm:$0xf]
    %v2824 = vld [vmem:[#allocation2 + $0x508] sm:$0xf]
    %v2825 = vld [vmem:[#allocation2 + $0x50c] sm:$0xf]
    %v2826 = vld [vmem:[#allocation2 + $0x510] sm:$0xf]
    %v2827 = vld [vmem:[#allocation2 + $0x514] sm:$0xf]
    %v2828 = vld [vmem:[#allocation2 + $0x518] sm:$0xf]
    %v2829 = vld [vmem:[#allocation2 + $0x51c] sm:$0xf]
    %v2830 = vld [vmem:[#allocation2 + $0x520] sm:$0xf]
    %v2831 = vld [vmem:[#allocation2 + $0x524] sm:$0xf]
    %v2832 = vld [vmem:[#allocation2 + $0x528] sm:$0xf]
    %v2833 = vld [vmem:[#allocation2 + $0x52c] sm:$0xf]
    %v2834 = vld [vmem:[#allocation2 + $0x530] sm:$0xf]
    %v2835 = vld [vmem:[#allocation2 + $0x534] sm:$0xf]
    %v2836 = vld [vmem:[#allocation2 + $0x538] sm:$0xf]
    %v2837 = vld [vmem:[#allocation2 + $0x53c] sm:$0xf]
    %v2838 = vld [vmem:[#allocation2 + $0x540] sm:$0xf]
    %v2839 = vld [vmem:[#allocation2 + $0x544] sm:$0xf]
    %v2840 = vld [vmem:[#allocation2 + $0x548] sm:$0xf]
    %v2841 = vld [vmem:[#allocation2 + $0x54c] sm:$0xf]
    %v2842 = vld [vmem:[#allocation2 + $0x550] sm:$0xf]
    %v2843 = vld [vmem:[#allocation2 + $0x554] sm:$0xf]
    %v2844 = vld [vmem:[#allocation2 + $0x558] sm:$0xf]
    %v2845 = vld [vmem:[#allocation2 + $0x55c] sm:$0xf]
    %v2846 = vld [vmem:[#allocation2 + $0x560] sm:$0xf]
    %v2847 = vld [vmem:[#allocation2 + $0x564] sm:$0xf]
    %v2848 = vld [vmem:[#allocation2 + $0x568] sm:$0xf]
    %v2849 = vld [vmem:[#allocation2 + $0x56c] sm:$0xf]
    %v2850 = vld [vmem:[#allocation2 + $0x570] sm:$0xf]
    %v2851 = vld [vmem:[#allocation2 + $0x574] sm:$0xf]
    %v2852 = vld [vmem:[#allocation2 + $0x578] sm:$0xf]
    %v2853 = vld [vmem:[#allocation2 + $0x57c] sm:$0xf]
    %v2854 = vld [vmem:[#allocation2 + $0x580] sm:$0xf]
    %v2855 = vld [vmem:[#allocation2 + $0x584] sm:$0xf]
    %v2856 = vld [vmem:[#allocation2 + $0x588] sm:$0xf]
    %v2857 = vld [vmem:[#allocation2 + $0x58c] sm:$0xf]
    %v2858 = vld [vmem:[#allocation2 + $0x590] sm:$0xf]
    %v2859 = vld [vmem:[#allocation2 + $0x594] sm:$0xf]
    %v2860 = vpack.c.bf16 %v2797, %v2796
    %v2861 = vpack.c.bf16 %v2733, %v2732
    %v2862 = vpack.c.bf16 %v2805, %v2804
    %v2863 = vpack.c.bf16 %v2799, %v2798
    %v2864 = vpack.c.bf16 %v2735, %v2734
    %v2865 = vpack.c.bf16 %v2807, %v2806
    %v2866 = vpack.c.bf16 %v2801, %v2800
    %v2867 = vpack.c.bf16 %v2737, %v2736
    %v2868 = vpack.c.bf16 %v2809, %v2808
    %v2869 = vpack.c.bf16 %v2803, %v2802
    %v2870 = vpack.c.bf16 %v2739, %v2738
    %v2871 = vpack.c.bf16 %v2811, %v2810
    %v2920 = vunpack.c.l.b16 %v2812
    %v2921 = vunpack.c.l.b16 %v2813
    %v2922 = vunpack.c.l.b16 %v2814
    %v2923 = vunpack.c.l.b16 %v2815
    %v2924 = vunpack.c.l.b16 %v2816
    %v2925 = vunpack.c.l.b16 %v2817
    %v2926 = vunpack.c.l.b16 %v2818
    %v2927 = vunpack.c.l.b16 %v2819
    %v2928 = vunpack.c.l.b16 %v2820
    %v2929 = vunpack.c.l.b16 %v2821
    %v2930 = vunpack.c.l.b16 %v2822
    %v2931 = vunpack.c.l.b16 %v2823
    %v2932 = vunpack.c.l.b16 %v2824
    %v2933 = vunpack.c.l.b16 %v2825
    %v2934 = vunpack.c.l.b16 %v2826
    %v2935 = vunpack.c.l.b16 %v2827
    %v2936 = vunpack.c.l.b16 %v2828
    %v2937 = vunpack.c.l.b16 %v2829
    %v2938 = vunpack.c.l.b16 %v2830
    %v2939 = vunpack.c.l.b16 %v2831
    %v2940 = vunpack.c.l.b16 %v2832
    %v2941 = vunpack.c.l.b16 %v2833
    %v2942 = vunpack.c.l.b16 %v2834
    %v2943 = vunpack.c.l.b16 %v2835
    %v2944 = vunpack.c.l.b16 %v2836
    %v2945 = vunpack.c.l.b16 %v2837
    %v2946 = vunpack.c.l.b16 %v2838
    %v2947 = vunpack.c.l.b16 %v2839
    %v2948 = vunpack.c.l.b16 %v2840
    %v2949 = vunpack.c.l.b16 %v2841
    %v2950 = vunpack.c.l.b16 %v2842
    %v2951 = vunpack.c.l.b16 %v2843
    %v2952 = vunpack.c.l.b16 %v2844
    %v2953 = vunpack.c.l.b16 %v2845
    %v2954 = vunpack.c.l.b16 %v2846
    %v2955 = vunpack.c.l.b16 %v2847
    %v2956 = vunpack.c.l.b16 %v2848
    %v2957 = vunpack.c.l.b16 %v2849
    %v2958 = vunpack.c.l.b16 %v2850
    %v2959 = vunpack.c.l.b16 %v2851
    %v2960 = vunpack.c.l.b16 %v2852
    %v2961 = vunpack.c.l.b16 %v2853
    %v2962 = vunpack.c.l.b16 %v2854
    %v2963 = vunpack.c.l.b16 %v2855
    %v2964 = vunpack.c.l.b16 %v2856
    %v2965 = vunpack.c.l.b16 %v2857
    %v2966 = vunpack.c.l.b16 %v2858
    %v2967 = vunpack.c.l.b16 %v2859
    %v2968 = vpack.c.b16 %v2921, %v2920
    %v2969 = vpack.c.b16 %v2923, %v2922
    %v2970 = vpack.c.b16 %v2925, %v2924
    %v2971 = vpack.c.b16 %v2927, %v2926
    %v2972 = vpack.c.b16 %v2929, %v2928
    %v2973 = vpack.c.b16 %v2931, %v2930
    %v2974 = vpack.c.b16 %v2933, %v2932
    %v2975 = vpack.c.b16 %v2935, %v2934
    %v2976 = vpack.c.b16 %v2937, %v2936
    %v2977 = vpack.c.b16 %v2939, %v2938
    %v2978 = vpack.c.b16 %v2941, %v2940
    %v2979 = vpack.c.b16 %v2943, %v2942
    %v2980 = vpack.c.b16 %v2945, %v2944
    %v2981 = vpack.c.b16 %v2947, %v2946
    %v2982 = vpack.c.b16 %v2949, %v2948
    %v2983 = vpack.c.b16 %v2951, %v2950
    %v2984 = vpack.c.b16 %v2953, %v2952
    %v2985 = vpack.c.b16 %v2955, %v2954
    %v2986 = vpack.c.b16 %v2957, %v2956
    %v2987 = vpack.c.b16 %v2959, %v2958
    %v2988 = vpack.c.b16 %v2961, %v2960
    %v2989 = vpack.c.b16 %v2963, %v2962
    %v2990 = vpack.c.b16 %v2965, %v2964
    %v2991 = vpack.c.b16 %v2967, %v2966
    %3016 = vmatprep.subr.bf16.mxu0 0
    %3017 = vmatpush1.bf16.msra.mxu0 %v2975
    %3018 = vmatprep.subr.bf16.mxu0 0
    %3019 = vmatpush1.bf16.msra.mxu0 %v2974
    %3020 = vmatprep.subr.bf16.mxu0 0
    %3021 = vmatpush1.bf16.msra.mxu0 %v2973
    %3022 = vmatprep.subr.bf16.mxu0 0
    %3023 = vmatpush1.bf16.msra.mxu0 %v2972
    %3024 = vmatprep.subr.bf16.mxu0 0
    %3025 = vmatpush1.bf16.msra.mxu0 %v2971
    %3026 = vmatprep.subr.bf16.mxu0 0
    %3027 = vmatpush1.bf16.msra.mxu0 %v2970
    %3028 = vmatprep.subr.bf16.mxu0 0
    %3029 = vmatpush1.bf16.msra.mxu0 %v2969
    %3030 = vmatprep.subr.bf16.mxu0 0
    %3031 = vmatpush1.bf16.msra.mxu0 %v2968
    %3032 = vmatprep.subr.bf16.mxu0 0
    %3033 = vmatpush2.bf16.msra.mxu0 %v2983
    %3034 = vmatprep.subr.bf16.mxu0 0
    %3035 = vmatpush2.bf16.msra.mxu0 %v2982
    %3036 = vmatprep.subr.bf16.mxu0 0
    %3037 = vmatpush2.bf16.msra.mxu0 %v2981
    %3038 = vmatprep.subr.bf16.mxu0 0
    %3039 = vmatpush2.bf16.msra.mxu0 %v2980
    %3040 = vmatprep.subr.bf16.mxu0 0
    %3041 = vmatpush2.bf16.msra.mxu0 %v2979
    %3042 = vmatprep.subr.bf16.mxu0 0
    %3043 = vmatpush2.bf16.msra.mxu0 %v2978
    %3044 = vmatprep.subr.bf16.mxu0 0
    %3045 = vmatpush2.bf16.msra.mxu0 %v2977
    %3046 = vmatprep.subr.bf16.mxu0 0
    %3047 = vmatpush2.bf16.msra.mxu0 %v2976
    %3048 = vmatprep.mubr.bf16.mxu0 %v2861
    %3049 = vmatmul.mubr.bf16.gmra.mxu0 %v2860
    %v3050 = vpop.f32.mrf.mxu0
    %v3051 = vadd.f32 0.0, %v3050
    %v3052 = vpop.f32.mrf.mxu0
    %v3053 = vpop.f32.mrf.mxu0
    %v3054 = vadd.f32 0.0, %v3053
    %v3055 = vpop.f32.mrf.mxu0
    %3056 = vmatprep.mubr.bf16.mxu0 %v2864
    %3057 = vmatmul.mubr.bf16.gmra.mxu0 %v2863
    %v3058 = vpop.f32.mrf.mxu0
    %v3059 = vadd.f32 0.0, %v3058
    %v3060 = vpop.f32.mrf.mxu0
    %v3061 = vpop.f32.mrf.mxu0
    %v3062 = vadd.f32 0.0, %v3061
    %v3063 = vpop.f32.mrf.mxu0
    %3064 = vmatprep.mubr.bf16.mxu0 %v2867
    %3065 = vmatmul.mubr.bf16.gmra.mxu0 %v2866
    %v3066 = vpop.f32.mrf.mxu0
    %v3067 = vadd.f32 0.0, %v3066
    %v3068 = vpop.f32.mrf.mxu0
    %v3069 = vpop.f32.mrf.mxu0
    %v3070 = vadd.f32 0.0, %v3069
    %v3071 = vpop.f32.mrf.mxu0
    %3072 = vmatprep.mubr.bf16.mxu0 %v2870
    %3073 = vmatmul.mubr.bf16.gmra.mxu0 %v2869
    %v3074 = vpop.f32.mrf.mxu0
    %v3075 = vadd.f32 0.0, %v3074
    %v3076 = vpop.f32.mrf.mxu0
    %v3077 = vpop.f32.mrf.mxu0
    %v3078 = vadd.f32 0.0, %v3077
    %v3079 = vpop.f32.mrf.mxu0
    %3080 = vdwg.mxu0
    %3081 = vmatprep.subr.bf16.mxu0 0
    %3082 = vmatpush1.bf16.msra.mxu0 %v2991
    %3083 = vmatprep.subr.bf16.mxu0 0
    %3084 = vmatpush1.bf16.msra.mxu0 %v2990
    %3085 = vmatprep.subr.bf16.mxu0 0
    %3086 = vmatpush1.bf16.msra.mxu0 %v2989
    %3087 = vmatprep.subr.bf16.mxu0 0
    %3088 = vmatpush1.bf16.msra.mxu0 %v2988
    %3089 = vmatprep.subr.bf16.mxu0 0
    %3090 = vmatpush1.bf16.msra.mxu0 %v2987
    %3091 = vmatprep.subr.bf16.mxu0 0
    %3092 = vmatpush1.bf16.msra.mxu0 %v2986
    %3093 = vmatprep.subr.bf16.mxu0 0
    %3094 = vmatpush1.bf16.msra.mxu0 %v2985
    %3095 = vmatprep.subr.bf16.mxu0 0
    %3096 = vmatpush1.bf16.msra.mxu0 %v2984
    %3097 = vmatprep.subr.bf16.mxu0 0
    %3098 = vmatpush2.bf16.msra.mxu0 0
    %3099 = vmatprep.subr.bf16.mxu0 0
    %3100 = vmatpush2.bf16.msra.mxu0 0
    %3101 = vmatprep.subr.bf16.mxu0 0
    %3102 = vmatpush2.bf16.msra.mxu0 0
    %3103 = vmatprep.subr.bf16.mxu0 0
    %3104 = vmatpush2.bf16.msra.mxu0 0
    %3105 = vmatprep.subr.bf16.mxu0 0
    %3106 = vmatpush2.bf16.msra.mxu0 0
    %3107 = vmatprep.subr.bf16.mxu0 0
    %3108 = vmatpush2.bf16.msra.mxu0 0
    %3109 = vmatprep.subr.bf16.mxu0 0
    %3110 = vmatpush2.bf16.msra.mxu0 0
    %3111 = vmatprep.subr.bf16.mxu0 0
    %3112 = vmatpush2.bf16.msra.mxu0 0
    %3113 = vmatprep.mubr.bf16.mxu0 0
    %3114 = vmatmul.mubr.bf16.gmra.mxu0 %v2862
    %v3115 = vpop.f32.mrf.mxu0
    %v3116 = vadd.f32 %v3051, %v3115
    %v3117 = vpop.f32.mrf.mxu0
    %v3118 = vpop.f32.mrf.mxu0
    %v3119 = vadd.f32 %v3054, %v3118
    %v3120 = vpop.f32.mrf.mxu0
    %3121 = vmatprep.mubr.bf16.mxu0 0
    %3122 = vmatmul.mubr.bf16.gmra.mxu0 %v2865
    %v3123 = vpop.f32.mrf.mxu0
    %v3124 = vadd.f32 %v3059, %v3123
    %v3125 = vpop.f32.mrf.mxu0
    %v3126 = vpop.f32.mrf.mxu0
    %v3127 = vadd.f32 %v3062, %v3126
    %v3128 = vpop.f32.mrf.mxu0
    %3129 = vmatprep.mubr.bf16.mxu0 0
    %3130 = vmatmul.mubr.bf16.gmra.mxu0 %v2868
    %v3131 = vpop.f32.mrf.mxu0
    %v3132 = vadd.f32 %v3067, %v3131
    %v3133 = vpop.f32.mrf.mxu0
    %v3134 = vpop.f32.mrf.mxu0
    %v3135 = vadd.f32 %v3070, %v3134
    %v3136 = vpop.f32.mrf.mxu0
    %3137 = vmatprep.mubr.bf16.mxu0 0
    %3138 = vmatmul.mubr.bf16.gmra.mxu0 %v2871
    %v3139 = vpop.f32.mrf.mxu0
    %v3140 = vadd.f32 %v3075, %v3139
    %v3141 = vpop.f32.mrf.mxu0
    %v3142 = vpop.f32.mrf.mxu0
    %v3143 = vadd.f32 %v3078, %v3142
    %v3144 = vpop.f32.mrf.mxu0
    %3145 = vdwg.mxu0
    %v3146 = vadd.f32 %v2409, %v3116
    %v3147 = vadd.f32 %v2410, %v3119
    %v3148 = vadd.f32 %v2411, %v3124
    %v3149 = vadd.f32 %v2412, %v3127
    %v3150 = vadd.f32 %v2413, %v3132
    %v3151 = vadd.f32 %v2414, %v3135
    %v3152 = vadd.f32 %v2415, %v3140
    %v3153 = vadd.f32 %v2416, %v3143
    %v3154 = vld [vmem:[#allocation2 + $0x598] sm:$0x1]
    %v3155 = vunpack.c.l.bf16 %v3154
    %v3156 = vlaneseq
    %v3157 = vshrl.u32 %v3156, 7
    %v3158 = vsub.s32 0, %v3157
    %v3159 = vrot.slane %v3155, %v3158
    %v3160 = vadd.f32 %v3146, %v3159
    %v3161 = vadd.f32 %v3147, %v3159
    %v3162 = vadd.f32 %v3148, %v3159
    %v3163 = vadd.f32 %v3149, %v3159
    %v3164 = vadd.f32 %v3150, %v3159
    %v3165 = vadd.f32 %v3151, %v3159
    %v3166 = vadd.f32 %v3152, %v3159
    %v3167 = vadd.f32 %v3153, %v3159
    %v3168 = vmax.f32 %v3160, 0.0
    %v3169 = vmax.f32 %v3161, 0.0
    %v3170 = vmax.f32 %v3162, 0.0
    %v3171 = vmax.f32 %v3163, 0.0
    %v3172 = vmax.f32 %v3164, 0.0
    %v3173 = vmax.f32 %v3165, 0.0
    %v3174 = vmax.f32 %v3166, 0.0
    %v3175 = vmax.f32 %v3167, 0.0
    %v3176 = vld [vmem:[#allocation2 + $0x5a0] sm:$0xf]
    %v3177 = vld [vmem:[#allocation2 + $0x5a4] sm:$0xf]
    %v3178 = vld [vmem:[#allocation2 + $0x5a8] sm:$0xf]
    %v3179 = vld [vmem:[#allocation2 + $0x5ac] sm:$0xf]
    %v3180 = vld [vmem:[#allocation2 + $0x5b0] sm:$0xf]
    %v3181 = vld [vmem:[#allocation2 + $0x5b4] sm:$0xf]
    %v3182 = vld [vmem:[#allocation2 + $0x5b8] sm:$0xf]
    %v3183 = vld [vmem:[#allocation2 + $0x5bc] sm:$0xf]
    %v3184 = vpack.c.bf16 %v3169, %v3168
    %v3185 = vpack.c.bf16 %v3171, %v3170
    %v3186 = vpack.c.bf16 %v3173, %v3172
    %v3187 = vpack.c.bf16 %v3175, %v3174
    %v3196 = vunpack.c.l.b16 %v3176
    %v3197 = vunpack.c.l.b16 %v3177
    %v3198 = vunpack.c.l.b16 %v3178
    %v3199 = vunpack.c.l.b16 %v3179
    %v3200 = vunpack.c.l.b16 %v3180
    %v3201 = vunpack.c.l.b16 %v3181
    %v3202 = vunpack.c.l.b16 %v3182
    %v3203 = vunpack.c.l.b16 %v3183
    %v3204 = vpack.c.b16 %v3197, %v3196
    %v3205 = vpack.c.b16 %v3199, %v3198
    %v3206 = vpack.c.b16 %v3201, %v3200
    %v3207 = vpack.c.b16 %v3203, %v3202
    %v3213 = vsel %vm60, %v3184, 0
    %v3216 = vsel %vm60, %v3185, 0
    %v3219 = vsel %vm60, %v3186, 0
    %v3222 = vsel %vm60, %v3187, 0
    %3224 = vmatprep.subr.bf16.mxu0 0
    %3225 = vmatpush1.bf16.msra.mxu0 0
    %3226 = vmatprep.subr.bf16.mxu0 0
    %3227 = vmatpush1.bf16.msra.mxu0 0
    %3228 = vmatprep.subr.bf16.mxu0 0
    %3229 = vmatpush1.bf16.msra.mxu0 0
    %3230 = vmatprep.subr.bf16.mxu0 0
    %3231 = vmatpush1.bf16.msra.mxu0 0
    %3232 = vmatprep.subr.bf16.mxu0 0
    %3233 = vmatpush1.bf16.msra.mxu0 %v3207
    %3234 = vmatprep.subr.bf16.mxu0 0
    %3235 = vmatpush1.bf16.msra.mxu0 %v3206
    %3236 = vmatprep.subr.bf16.mxu0 0
    %3237 = vmatpush1.bf16.msra.mxu0 %v3205
    %3238 = vmatprep.subr.bf16.mxu0 0
    %3239 = vmatpush1.bf16.msra.mxu0 %v3204
    %3240 = vmatprep.subr.bf16.mxu0 0
    %3241 = vmatpush2.bf16.msra.mxu0 0
    %3242 = vmatprep.subr.bf16.mxu0 0
    %3243 = vmatpush2.bf16.msra.mxu0 0
    %3244 = vmatprep.subr.bf16.mxu0 0
    %3245 = vmatpush2.bf16.msra.mxu0 0
    %3246 = vmatprep.subr.bf16.mxu0 0
    %3247 = vmatpush2.bf16.msra.mxu0 0
    %3248 = vmatprep.subr.bf16.mxu0 0
    %3249 = vmatpush2.bf16.msra.mxu0 0
    %3250 = vmatprep.subr.bf16.mxu0 0
    %3251 = vmatpush2.bf16.msra.mxu0 0
    %3252 = vmatprep.subr.bf16.mxu0 0
    %3253 = vmatpush2.bf16.msra.mxu0 0
    %3254 = vmatprep.subr.bf16.mxu0 0
    %3255 = vmatpush2.bf16.msra.mxu0 0
    %3256 = vmatprep.mubr.bf16.mxu0 0
    %3257 = vmatmul.mubr.bf16.gmra.mxu0 %v3213
    %v3258 = vpop.f32.mrf.mxu0
    %v3259 = vadd.f32 0.0, %v3258
    %v3260 = vpop.f32.mrf.mxu0
    %v3261 = vpop.f32.mrf.mxu0
    %v3262 = vadd.f32 0.0, %v3261
    %v3263 = vpop.f32.mrf.mxu0
    %3264 = vmatprep.mubr.bf16.mxu0 0
    %3265 = vmatmul.mubr.bf16.gmra.mxu0 %v3216
    %v3266 = vpop.f32.mrf.mxu0
    %v3267 = vadd.f32 0.0, %v3266
    %v3268 = vpop.f32.mrf.mxu0
    %v3269 = vpop.f32.mrf.mxu0
    %v3270 = vadd.f32 0.0, %v3269
    %v3271 = vpop.f32.mrf.mxu0
    %3272 = vmatprep.mubr.bf16.mxu0 0
    %3273 = vmatmul.mubr.bf16.gmra.mxu0 %v3219
    %v3274 = vpop.f32.mrf.mxu0
    %v3275 = vadd.f32 0.0, %v3274
    %v3276 = vpop.f32.mrf.mxu0
    %v3277 = vpop.f32.mrf.mxu0
    %v3278 = vadd.f32 0.0, %v3277
    %v3279 = vpop.f32.mrf.mxu0
    %3280 = vmatprep.mubr.bf16.mxu0 0
    %3281 = vmatmul.mubr.bf16.gmra.mxu0 %v3222
    %v3282 = vpop.f32.mrf.mxu0
    %v3283 = vadd.f32 0.0, %v3282
    %v3284 = vpop.f32.mrf.mxu0
    %v3285 = vpop.f32.mrf.mxu0
    %v3286 = vadd.f32 0.0, %v3285
    %v3287 = vpop.f32.mrf.mxu0
    %3288 = vdwg.mxu0
    %v3289 = vld [vmem:[#allocation2 + $0x5c0] sm:$0xf]
    %v3290 = vld [vmem:[#allocation2 + $0x5c4] sm:$0xf]
    %v3291 = vld [vmem:[#allocation2 + $0x5c8] sm:$0xf]
    %v3292 = vld [vmem:[#allocation2 + $0x5cc] sm:$0xf]
    %v3293 = vld [vmem:[#allocation2 + $0x5d0] sm:$0xf]
    %v3294 = vld [vmem:[#allocation2 + $0x5d4] sm:$0xf]
    %v3295 = vld [vmem:[#allocation2 + $0x5d8] sm:$0xf]
    %v3296 = vld [vmem:[#allocation2 + $0x5dc] sm:$0xf]
    %v3297 = vld [vmem:[#allocation2 + $0x5e0] sm:$0xf]
    %v3298 = vld [vmem:[#allocation2 + $0x5e4] sm:$0xf]
    %v3299 = vld [vmem:[#allocation2 + $0x5e8] sm:$0xf]
    %v3300 = vld [vmem:[#allocation2 + $0x5ec] sm:$0xf]
    %v3301 = vld [vmem:[#allocation2 + $0x5f0] sm:$0xf]
    %v3302 = vld [vmem:[#allocation2 + $0x5f4] sm:$0xf]
    %v3303 = vld [vmem:[#allocation2 + $0x5f8] sm:$0xf]
    %v3304 = vld [vmem:[#allocation2 + $0x5fc] sm:$0xf]
    %v3321 = vunpack.c.l.b16 %v3289
    %v3322 = vunpack.c.l.b16 %v3290
    %v3323 = vunpack.c.l.b16 %v3291
    %v3324 = vunpack.c.l.b16 %v3292
    %v3325 = vunpack.c.l.b16 %v3293
    %v3326 = vunpack.c.l.b16 %v3294
    %v3327 = vunpack.c.l.b16 %v3295
    %v3328 = vunpack.c.l.b16 %v3296
    %v3329 = vunpack.c.l.b16 %v3297
    %v3330 = vunpack.c.l.b16 %v3298
    %v3331 = vunpack.c.l.b16 %v3299
    %v3332 = vunpack.c.l.b16 %v3300
    %v3333 = vunpack.c.l.b16 %v3301
    %v3334 = vunpack.c.l.b16 %v3302
    %v3335 = vunpack.c.l.b16 %v3303
    %v3336 = vunpack.c.l.b16 %v3304
    %v3337 = vpack.c.b16 %v3322, %v3321
    %v3338 = vpack.c.b16 %v3324, %v3323
    %v3339 = vpack.c.b16 %v3326, %v3325
    %v3340 = vpack.c.b16 %v3328, %v3327
    %v3341 = vpack.c.b16 %v3330, %v3329
    %v3342 = vpack.c.b16 %v3332, %v3331
    %v3343 = vpack.c.b16 %v3334, %v3333
    %v3344 = vpack.c.b16 %v3336, %v3335
    %v3346 = vsel %vm60, %v3337, 0
    %v3349 = vsel %vm60, %v3338, 0
    %v3352 = vsel %vm60, %v3339, 0
    %v3355 = vsel %vm60, %v3340, 0
    %v3358 = vsel %vm60, %v3341, 0
    %v3361 = vsel %vm60, %v3342, 0
    %v3364 = vsel %vm60, %v3343, 0
    %v3367 = vsel %vm60, %v3344, 0
    %3369 = vmatprep.subr.mxu0 0.0
    %3370 = vmatpush1.msra.mxu0 0.0
    %3371 = vmatprep.subr.mxu0 0.0
    %3372 = vmatpush1.msra.mxu0 0.0
    %3373 = vmatprep.subr.mxu0 0.0
    %3374 = vmatpush1.msra.mxu0 0.0
    %3375 = vmatprep.subr.mxu0 0.0
    %3376 = vmatpush1.msra.mxu0 0.0
    %3377 = vmatprep.subr.mxu0 0.0
    %3378 = vmatpush1.msra.mxu0 0.0
    %3379 = vmatprep.subr.mxu0 0.0
    %3380 = vmatpush1.msra.mxu0 0.0
    %3381 = vmatprep.subr.mxu0 0.0
    %3382 = vmatpush1.msra.mxu0 0.0
    %3383 = vmatprep.subr.mxu0 0.0
    %3384 = vmatpush1.msra.mxu0 0.0
    %3385 = vmatprep.subr.mxu0 0.0
    %3386 = vmatpush1.msra.mxu0 %v3286
    %3387 = vmatprep.subr.mxu0 0.0
    %3388 = vmatpush1.msra.mxu0 %v3283
    %3389 = vmatprep.subr.mxu0 0.0
    %3390 = vmatpush1.msra.mxu0 %v3278
    %3391 = vmatprep.subr.mxu0 0.0
    %3392 = vmatpush1.msra.mxu0 %v3275
    %3393 = vmatprep.subr.mxu0 0.0
    %3394 = vmatpush1.msra.mxu0 %v3270
    %3395 = vmatprep.subr.mxu0 0.0
    %3396 = vmatpush1.msra.mxu0 %v3267
    %3397 = vmatprep.subr.mxu0 0.0
    %3398 = vmatpush1.msra.mxu0 %v3262
    %3399 = vmatprep.subr.mxu0 0.0
    %3400 = vmatpush1.msra.mxu0 %v3259
    %3401 = vmatprep.subr.mxu0 0.0
    %3402 = vmatpush2.msra.mxu0 0.0
    %3403 = vmatprep.subr.mxu0 0.0
    %3404 = vmatpush2.msra.mxu0 0.0
    %3405 = vmatprep.subr.mxu0 0.0
    %3406 = vmatpush2.msra.mxu0 0.0
    %3407 = vmatprep.subr.mxu0 0.0
    %3408 = vmatpush2.msra.mxu0 0.0
    %3409 = vmatprep.subr.mxu0 0.0
    %3410 = vmatpush2.msra.mxu0 0.0
    %3411 = vmatprep.subr.mxu0 0.0
    %3412 = vmatpush2.msra.mxu0 0.0
    %3413 = vmatprep.subr.mxu0 0.0
    %3414 = vmatpush2.msra.mxu0 0.0
    %3415 = vmatprep.subr.mxu0 0.0
    %3416 = vmatpush2.msra.mxu0 0.0
    %3417 = vmatprep.subr.mxu0 0.0
    %3418 = vmatpush2.msra.mxu0 0.0
    %3419 = vmatprep.subr.mxu0 0.0
    %3420 = vmatpush2.msra.mxu0 0.0
    %3421 = vmatprep.subr.mxu0 0.0
    %3422 = vmatpush2.msra.mxu0 0.0
    %3423 = vmatprep.subr.mxu0 0.0
    %3424 = vmatpush2.msra.mxu0 0.0
    %3425 = vmatprep.subr.mxu0 0.0
    %3426 = vmatpush2.msra.mxu0 0.0
    %3427 = vmatprep.subr.mxu0 0.0
    %3428 = vmatpush2.msra.mxu0 0.0
    %3429 = vmatprep.subr.mxu0 0.0
    %3430 = vmatpush2.msra.mxu0 0.0
    %3431 = vmatprep.subr.mxu0 0.0
    %3432 = vmatpush2.msra.mxu0 0.0
    %3433 = vmatprep.mubr.bf16.mxu0 0
    %3434 = vmatmul.mubr.bf16.gmra.mxu0 %v3346
    %v3435 = vpop.f32.mrf.mxu0
    %v3436 = vadd.f32 0.0, %v3435
    %v3437 = vpop.f32.mrf.mxu0
    %v3438 = vpop.f32.mrf.mxu0
    %v3439 = vadd.f32 0.0, %v3438
    %v3440 = vpop.f32.mrf.mxu0
    %3441 = vmatprep.mubr.bf16.mxu0 0
    %3442 = vmatmul.mubr.bf16.gmra.mxu0 %v3349
    %v3443 = vpop.f32.mrf.mxu0
    %v3444 = vadd.f32 0.0, %v3443
    %v3445 = vpop.f32.mrf.mxu0
    %v3446 = vpop.f32.mrf.mxu0
    %v3447 = vadd.f32 0.0, %v3446
    %v3448 = vpop.f32.mrf.mxu0
    %3449 = vmatprep.mubr.bf16.mxu0 0
    %3450 = vmatmul.mubr.bf16.gmra.mxu0 %v3352
    %v3451 = vpop.f32.mrf.mxu0
    %v3452 = vadd.f32 0.0, %v3451
    %v3453 = vpop.f32.mrf.mxu0
    %v3454 = vpop.f32.mrf.mxu0
    %v3455 = vadd.f32 0.0, %v3454
    %v3456 = vpop.f32.mrf.mxu0
    %3457 = vmatprep.mubr.bf16.mxu0 0
    %3458 = vmatmul.mubr.bf16.gmra.mxu0 %v3355
    %v3459 = vpop.f32.mrf.mxu0
    %v3460 = vadd.f32 0.0, %v3459
    %v3461 = vpop.f32.mrf.mxu0
    %v3462 = vpop.f32.mrf.mxu0
    %v3463 = vadd.f32 0.0, %v3462
    %v3464 = vpop.f32.mrf.mxu0
    %3465 = vmatprep.mubr.bf16.mxu0 0
    %3466 = vmatmul.mubr.bf16.gmra.mxu0 %v3358
    %v3467 = vpop.f32.mrf.mxu0
    %v3468 = vadd.f32 0.0, %v3467
    %v3469 = vpop.f32.mrf.mxu0
    %v3470 = vpop.f32.mrf.mxu0
    %v3471 = vadd.f32 0.0, %v3470
    %v3472 = vpop.f32.mrf.mxu0
    %3473 = vmatprep.mubr.bf16.mxu0 0
    %3474 = vmatmul.mubr.bf16.gmra.mxu0 %v3361
    %v3475 = vpop.f32.mrf.mxu0
    %v3476 = vadd.f32 0.0, %v3475
    %v3477 = vpop.f32.mrf.mxu0
    %v3478 = vpop.f32.mrf.mxu0
    %v3479 = vadd.f32 0.0, %v3478
    %v3480 = vpop.f32.mrf.mxu0
    %3481 = vmatprep.mubr.bf16.mxu0 0
    %3482 = vmatmul.mubr.bf16.gmra.mxu0 %v3364
    %v3483 = vpop.f32.mrf.mxu0
    %v3484 = vadd.f32 0.0, %v3483
    %v3485 = vpop.f32.mrf.mxu0
    %v3486 = vpop.f32.mrf.mxu0
    %v3487 = vadd.f32 0.0, %v3486
    %v3488 = vpop.f32.mrf.mxu0
    %3489 = vmatprep.mubr.bf16.mxu0 0
    %3490 = vmatmul.mubr.bf16.gmra.mxu0 %v3367
    %v3491 = vpop.f32.mrf.mxu0
    %v3492 = vadd.f32 0.0, %v3491
    %v3493 = vpop.f32.mrf.mxu0
    %v3494 = vpop.f32.mrf.mxu0
    %v3495 = vadd.f32 0.0, %v3494
    %v3496 = vpop.f32.mrf.mxu0
    %3497 = vdwg.mxu0
    %v3498 = vadd.s32 %v186, 64
    %v3499 = vadd.s32 %v186, 72
    %v3500 = vadd.s32 %v186, 80
    %v3501 = vadd.s32 %v186, 88
    %v3502 = vadd.s32 %v186, 96
    %v3503 = vadd.s32 %v186, 104
    %v3504 = vadd.s32 %v186, 112
    %v3505 = vadd.s32 %v186, 120
    %v3506 = vand.u32 %v3498, 1
    %v3507 = vand.u32 %v3499, 1
    %v3508 = vand.u32 %v3500, 1
    %v3509 = vand.u32 %v3501, 1
    %v3510 = vand.u32 %v3502, 1
    %v3511 = vand.u32 %v3503, 1
    %v3512 = vand.u32 %v3504, 1
    %v3513 = vand.u32 %v3505, 1
    %vm3514 = vcmp.eq.s32.totalorder %v3506, 0
    %vm3515 = vcmp.eq.s32.totalorder %v3507, 0
    %vm3516 = vcmp.eq.s32.totalorder %v3508, 0
    %vm3517 = vcmp.eq.s32.totalorder %v3509, 0
    %vm3518 = vcmp.eq.s32.totalorder %v3510, 0
    %vm3519 = vcmp.eq.s32.totalorder %v3511, 0
    %vm3520 = vcmp.eq.s32.totalorder %v3512, 0
    %vm3521 = vcmp.eq.s32.totalorder %v3513, 0
    %3538 = vrot.lane.b32.xlu0 %v3436, 64
    %v3539 = vpop.permute.xlu0 %3538
    %3540 = vrot.lane.b32.xlu0 %v3439, 64
    %v3541 = vpop.permute.xlu0 %3540
    %3542 = vrot.lane.b32.xlu0 %v3444, 64
    %v3543 = vpop.permute.xlu0 %3542
    %3544 = vrot.lane.b32.xlu0 %v3447, 64
    %v3545 = vpop.permute.xlu0 %3544
    %3546 = vrot.lane.b32.xlu0 %v3452, 64
    %v3547 = vpop.permute.xlu0 %3546
    %3548 = vrot.lane.b32.xlu0 %v3455, 64
    %v3549 = vpop.permute.xlu0 %3548
    %3550 = vrot.lane.b32.xlu0 %v3460, 64
    %v3551 = vpop.permute.xlu0 %3550
    %3552 = vrot.lane.b32.xlu0 %v3463, 64
    %v3553 = vpop.permute.xlu0 %3552
    %3554 = vrot.lane.b32.xlu0 %v3468, 64
    %v3555 = vpop.permute.xlu0 %3554
    %3556 = vrot.lane.b32.xlu0 %v3471, 64
    %v3557 = vpop.permute.xlu0 %3556
    %3558 = vrot.lane.b32.xlu0 %v3476, 64
    %v3559 = vpop.permute.xlu0 %3558
    %3560 = vrot.lane.b32.xlu0 %v3479, 64
    %v3561 = vpop.permute.xlu0 %3560
    %3562 = vrot.lane.b32.xlu0 %v3484, 64
    %v3563 = vpop.permute.xlu0 %3562
    %3564 = vrot.lane.b32.xlu0 %v3487, 64
    %v3565 = vpop.permute.xlu0 %3564
    %3566 = vrot.lane.b32.xlu0 %v3492, 64
    %v3567 = vpop.permute.xlu0 %3566
    %3568 = vrot.lane.b32.xlu0 %v3495, 64
    %v3569 = vpop.permute.xlu0 %3568
    %v3586 = vsel %vm188, %v3436, %v3539
    %v3587 = vsel %vm822, %v3439, %v3541
    %v3588 = vsel %vm1513, %v3444, %v3543
    %v3589 = vsel %vm1514, %v3447, %v3545
    %v3590 = vsel %vm2359, %v3452, %v3547
    %v3591 = vsel %vm2360, %v3455, %v3549
    %v3592 = vsel %vm2361, %v3460, %v3551
    %v3593 = vsel %vm2362, %v3463, %v3553
    %v3594 = vsel %vm3514, %v3468, %v3555
    %v3595 = vsel %vm3515, %v3471, %v3557
    %v3596 = vsel %vm3516, %v3476, %v3559
    %v3597 = vsel %vm3517, %v3479, %v3561
    %v3598 = vsel %vm3518, %v3484, %v3563
    %v3599 = vsel %vm3519, %v3487, %v3565
    %v3600 = vsel %vm3520, %v3492, %v3567
    %v3601 = vsel %vm3521, %v3495, %v3569
    %v3602 = vld [vmem:[#allocation2 + $0x600] sm:$0x1]
    %v3603 = vunpack.c.l.bf16 %v3602
    %v3604 = vlaneseq
    %v3605 = vshrl.u32 %v3604, 7
    %v3606 = vsub.s32 0, %v3605
    %v3607 = vrot.slane %v3603, %v3606
    %v3608 = vadd.f32 %v3586, %v3607
    %v3609 = vadd.f32 %v3587, %v3607
    %v3610 = vadd.f32 %v3588, %v3607
    %v3611 = vadd.f32 %v3589, %v3607
    %v3612 = vadd.f32 %v3590, %v3607
    %v3613 = vadd.f32 %v3591, %v3607
    %v3614 = vadd.f32 %v3592, %v3607
    %v3615 = vadd.f32 %v3593, %v3607
    %v3616 = vadd.f32 %v3594, %v3607
    %v3617 = vadd.f32 %v3595, %v3607
    %v3618 = vadd.f32 %v3596, %v3607
    %v3619 = vadd.f32 %v3597, %v3607
    %v3620 = vadd.f32 %v3598, %v3607
    %v3621 = vadd.f32 %v3599, %v3607
    %v3622 = vadd.f32 %v3600, %v3607
    %v3623 = vadd.f32 %v3601, %v3607
    %v3640 = vrot.slane %v3608, 7
    %v3641 = vrot.slane %v3609, 7
    %v3642 = vsel %vm204, %v3640, %v3641
    %v3643 = vrot.slane %v3610, 7
    %v3644 = vsel %vm204, %v3641, %v3643
    %v3645 = vrot.slane %v3611, 7
    %v3646 = vsel %vm204, %v3643, %v3645
    %v3647 = vrot.slane %v3612, 7
    %v3648 = vsel %vm204, %v3645, %v3647
    %v3649 = vrot.slane %v3613, 7
    %v3650 = vsel %vm204, %v3647, %v3649
    %v3651 = vrot.slane %v3614, 7
    %v3652 = vsel %vm204, %v3649, %v3651
    %v3653 = vrot.slane %v3615, 7
    %v3654 = vsel %vm204, %v3651, %v3653
    %v3655 = vrot.slane %v3616, 7
    %v3656 = vsel %vm204, %v3653, %v3655
    %v3657 = vrot.slane %v3617, 7
    %v3658 = vsel %vm204, %v3655, %v3657
    %v3659 = vrot.slane %v3618, 7
    %v3660 = vsel %vm204, %v3657, %v3659
    %v3661 = vrot.slane %v3619, 7
    %v3662 = vsel %vm204, %v3659, %v3661
    %v3663 = vrot.slane %v3620, 7
    %v3664 = vsel %vm204, %v3661, %v3663
    %v3665 = vrot.slane %v3621, 7
    %v3666 = vsel %vm204, %v3663, %v3665
    %v3667 = vrot.slane %v3622, 7
    %v3668 = vsel %vm204, %v3665, %v3667
    %v3669 = vrot.slane %v3623, 7
    %v3670 = vsel %vm204, %v3667, %v3669
    %v3687 = vsel %vm204, 0.0, %v3640
    %v3688 = vrot.slane %v3608, 1
    %v3689 = vrot.slane %v3609, 1
    %v3690 = vsel %vm208, %v3688, %v3689
    %v3691 = vrot.slane %v3610, 1
    %v3692 = vsel %vm208, %v3689, %v3691
    %v3693 = vrot.slane %v3611, 1
    %v3694 = vsel %vm208, %v3691, %v3693
    %v3695 = vrot.slane %v3612, 1
    %v3696 = vsel %vm208, %v3693, %v3695
    %v3697 = vrot.slane %v3613, 1
    %v3698 = vsel %vm208, %v3695, %v3697
    %v3699 = vrot.slane %v3614, 1
    %v3700 = vsel %vm208, %v3697, %v3699
    %v3701 = vrot.slane %v3615, 1
    %v3702 = vsel %vm208, %v3699, %v3701
    %v3703 = vrot.slane %v3616, 1
    %v3704 = vsel %vm208, %v3701, %v3703
    %v3705 = vrot.slane %v3617, 1
    %v3706 = vsel %vm208, %v3703, %v3705
    %v3707 = vrot.slane %v3618, 1
    %v3708 = vsel %vm208, %v3705, %v3707
    %v3709 = vrot.slane %v3619, 1
    %v3710 = vsel %vm208, %v3707, %v3709
    %v3711 = vrot.slane %v3620, 1
    %v3712 = vsel %vm208, %v3709, %v3711
    %v3713 = vrot.slane %v3621, 1
    %v3714 = vsel %vm208, %v3711, %v3713
    %v3715 = vrot.slane %v3622, 1
    %v3716 = vsel %vm208, %v3713, %v3715
    %v3717 = vrot.slane %v3623, 1
    %v3718 = vsel %vm208, %v3715, %v3717
    %v3735 = vsel %vm208, %v3717, 0.0
    %v3736 = vand.u32 %v186, 63
    %v3737 = vand.u32 %v820, 63
    %v3738 = vand.u32 %v1509, 63
    %v3739 = vand.u32 %v1510, 63
    %v3740 = vand.u32 %v2351, 63
    %v3741 = vand.u32 %v2352, 63
    %v3742 = vand.u32 %v2353, 63
    %v3743 = vand.u32 %v2354, 63
    %v3744 = vand.u32 %v3498, 63
    %v3745 = vand.u32 %v3499, 63
    %v3746 = vand.u32 %v3500, 63
    %v3747 = vand.u32 %v3501, 63
    %v3748 = vand.u32 %v3502, 63
    %v3749 = vand.u32 %v3503, 63
    %v3750 = vand.u32 %v3504, 63
    %v3751 = vand.u32 %v3505, 63
    %vm3752 = vcmp.eq.s32.totalorder %v3736, 0
    %vm3753 = vcmp.eq.s32.totalorder %v3737, 0
    %vm3754 = vcmp.eq.s32.totalorder %v3738, 0
    %vm3755 = vcmp.eq.s32.totalorder %v3739, 0
    %vm3756 = vcmp.eq.s32.totalorder %v3740, 0
    %vm3757 = vcmp.eq.s32.totalorder %v3741, 0
    %vm3758 = vcmp.eq.s32.totalorder %v3742, 0
    %vm3759 = vcmp.eq.s32.totalorder %v3743, 0
    %vm3760 = vcmp.eq.s32.totalorder %v3744, 0
    %vm3761 = vcmp.eq.s32.totalorder %v3745, 0
    %vm3762 = vcmp.eq.s32.totalorder %v3746, 0
    %vm3763 = vcmp.eq.s32.totalorder %v3747, 0
    %vm3764 = vcmp.eq.s32.totalorder %v3748, 0
    %vm3765 = vcmp.eq.s32.totalorder %v3749, 0
    %vm3766 = vcmp.eq.s32.totalorder %v3750, 0
    %vm3767 = vcmp.eq.s32.totalorder %v3751, 0
    %v3768 = vsel %vm3752, 0.0, %v3687
    %v3769 = vsel %vm3753, 0.0, %v3642
    %v3770 = vsel %vm3754, 0.0, %v3644
    %v3771 = vsel %vm3755, 0.0, %v3646
    %v3772 = vsel %vm3756, 0.0, %v3648
    %v3773 = vsel %vm3757, 0.0, %v3650
    %v3774 = vsel %vm3758, 0.0, %v3652
    %v3775 = vsel %vm3759, 0.0, %v3654
    %v3776 = vsel %vm3760, 0.0, %v3656
    %v3777 = vsel %vm3761, 0.0, %v3658
    %v3778 = vsel %vm3762, 0.0, %v3660
    %v3779 = vsel %vm3763, 0.0, %v3662
    %v3780 = vsel %vm3764, 0.0, %v3664
    %v3781 = vsel %vm3765, 0.0, %v3666
    %v3782 = vsel %vm3766, 0.0, %v3668
    %v3783 = vsel %vm3767, 0.0, %v3670
    %vm3784 = vcmp.eq.s32.totalorder %v3736, 63
    %vm3785 = vcmp.eq.s32.totalorder %v3737, 63
    %vm3786 = vcmp.eq.s32.totalorder %v3738, 63
    %vm3787 = vcmp.eq.s32.totalorder %v3739, 63
    %vm3788 = vcmp.eq.s32.totalorder %v3740, 63
    %vm3789 = vcmp.eq.s32.totalorder %v3741, 63
    %vm3790 = vcmp.eq.s32.totalorder %v3742, 63
    %vm3791 = vcmp.eq.s32.totalorder %v3743, 63
    %vm3792 = vcmp.eq.s32.totalorder %v3744, 63
    %vm3793 = vcmp.eq.s32.totalorder %v3745, 63
    %vm3794 = vcmp.eq.s32.totalorder %v3746, 63
    %vm3795 = vcmp.eq.s32.totalorder %v3747, 63
    %vm3796 = vcmp.eq.s32.totalorder %v3748, 63
    %vm3797 = vcmp.eq.s32.totalorder %v3749, 63
    %vm3798 = vcmp.eq.s32.totalorder %v3750, 63
    %vm3799 = vcmp.eq.s32.totalorder %v3751, 63
    %v3800 = vsel %vm3784, 0.0, %v3690
    %v3801 = vsel %vm3785, 0.0, %v3692
    %v3802 = vsel %vm3786, 0.0, %v3694
    %v3803 = vsel %vm3787, 0.0, %v3696
    %v3804 = vsel %vm3788, 0.0, %v3698
    %v3805 = vsel %vm3789, 0.0, %v3700
    %v3806 = vsel %vm3790, 0.0, %v3702
    %v3807 = vsel %vm3791, 0.0, %v3704
    %v3808 = vsel %vm3792, 0.0, %v3706
    %v3809 = vsel %vm3793, 0.0, %v3708
    %v3810 = vsel %vm3794, 0.0, %v3710
    %v3811 = vsel %vm3795, 0.0, %v3712
    %v3812 = vsel %vm3796, 0.0, %v3714
    %v3813 = vsel %vm3797, 0.0, %v3716
    %v3814 = vsel %vm3798, 0.0, %v3718
    %v3815 = vsel %vm3799, 0.0, %v3735
    %3816 = vrot.lane.b32.xlu0 %v3608, 64
    %v3817 = vpop.permute.xlu0 %3816
    %3818 = vrot.lane.b32.xlu0 %v3609, 64
    %v3819 = vpop.permute.xlu0 %3818
    %3820 = vrot.lane.b32.xlu0 %v3610, 64
    %v3821 = vpop.permute.xlu0 %3820
    %3822 = vrot.lane.b32.xlu0 %v3611, 64
    %v3823 = vpop.permute.xlu0 %3822
    %3824 = vrot.lane.b32.xlu0 %v3612, 64
    %v3825 = vpop.permute.xlu0 %3824
    %3826 = vrot.lane.b32.xlu0 %v3613, 64
    %v3827 = vpop.permute.xlu0 %3826
    %3828 = vrot.lane.b32.xlu0 %v3614, 64
    %v3829 = vpop.permute.xlu0 %3828
    %3830 = vrot.lane.b32.xlu0 %v3615, 64
    %v3831 = vpop.permute.xlu0 %3830
    %3832 = vrot.lane.b32.xlu0 %v3616, 64
    %v3833 = vpop.permute.xlu0 %3832
    %3834 = vrot.lane.b32.xlu0 %v3617, 64
    %v3835 = vpop.permute.xlu0 %3834
    %3836 = vrot.lane.b32.xlu0 %v3618, 64
    %v3837 = vpop.permute.xlu0 %3836
    %3838 = vrot.lane.b32.xlu0 %v3619, 64
    %v3839 = vpop.permute.xlu0 %3838
    %3840 = vrot.lane.b32.xlu0 %v3620, 64
    %v3841 = vpop.permute.xlu0 %3840
    %3842 = vrot.lane.b32.xlu0 %v3621, 64
    %v3843 = vpop.permute.xlu0 %3842
    %3844 = vrot.lane.b32.xlu0 %v3622, 64
    %v3845 = vpop.permute.xlu0 %3844
    %3846 = vrot.lane.b32.xlu0 %v3623, 64
    %v3847 = vpop.permute.xlu0 %3846
    %v3864 = vsel %vm60, %v3768, %v3817
    %v3865 = vsel %vm60, %v3769, %v3819
    %v3866 = vsel %vm60, %v3770, %v3821
    %v3867 = vsel %vm60, %v3771, %v3823
    %v3868 = vsel %vm60, %v3772, %v3825
    %v3869 = vsel %vm60, %v3773, %v3827
    %v3870 = vsel %vm60, %v3774, %v3829
    %v3871 = vsel %vm60, %v3775, %v3831
    %v3872 = vsel %vm60, %v3776, %v3833
    %v3873 = vsel %vm60, %v3777, %v3835
    %v3874 = vsel %vm60, %v3778, %v3837
    %v3875 = vsel %vm60, %v3779, %v3839
    %v3876 = vsel %vm60, %v3780, %v3841
    %v3877 = vsel %vm60, %v3781, %v3843
    %v3878 = vsel %vm60, %v3782, %v3845
    %v3879 = vsel %vm60, %v3783, %v3847
    %v3880 = vld [vmem:[#allocation2 + $0x608] sm:$0xf]
    %v3881 = vld [vmem:[#allocation2 + $0x60c] sm:$0xf]
    %v3882 = vld [vmem:[#allocation2 + $0x610] sm:$0xf]
    %v3883 = vld [vmem:[#allocation2 + $0x614] sm:$0xf]
    %v3884 = vld [vmem:[#allocation2 + $0x618] sm:$0xf]
    %v3885 = vld [vmem:[#allocation2 + $0x61c] sm:$0xf]
    %v3886 = vld [vmem:[#allocation2 + $0x620] sm:$0xf]
    %v3887 = vld [vmem:[#allocation2 + $0x624] sm:$0xf]
    %v3888 = vld [vmem:[#allocation2 + $0x628] sm:$0xf]
    %v3889 = vld [vmem:[#allocation2 + $0x62c] sm:$0xf]
    %v3890 = vld [vmem:[#allocation2 + $0x630] sm:$0xf]
    %v3891 = vld [vmem:[#allocation2 + $0x634] sm:$0xf]
    %v3892 = vld [vmem:[#allocation2 + $0x638] sm:$0xf]
    %v3893 = vld [vmem:[#allocation2 + $0x63c] sm:$0xf]
    %v3894 = vld [vmem:[#allocation2 + $0x640] sm:$0xf]
    %v3895 = vld [vmem:[#allocation2 + $0x644] sm:$0xf]
    %v3896 = vld [vmem:[#allocation2 + $0x648] sm:$0xf]
    %v3897 = vld [vmem:[#allocation2 + $0x64c] sm:$0xf]
    %v3898 = vld [vmem:[#allocation2 + $0x650] sm:$0xf]
    %v3899 = vld [vmem:[#allocation2 + $0x654] sm:$0xf]
    %v3900 = vld [vmem:[#allocation2 + $0x658] sm:$0xf]
    %v3901 = vld [vmem:[#allocation2 + $0x65c] sm:$0xf]
    %v3902 = vld [vmem:[#allocation2 + $0x660] sm:$0xf]
    %v3903 = vld [vmem:[#allocation2 + $0x664] sm:$0xf]
    %v3904 = vpack.c.bf16 %v3865, %v3864
    %v3905 = vpack.c.bf16 %v3801, %v3800
    %v3906 = vpack.c.bf16 %v3867, %v3866
    %v3907 = vpack.c.bf16 %v3803, %v3802
    %v3908 = vpack.c.bf16 %v3869, %v3868
    %v3909 = vpack.c.bf16 %v3805, %v3804
    %v3910 = vpack.c.bf16 %v3871, %v3870
    %v3911 = vpack.c.bf16 %v3807, %v3806
    %v3912 = vpack.c.bf16 %v3873, %v3872
    %v3913 = vpack.c.bf16 %v3809, %v3808
    %v3914 = vpack.c.bf16 %v3875, %v3874
    %v3915 = vpack.c.bf16 %v3811, %v3810
    %v3916 = vpack.c.bf16 %v3877, %v3876
    %v3917 = vpack.c.bf16 %v3813, %v3812
    %v3918 = vpack.c.bf16 %v3879, %v3878
    %v3919 = vpack.c.bf16 %v3815, %v3814
    %v3920 = vld [vmem:[#allocation2 + $0x668] sm:$0x1]
    %v3921 = vunpack.c.l.bf16 %v3920
    %v3922 = vlaneseq
    %v3923 = vshrl.u32 %v3922, 7
    %v3924 = vsub.s32 0, %v3923
    %v3925 = vrot.slane %v3921, %v3924
    %v3950 = vunpack.c.l.b16 %v3880
    %v3951 = vunpack.c.l.b16 %v3881
    %v3952 = vunpack.c.l.b16 %v3882
    %v3953 = vunpack.c.l.b16 %v3883
    %v3954 = vunpack.c.l.b16 %v3884
    %v3955 = vunpack.c.l.b16 %v3885
    %v3956 = vunpack.c.l.b16 %v3886
    %v3957 = vunpack.c.l.b16 %v3887
    %v3958 = vunpack.c.l.b16 %v3888
    %v3959 = vunpack.c.l.b16 %v3889
    %v3960 = vunpack.c.l.b16 %v3890
    %v3961 = vunpack.c.l.b16 %v3891
    %v3962 = vunpack.c.l.b16 %v3892
    %v3963 = vunpack.c.l.b16 %v3893
    %v3964 = vunpack.c.l.b16 %v3894
    %v3965 = vunpack.c.l.b16 %v3895
    %v3966 = vunpack.c.l.b16 %v3896
    %v3967 = vunpack.c.l.b16 %v3897
    %v3968 = vunpack.c.l.b16 %v3898
    %v3969 = vunpack.c.l.b16 %v3899
    %v3970 = vunpack.c.l.b16 %v3900
    %v3971 = vunpack.c.l.b16 %v3901
    %v3972 = vunpack.c.l.b16 %v3902
    %v3973 = vunpack.c.l.b16 %v3903
    %v3974 = vpack.c.b16 %v3951, %v3950
    %v3975 = vpack.c.b16 %v3953, %v3952
    %v3976 = vpack.c.b16 %v3955, %v3954
    %v3977 = vpack.c.b16 %v3957, %v3956
    %v3978 = vpack.c.b16 %v3959, %v3958
    %v3979 = vpack.c.b16 %v3961, %v3960
    %v3980 = vpack.c.b16 %v3963, %v3962
    %v3981 = vpack.c.b16 %v3965, %v3964
    %v3982 = vpack.c.b16 %v3967, %v3966
    %v3983 = vpack.c.b16 %v3969, %v3968
    %v3984 = vpack.c.b16 %v3971, %v3970
    %v3985 = vpack.c.b16 %v3973, %v3972
    %v3999 = vsel %vm60, %v3905, 0
    %v4002 = vsel %vm60, %v3907, 0
    %v4005 = vsel %vm60, %v3909, 0
    %v4008 = vsel %vm60, %v3911, 0
    %v4011 = vsel %vm60, %v3913, 0
    %v4014 = vsel %vm60, %v3915, 0
    %v4017 = vsel %vm60, %v3917, 0
    %v4020 = vsel %vm60, %v3919, 0
    %4022 = vmatprep.subr.bf16.mxu0 0
    %4023 = vmatpush1.bf16.msra.mxu0 %v3981
    %4024 = vmatprep.subr.bf16.mxu0 0
    %4025 = vmatpush1.bf16.msra.mxu0 %v3980
    %4026 = vmatprep.subr.bf16.mxu0 0
    %4027 = vmatpush1.bf16.msra.mxu0 %v3979
    %4028 = vmatprep.subr.bf16.mxu0 0
    %4029 = vmatpush1.bf16.msra.mxu0 %v3978
    %4030 = vmatprep.subr.bf16.mxu0 0
    %4031 = vmatpush1.bf16.msra.mxu0 %v3977
    %4032 = vmatprep.subr.bf16.mxu0 0
    %4033 = vmatpush1.bf16.msra.mxu0 %v3976
    %4034 = vmatprep.subr.bf16.mxu0 0
    %4035 = vmatpush1.bf16.msra.mxu0 %v3975
    %4036 = vmatprep.subr.bf16.mxu0 0
    %4037 = vmatpush1.bf16.msra.mxu0 %v3974
    %4038 = vmatprep.subr.bf16.mxu0 0
    %4039 = vmatpush2.bf16.msra.mxu0 0
    %4040 = vmatprep.subr.bf16.mxu0 0
    %4041 = vmatpush2.bf16.msra.mxu0 0
    %4042 = vmatprep.subr.bf16.mxu0 0
    %4043 = vmatpush2.bf16.msra.mxu0 0
    %4044 = vmatprep.subr.bf16.mxu0 0
    %4045 = vmatpush2.bf16.msra.mxu0 0
    %4046 = vmatprep.subr.bf16.mxu0 0
    %4047 = vmatpush2.bf16.msra.mxu0 %v3985
    %4048 = vmatprep.subr.bf16.mxu0 0
    %4049 = vmatpush2.bf16.msra.mxu0 %v3984
    %4050 = vmatprep.subr.bf16.mxu0 0
    %4051 = vmatpush2.bf16.msra.mxu0 %v3983
    %4052 = vmatprep.subr.bf16.mxu0 0
    %4053 = vmatpush2.bf16.msra.mxu0 %v3982
    %4054 = vmatprep.mubr.bf16.mxu0 %v3999
    %4055 = vmatmul.mubr.bf16.gmra.mxu0 %v3904
    %v4056 = vpop.f32.mrf.mxu0
    %v4057 = vadd.f32 %v3925, %v4056
    %v4058 = vpop.f32.mrf.mxu0
    %v4059 = vpop.f32.mrf.mxu0
    %v4060 = vadd.f32 %v3925, %v4059
    %v4061 = vpop.f32.mrf.mxu0
    %4062 = vmatprep.mubr.bf16.mxu0 %v4002
    %4063 = vmatmul.mubr.bf16.gmra.mxu0 %v3906
    %v4064 = vpop.f32.mrf.mxu0
    %v4065 = vadd.f32 %v3925, %v4064
    %v4066 = vpop.f32.mrf.mxu0
    %v4067 = vpop.f32.mrf.mxu0
    %v4068 = vadd.f32 %v3925, %v4067
    %v4069 = vpop.f32.mrf.mxu0
    %4070 = vmatprep.mubr.bf16.mxu0 %v4005
    %4071 = vmatmul.mubr.bf16.gmra.mxu0 %v3908
    %v4072 = vpop.f32.mrf.mxu0
    %v4073 = vadd.f32 %v3925, %v4072
    %v4074 = vpop.f32.mrf.mxu0
    %v4075 = vpop.f32.mrf.mxu0
    %v4076 = vadd.f32 %v3925, %v4075
    %v4077 = vpop.f32.mrf.mxu0
    %4078 = vmatprep.mubr.bf16.mxu0 %v4008
    %4079 = vmatmul.mubr.bf16.gmra.mxu0 %v3910
    %v4080 = vpop.f32.mrf.mxu0
    %v4081 = vadd.f32 %v3925, %v4080
    %v4082 = vpop.f32.mrf.mxu0
    %v4083 = vpop.f32.mrf.mxu0
    %v4084 = vadd.f32 %v3925, %v4083
    %v4085 = vpop.f32.mrf.mxu0
    %4086 = vmatprep.mubr.bf16.mxu0 %v4011
    %4087 = vmatmul.mubr.bf16.gmra.mxu0 %v3912
    %v4088 = vpop.f32.mrf.mxu0
    %v4089 = vadd.f32 %v3925, %v4088
    %v4090 = vpop.f32.mrf.mxu0
    %v4091 = vpop.f32.mrf.mxu0
    %v4092 = vadd.f32 %v3925, %v4091
    %v4093 = vpop.f32.mrf.mxu0
    %4094 = vmatprep.mubr.bf16.mxu0 %v4014
    %4095 = vmatmul.mubr.bf16.gmra.mxu0 %v3914
    %v4096 = vpop.f32.mrf.mxu0
    %v4097 = vadd.f32 %v3925, %v4096
    %v4098 = vpop.f32.mrf.mxu0
    %v4099 = vpop.f32.mrf.mxu0
    %v4100 = vadd.f32 %v3925, %v4099
    %v4101 = vpop.f32.mrf.mxu0
    %4102 = vmatprep.mubr.bf16.mxu0 %v4017
    %4103 = vmatmul.mubr.bf16.gmra.mxu0 %v3916
    %v4104 = vpop.f32.mrf.mxu0
    %v4105 = vadd.f32 %v3925, %v4104
    %v4106 = vpop.f32.mrf.mxu0
    %v4107 = vpop.f32.mrf.mxu0
    %v4108 = vadd.f32 %v3925, %v4107
    %v4109 = vpop.f32.mrf.mxu0
    %4110 = vmatprep.mubr.bf16.mxu0 %v4020
    %4111 = vmatmul.mubr.bf16.gmra.mxu0 %v3918
    %v4112 = vpop.f32.mrf.mxu0
    %v4113 = vadd.f32 %v3925, %v4112
    %v4114 = vpop.f32.mrf.mxu0
    %v4115 = vpop.f32.mrf.mxu0
    %v4116 = vadd.f32 %v3925, %v4115
    %v4117 = vpop.f32.mrf.mxu0
    %4118 = vdwg.mxu0
    %v4119 = vmax.f32 %v4057, 0.0
    %v4120 = vmax.f32 %v4060, 0.0
    %v4121 = vmax.f32 %v4065, 0.0
    %v4122 = vmax.f32 %v4068, 0.0
    %v4123 = vmax.f32 %v4073, 0.0
    %v4124 = vmax.f32 %v4076, 0.0
    %v4125 = vmax.f32 %v4081, 0.0
    %v4126 = vmax.f32 %v4084, 0.0
    %v4127 = vmax.f32 %v4089, 0.0
    %v4128 = vmax.f32 %v4092, 0.0
    %v4129 = vmax.f32 %v4097, 0.0
    %v4130 = vmax.f32 %v4100, 0.0
    %v4131 = vmax.f32 %v4105, 0.0
    %v4132 = vmax.f32 %v4108, 0.0
    %v4133 = vmax.f32 %v4113, 0.0
    %v4134 = vmax.f32 %v4116, 0.0
    %v4151 = vrot.slane %v4119, 7
    %v4152 = vrot.slane %v4120, 7
    %v4153 = vsel %vm204, %v4151, %v4152
    %v4154 = vrot.slane %v4121, 7
    %v4155 = vsel %vm204, %v4152, %v4154
    %v4156 = vrot.slane %v4122, 7
    %v4157 = vsel %vm204, %v4154, %v4156
    %v4158 = vrot.slane %v4123, 7
    %v4159 = vsel %vm204, %v4156, %v4158
    %v4160 = vrot.slane %v4124, 7
    %v4161 = vsel %vm204, %v4158, %v4160
    %v4162 = vrot.slane %v4125, 7
    %v4163 = vsel %vm204, %v4160, %v4162
    %v4164 = vrot.slane %v4126, 7
    %v4165 = vsel %vm204, %v4162, %v4164
    %v4166 = vrot.slane %v4127, 7
    %v4167 = vsel %vm204, %v4164, %v4166
    %v4168 = vrot.slane %v4128, 7
    %v4169 = vsel %vm204, %v4166, %v4168
    %v4170 = vrot.slane %v4129, 7
    %v4171 = vsel %vm204, %v4168, %v4170
    %v4172 = vrot.slane %v4130, 7
    %v4173 = vsel %vm204, %v4170, %v4172
    %v4174 = vrot.slane %v4131, 7
    %v4175 = vsel %vm204, %v4172, %v4174
    %v4176 = vrot.slane %v4132, 7
    %v4177 = vsel %vm204, %v4174, %v4176
    %v4178 = vrot.slane %v4133, 7
    %v4179 = vsel %vm204, %v4176, %v4178
    %v4180 = vrot.slane %v4134, 7
    %v4181 = vsel %vm204, %v4178, %v4180
    %v4198 = vsel %vm204, 0.0, %v4151
    %v4199 = vrot.slane %v4119, 1
    %v4200 = vrot.slane %v4120, 1
    %v4201 = vsel %vm208, %v4199, %v4200
    %v4202 = vrot.slane %v4121, 1
    %v4203 = vsel %vm208, %v4200, %v4202
    %v4204 = vrot.slane %v4122, 1
    %v4205 = vsel %vm208, %v4202, %v4204
    %v4206 = vrot.slane %v4123, 1
    %v4207 = vsel %vm208, %v4204, %v4206
    %v4208 = vrot.slane %v4124, 1
    %v4209 = vsel %vm208, %v4206, %v4208
    %v4210 = vrot.slane %v4125, 1
    %v4211 = vsel %vm208, %v4208, %v4210
    %v4212 = vrot.slane %v4126, 1
    %v4213 = vsel %vm208, %v4210, %v4212
    %v4214 = vrot.slane %v4127, 1
    %v4215 = vsel %vm208, %v4212, %v4214
    %v4216 = vrot.slane %v4128, 1
    %v4217 = vsel %vm208, %v4214, %v4216
    %v4218 = vrot.slane %v4129, 1
    %v4219 = vsel %vm208, %v4216, %v4218
    %v4220 = vrot.slane %v4130, 1
    %v4221 = vsel %vm208, %v4218, %v4220
    %v4222 = vrot.slane %v4131, 1
    %v4223 = vsel %vm208, %v4220, %v4222
    %v4224 = vrot.slane %v4132, 1
    %v4225 = vsel %vm208, %v4222, %v4224
    %v4226 = vrot.slane %v4133, 1
    %v4227 = vsel %vm208, %v4224, %v4226
    %v4228 = vrot.slane %v4134, 1
    %v4229 = vsel %vm208, %v4226, %v4228
    %v4246 = vsel %vm208, %v4228, 0.0
    %v4247 = vsel %vm3752, 0.0, %v4198
    %v4248 = vsel %vm3753, 0.0, %v4153
    %v4249 = vsel %vm3754, 0.0, %v4155
    %v4250 = vsel %vm3755, 0.0, %v4157
    %v4251 = vsel %vm3756, 0.0, %v4159
    %v4252 = vsel %vm3757, 0.0, %v4161
    %v4253 = vsel %vm3758, 0.0, %v4163
    %v4254 = vsel %vm3759, 0.0, %v4165
    %v4255 = vsel %vm3760, 0.0, %v4167
    %v4256 = vsel %vm3761, 0.0, %v4169
    %v4257 = vsel %vm3762, 0.0, %v4171
    %v4258 = vsel %vm3763, 0.0, %v4173
    %v4259 = vsel %vm3764, 0.0, %v4175
    %v4260 = vsel %vm3765, 0.0, %v4177
    %v4261 = vsel %vm3766, 0.0, %v4179
    %v4262 = vsel %vm3767, 0.0, %v4181
    %v4263 = vsel %vm3784, 0.0, %v4201
    %v4264 = vsel %vm3785, 0.0, %v4203
    %v4265 = vsel %vm3786, 0.0, %v4205
    %v4266 = vsel %vm3787, 0.0, %v4207
    %v4267 = vsel %vm3788, 0.0, %v4209
    %v4268 = vsel %vm3789, 0.0, %v4211
    %v4269 = vsel %vm3790, 0.0, %v4213
    %v4270 = vsel %vm3791, 0.0, %v4215
    %v4271 = vsel %vm3792, 0.0, %v4217
    %v4272 = vsel %vm3793, 0.0, %v4219
    %v4273 = vsel %vm3794, 0.0, %v4221
    %v4274 = vsel %vm3795, 0.0, %v4223
    %v4275 = vsel %vm3796, 0.0, %v4225
    %v4276 = vsel %vm3797, 0.0, %v4227
    %v4277 = vsel %vm3798, 0.0, %v4229
    %v4278 = vsel %vm3799, 0.0, %v4246
    %v4279 = vld [vmem:[#allocation2 + $0x670] sm:$0xf]
    %v4280 = vld [vmem:[#allocation2 + $0x674] sm:$0xf]
    %v4281 = vld [vmem:[#allocation2 + $0x678] sm:$0xf]
    %v4282 = vld [vmem:[#allocation2 + $0x67c] sm:$0xf]
    %v4283 = vld [vmem:[#allocation2 + $0x680] sm:$0xf]
    %v4284 = vld [vmem:[#allocation2 + $0x684] sm:$0xf]
    %v4285 = vld [vmem:[#allocation2 + $0x688] sm:$0xf]
    %v4286 = vld [vmem:[#allocation2 + $0x68c] sm:$0xf]
    %v4287 = vld [vmem:[#allocation2 + $0x690] sm:$0xf]
    %v4288 = vld [vmem:[#allocation2 + $0x694] sm:$0xf]
    %v4289 = vld [vmem:[#allocation2 + $0x698] sm:$0xf]
    %v4290 = vld [vmem:[#allocation2 + $0x69c] sm:$0xf]
    %v4291 = vld [vmem:[#allocation2 + $0x6a0] sm:$0xf]
    %v4292 = vld [vmem:[#allocation2 + $0x6a4] sm:$0xf]
    %v4293 = vld [vmem:[#allocation2 + $0x6a8] sm:$0xf]
    %v4294 = vld [vmem:[#allocation2 + $0x6ac] sm:$0xf]
    %v4295 = vld [vmem:[#allocation2 + $0x6b0] sm:$0xf]
    %v4296 = vld [vmem:[#allocation2 + $0x6b4] sm:$0xf]
    %v4297 = vld [vmem:[#allocation2 + $0x6b8] sm:$0xf]
    %v4298 = vld [vmem:[#allocation2 + $0x6bc] sm:$0xf]
    %v4299 = vld [vmem:[#allocation2 + $0x6c0] sm:$0xf]
    %v4300 = vld [vmem:[#allocation2 + $0x6c4] sm:$0xf]
    %v4301 = vld [vmem:[#allocation2 + $0x6c8] sm:$0xf]
    %v4302 = vld [vmem:[#allocation2 + $0x6cc] sm:$0xf]
    %v4303 = vld [vmem:[#allocation2 + $0x6d0] sm:$0xf]
    %v4304 = vld [vmem:[#allocation2 + $0x6d4] sm:$0xf]
    %v4305 = vld [vmem:[#allocation2 + $0x6d8] sm:$0xf]
    %v4306 = vld [vmem:[#allocation2 + $0x6dc] sm:$0xf]
    %v4307 = vld [vmem:[#allocation2 + $0x6e0] sm:$0xf]
    %v4308 = vld [vmem:[#allocation2 + $0x6e4] sm:$0xf]
    %v4309 = vld [vmem:[#allocation2 + $0x6e8] sm:$0xf]
    %v4310 = vld [vmem:[#allocation2 + $0x6ec] sm:$0xf]
    %v4311 = vld [vmem:[#allocation2 + $0x6f0] sm:$0xf]
    %v4312 = vld [vmem:[#allocation2 + $0x6f4] sm:$0xf]
    %v4313 = vld [vmem:[#allocation2 + $0x6f8] sm:$0xf]
    %v4314 = vld [vmem:[#allocation2 + $0x6fc] sm:$0xf]
    %v4315 = vld [vmem:[#allocation2 + $0x700] sm:$0xf]
    %v4316 = vld [vmem:[#allocation2 + $0x704] sm:$0xf]
    %v4317 = vld [vmem:[#allocation2 + $0x708] sm:$0xf]
    %v4318 = vld [vmem:[#allocation2 + $0x70c] sm:$0xf]
    %v4319 = vld [vmem:[#allocation2 + $0x710] sm:$0xf]
    %v4320 = vld [vmem:[#allocation2 + $0x714] sm:$0xf]
    %v4321 = vld [vmem:[#allocation2 + $0x718] sm:$0xf]
    %v4322 = vld [vmem:[#allocation2 + $0x71c] sm:$0xf]
    %v4323 = vld [vmem:[#allocation2 + $0x720] sm:$0xf]
    %v4324 = vld [vmem:[#allocation2 + $0x724] sm:$0xf]
    %v4325 = vld [vmem:[#allocation2 + $0x728] sm:$0xf]
    %v4326 = vld [vmem:[#allocation2 + $0x72c] sm:$0xf]
    %v4327 = vpack.c.bf16 %v4248, %v4247
    %v4328 = vpack.c.bf16 %v4120, %v4119
    %v4329 = vpack.c.bf16 %v4264, %v4263
    %v4330 = vpack.c.bf16 %v4250, %v4249
    %v4331 = vpack.c.bf16 %v4122, %v4121
    %v4332 = vpack.c.bf16 %v4266, %v4265
    %v4333 = vpack.c.bf16 %v4252, %v4251
    %v4334 = vpack.c.bf16 %v4124, %v4123
    %v4335 = vpack.c.bf16 %v4268, %v4267
    %v4336 = vpack.c.bf16 %v4254, %v4253
    %v4337 = vpack.c.bf16 %v4126, %v4125
    %v4338 = vpack.c.bf16 %v4270, %v4269
    %v4339 = vpack.c.bf16 %v4256, %v4255
    %v4340 = vpack.c.bf16 %v4128, %v4127
    %v4341 = vpack.c.bf16 %v4272, %v4271
    %v4342 = vpack.c.bf16 %v4258, %v4257
    %v4343 = vpack.c.bf16 %v4130, %v4129
    %v4344 = vpack.c.bf16 %v4274, %v4273
    %v4345 = vpack.c.bf16 %v4260, %v4259
    %v4346 = vpack.c.bf16 %v4132, %v4131
    %v4347 = vpack.c.bf16 %v4276, %v4275
    %v4348 = vpack.c.bf16 %v4262, %v4261
    %v4349 = vpack.c.bf16 %v4134, %v4133
    %v4350 = vpack.c.bf16 %v4278, %v4277
    %v4399 = vunpack.c.l.b16 %v4279
    %v4400 = vunpack.c.l.b16 %v4280
    %v4401 = vunpack.c.l.b16 %v4281
    %v4402 = vunpack.c.l.b16 %v4282
    %v4403 = vunpack.c.l.b16 %v4283
    %v4404 = vunpack.c.l.b16 %v4284
    %v4405 = vunpack.c.l.b16 %v4285
    %v4406 = vunpack.c.l.b16 %v4286
    %v4407 = vunpack.c.l.b16 %v4287
    %v4408 = vunpack.c.l.b16 %v4288
    %v4409 = vunpack.c.l.b16 %v4289
    %v4410 = vunpack.c.l.b16 %v4290
    %v4411 = vunpack.c.l.b16 %v4291
    %v4412 = vunpack.c.l.b16 %v4292
    %v4413 = vunpack.c.l.b16 %v4293
    %v4414 = vunpack.c.l.b16 %v4294
    %v4415 = vunpack.c.l.b16 %v4295
    %v4416 = vunpack.c.l.b16 %v4296
    %v4417 = vunpack.c.l.b16 %v4297
    %v4418 = vunpack.c.l.b16 %v4298
    %v4419 = vunpack.c.l.b16 %v4299
    %v4420 = vunpack.c.l.b16 %v4300
    %v4421 = vunpack.c.l.b16 %v4301
    %v4422 = vunpack.c.l.b16 %v4302
    %v4423 = vunpack.c.l.b16 %v4303
    %v4424 = vunpack.c.l.b16 %v4304
    %v4425 = vunpack.c.l.b16 %v4305
    %v4426 = vunpack.c.l.b16 %v4306
    %v4427 = vunpack.c.l.b16 %v4307
    %v4428 = vunpack.c.l.b16 %v4308
    %v4429 = vunpack.c.l.b16 %v4309
    %v4430 = vunpack.c.l.b16 %v4310
    %v4431 = vunpack.c.l.b16 %v4311
    %v4432 = vunpack.c.l.b16 %v4312
    %v4433 = vunpack.c.l.b16 %v4313
    %v4434 = vunpack.c.l.b16 %v4314
    %v4435 = vunpack.c.l.b16 %v4315
    %v4436 = vunpack.c.l.b16 %v4316
    %v4437 = vunpack.c.l.b16 %v4317
    %v4438 = vunpack.c.l.b16 %v4318
    %v4439 = vunpack.c.l.b16 %v4319
    %v4440 = vunpack.c.l.b16 %v4320
    %v4441 = vunpack.c.l.b16 %v4321
    %v4442 = vunpack.c.l.b16 %v4322
    %v4443 = vunpack.c.l.b16 %v4323
    %v4444 = vunpack.c.l.b16 %v4324
    %v4445 = vunpack.c.l.b16 %v4325
    %v4446 = vunpack.c.l.b16 %v4326
    %v4447 = vpack.c.b16 %v4400, %v4399
    %v4448 = vpack.c.b16 %v4402, %v4401
    %v4449 = vpack.c.b16 %v4404, %v4403
    %v4450 = vpack.c.b16 %v4406, %v4405
    %v4451 = vpack.c.b16 %v4408, %v4407
    %v4452 = vpack.c.b16 %v4410, %v4409
    %v4453 = vpack.c.b16 %v4412, %v4411
    %v4454 = vpack.c.b16 %v4414, %v4413
    %v4455 = vpack.c.b16 %v4416, %v4415
    %v4456 = vpack.c.b16 %v4418, %v4417
    %v4457 = vpack.c.b16 %v4420, %v4419
    %v4458 = vpack.c.b16 %v4422, %v4421
    %v4459 = vpack.c.b16 %v4424, %v4423
    %v4460 = vpack.c.b16 %v4426, %v4425
    %v4461 = vpack.c.b16 %v4428, %v4427
    %v4462 = vpack.c.b16 %v4430, %v4429
    %v4463 = vpack.c.b16 %v4432, %v4431
    %v4464 = vpack.c.b16 %v4434, %v4433
    %v4465 = vpack.c.b16 %v4436, %v4435
    %v4466 = vpack.c.b16 %v4438, %v4437
    %v4467 = vpack.c.b16 %v4440, %v4439
    %v4468 = vpack.c.b16 %v4442, %v4441
    %v4469 = vpack.c.b16 %v4444, %v4443
    %v4470 = vpack.c.b16 %v4446, %v4445
    %4495 = vmatprep.subr.bf16.mxu0 0
    %4496 = vmatpush1.bf16.msra.mxu0 %v4454
    %4497 = vmatprep.subr.bf16.mxu0 0
    %4498 = vmatpush1.bf16.msra.mxu0 %v4453
    %4499 = vmatprep.subr.bf16.mxu0 0
    %4500 = vmatpush1.bf16.msra.mxu0 %v4452
    %4501 = vmatprep.subr.bf16.mxu0 0
    %4502 = vmatpush1.bf16.msra.mxu0 %v4451
    %4503 = vmatprep.subr.bf16.mxu0 0
    %4504 = vmatpush1.bf16.msra.mxu0 %v4450
    %4505 = vmatprep.subr.bf16.mxu0 0
    %4506 = vmatpush1.bf16.msra.mxu0 %v4449
    %4507 = vmatprep.subr.bf16.mxu0 0
    %4508 = vmatpush1.bf16.msra.mxu0 %v4448
    %4509 = vmatprep.subr.bf16.mxu0 0
    %4510 = vmatpush1.bf16.msra.mxu0 %v4447
    %4511 = vmatprep.subr.bf16.mxu0 0
    %4512 = vmatpush2.bf16.msra.mxu0 %v4462
    %4513 = vmatprep.subr.bf16.mxu0 0
    %4514 = vmatpush2.bf16.msra.mxu0 %v4461
    %4515 = vmatprep.subr.bf16.mxu0 0
    %4516 = vmatpush2.bf16.msra.mxu0 %v4460
    %4517 = vmatprep.subr.bf16.mxu0 0
    %4518 = vmatpush2.bf16.msra.mxu0 %v4459
    %4519 = vmatprep.subr.bf16.mxu0 0
    %4520 = vmatpush2.bf16.msra.mxu0 %v4458
    %4521 = vmatprep.subr.bf16.mxu0 0
    %4522 = vmatpush2.bf16.msra.mxu0 %v4457
    %4523 = vmatprep.subr.bf16.mxu0 0
    %4524 = vmatpush2.bf16.msra.mxu0 %v4456
    %4525 = vmatprep.subr.bf16.mxu0 0
    %4526 = vmatpush2.bf16.msra.mxu0 %v4455
    %4527 = vmatprep.mubr.bf16.mxu0 %v4328
    %4528 = vmatmul.mubr.bf16.gmra.mxu0 %v4327
    %v4529 = vpop.f32.mrf.mxu0
    %v4530 = vadd.f32 0.0, %v4529
    %v4531 = vpop.f32.mrf.mxu0
    %v4532 = vpop.f32.mrf.mxu0
    %v4533 = vadd.f32 0.0, %v4532
    %v4534 = vpop.f32.mrf.mxu0
    %4535 = vmatprep.mubr.bf16.mxu0 %v4331
    %4536 = vmatmul.mubr.bf16.gmra.mxu0 %v4330
    %v4537 = vpop.f32.mrf.mxu0
    %v4538 = vadd.f32 0.0, %v4537
    %v4539 = vpop.f32.mrf.mxu0
    %v4540 = vpop.f32.mrf.mxu0
    %v4541 = vadd.f32 0.0, %v4540
    %v4542 = vpop.f32.mrf.mxu0
    %4543 = vmatprep.mubr.bf16.mxu0 %v4334
    %4544 = vmatmul.mubr.bf16.gmra.mxu0 %v4333
    %v4545 = vpop.f32.mrf.mxu0
    %v4546 = vadd.f32 0.0, %v4545
    %v4547 = vpop.f32.mrf.mxu0
    %v4548 = vpop.f32.mrf.mxu0
    %v4549 = vadd.f32 0.0, %v4548
    %v4550 = vpop.f32.mrf.mxu0
    %4551 = vmatprep.mubr.bf16.mxu0 %v4337
    %4552 = vmatmul.mubr.bf16.gmra.mxu0 %v4336
    %v4553 = vpop.f32.mrf.mxu0
    %v4554 = vadd.f32 0.0, %v4553
    %v4555 = vpop.f32.mrf.mxu0
    %v4556 = vpop.f32.mrf.mxu0
    %v4557 = vadd.f32 0.0, %v4556
    %v4558 = vpop.f32.mrf.mxu0
    %4559 = vmatprep.mubr.bf16.mxu0 %v4340
    %4560 = vmatmul.mubr.bf16.gmra.mxu0 %v4339
    %v4561 = vpop.f32.mrf.mxu0
    %v4562 = vadd.f32 0.0, %v4561
    %v4563 = vpop.f32.mrf.mxu0
    %v4564 = vpop.f32.mrf.mxu0
    %v4565 = vadd.f32 0.0, %v4564
    %v4566 = vpop.f32.mrf.mxu0
    %4567 = vmatprep.mubr.bf16.mxu0 %v4343
    %4568 = vmatmul.mubr.bf16.gmra.mxu0 %v4342
    %v4569 = vpop.f32.mrf.mxu0
    %v4570 = vadd.f32 0.0, %v4569
    %v4571 = vpop.f32.mrf.mxu0
    %v4572 = vpop.f32.mrf.mxu0
    %v4573 = vadd.f32 0.0, %v4572
    %v4574 = vpop.f32.mrf.mxu0
    %4575 = vmatprep.mubr.bf16.mxu0 %v4346
    %4576 = vmatmul.mubr.bf16.gmra.mxu0 %v4345
    %v4577 = vpop.f32.mrf.mxu0
    %v4578 = vadd.f32 0.0, %v4577
    %v4579 = vpop.f32.mrf.mxu0
    %v4580 = vpop.f32.mrf.mxu0
    %v4581 = vadd.f32 0.0, %v4580
    %v4582 = vpop.f32.mrf.mxu0
    %4583 = vmatprep.mubr.bf16.mxu0 %v4349
    %4584 = vmatmul.mubr.bf16.gmra.mxu0 %v4348
    %v4585 = vpop.f32.mrf.mxu0
    %v4586 = vadd.f32 0.0, %v4585
    %v4587 = vpop.f32.mrf.mxu0
    %v4588 = vpop.f32.mrf.mxu0
    %v4589 = vadd.f32 0.0, %v4588
    %v4590 = vpop.f32.mrf.mxu0
    %4591 = vdwg.mxu0
    %4592 = vmatprep.subr.bf16.mxu0 0
    %4593 = vmatpush1.bf16.msra.mxu0 %v4470
    %4594 = vmatprep.subr.bf16.mxu0 0
    %4595 = vmatpush1.bf16.msra.mxu0 %v4469
    %4596 = vmatprep.subr.bf16.mxu0 0
    %4597 = vmatpush1.bf16.msra.mxu0 %v4468
    %4598 = vmatprep.subr.bf16.mxu0 0
    %4599 = vmatpush1.bf16.msra.mxu0 %v4467
    %4600 = vmatprep.subr.bf16.mxu0 0
    %4601 = vmatpush1.bf16.msra.mxu0 %v4466
    %4602 = vmatprep.subr.bf16.mxu0 0
    %4603 = vmatpush1.bf16.msra.mxu0 %v4465
    %4604 = vmatprep.subr.bf16.mxu0 0
    %4605 = vmatpush1.bf16.msra.mxu0 %v4464
    %4606 = vmatprep.subr.bf16.mxu0 0
    %4607 = vmatpush1.bf16.msra.mxu0 %v4463
    %4608 = vmatprep.subr.bf16.mxu0 0
    %4609 = vmatpush2.bf16.msra.mxu0 0
    %4610 = vmatprep.subr.bf16.mxu0 0
    %4611 = vmatpush2.bf16.msra.mxu0 0
    %4612 = vmatprep.subr.bf16.mxu0 0
    %4613 = vmatpush2.bf16.msra.mxu0 0
    %4614 = vmatprep.subr.bf16.mxu0 0
    %4615 = vmatpush2.bf16.msra.mxu0 0
    %4616 = vmatprep.subr.bf16.mxu0 0
    %4617 = vmatpush2.bf16.msra.mxu0 0
    %4618 = vmatprep.subr.bf16.mxu0 0
    %4619 = vmatpush2.bf16.msra.mxu0 0
    %4620 = vmatprep.subr.bf16.mxu0 0
    %4621 = vmatpush2.bf16.msra.mxu0 0
    %4622 = vmatprep.subr.bf16.mxu0 0
    %4623 = vmatpush2.bf16.msra.mxu0 0
    %4624 = vmatprep.mubr.bf16.mxu0 0
    %4625 = vmatmul.mubr.bf16.gmra.mxu0 %v4329
    %v4626 = vpop.f32.mrf.mxu0
    %v4627 = vadd.f32 %v4530, %v4626
    %v4628 = vpop.f32.mrf.mxu0
    %v4629 = vpop.f32.mrf.mxu0
    %v4630 = vadd.f32 %v4533, %v4629
    %v4631 = vpop.f32.mrf.mxu0
    %4632 = vmatprep.mubr.bf16.mxu0 0
    %4633 = vmatmul.mubr.bf16.gmra.mxu0 %v4332
    %v4634 = vpop.f32.mrf.mxu0
    %v4635 = vadd.f32 %v4538, %v4634
    %v4636 = vpop.f32.mrf.mxu0
    %v4637 = vpop.f32.mrf.mxu0
    %v4638 = vadd.f32 %v4541, %v4637
    %v4639 = vpop.f32.mrf.mxu0
    %4640 = vmatprep.mubr.bf16.mxu0 0
    %4641 = vmatmul.mubr.bf16.gmra.mxu0 %v4335
    %v4642 = vpop.f32.mrf.mxu0
    %v4643 = vadd.f32 %v4546, %v4642
    %v4644 = vpop.f32.mrf.mxu0
    %v4645 = vpop.f32.mrf.mxu0
    %v4646 = vadd.f32 %v4549, %v4645
    %v4647 = vpop.f32.mrf.mxu0
    %4648 = vmatprep.mubr.bf16.mxu0 0
    %4649 = vmatmul.mubr.bf16.gmra.mxu0 %v4338
    %v4650 = vpop.f32.mrf.mxu0
    %v4651 = vadd.f32 %v4554, %v4650
    %v4652 = vpop.f32.mrf.mxu0
    %v4653 = vpop.f32.mrf.mxu0
    %v4654 = vadd.f32 %v4557, %v4653
    %v4655 = vpop.f32.mrf.mxu0
    %4656 = vmatprep.mubr.bf16.mxu0 0
    %4657 = vmatmul.mubr.bf16.gmra.mxu0 %v4341
    %v4658 = vpop.f32.mrf.mxu0
    %v4659 = vadd.f32 %v4562, %v4658
    %v4660 = vpop.f32.mrf.mxu0
    %v4661 = vpop.f32.mrf.mxu0
    %v4662 = vadd.f32 %v4565, %v4661
    %v4663 = vpop.f32.mrf.mxu0
    %4664 = vmatprep.mubr.bf16.mxu0 0
    %4665 = vmatmul.mubr.bf16.gmra.mxu0 %v4344
    %v4666 = vpop.f32.mrf.mxu0
    %v4667 = vadd.f32 %v4570, %v4666
    %v4668 = vpop.f32.mrf.mxu0
    %v4669 = vpop.f32.mrf.mxu0
    %v4670 = vadd.f32 %v4573, %v4669
    %v4671 = vpop.f32.mrf.mxu0
    %4672 = vmatprep.mubr.bf16.mxu0 0
    %4673 = vmatmul.mubr.bf16.gmra.mxu0 %v4347
    %v4674 = vpop.f32.mrf.mxu0
    %v4675 = vadd.f32 %v4578, %v4674
    %v4676 = vpop.f32.mrf.mxu0
    %v4677 = vpop.f32.mrf.mxu0
    %v4678 = vadd.f32 %v4581, %v4677
    %v4679 = vpop.f32.mrf.mxu0
    %4680 = vmatprep.mubr.bf16.mxu0 0
    %4681 = vmatmul.mubr.bf16.gmra.mxu0 %v4350
    %v4682 = vpop.f32.mrf.mxu0
    %v4683 = vadd.f32 %v4586, %v4682
    %v4684 = vpop.f32.mrf.mxu0
    %v4685 = vpop.f32.mrf.mxu0
    %v4686 = vadd.f32 %v4589, %v4685
    %v4687 = vpop.f32.mrf.mxu0
    %4688 = vdwg.mxu0
    %v4689 = vadd.f32 %v3608, %v4627
    %v4690 = vadd.f32 %v3609, %v4630
    %v4691 = vadd.f32 %v3610, %v4635
    %v4692 = vadd.f32 %v3611, %v4638
    %v4693 = vadd.f32 %v3612, %v4643
    %v4694 = vadd.f32 %v3613, %v4646
    %v4695 = vadd.f32 %v3614, %v4651
    %v4696 = vadd.f32 %v3615, %v4654
    %v4697 = vadd.f32 %v3616, %v4659
    %v4698 = vadd.f32 %v3617, %v4662
    %v4699 = vadd.f32 %v3618, %v4667
    %v4700 = vadd.f32 %v3619, %v4670
    %v4701 = vadd.f32 %v3620, %v4675
    %v4702 = vadd.f32 %v3621, %v4678
    %v4703 = vadd.f32 %v3622, %v4683
    %v4704 = vadd.f32 %v3623, %v4686
    %v4705 = vld [vmem:[#allocation2 + $0x730] sm:$0x1]
    %v4706 = vunpack.c.l.bf16 %v4705
    %v4707 = vlaneseq
    %v4708 = vshrl.u32 %v4707, 7
    %v4709 = vsub.s32 0, %v4708
    %v4710 = vrot.slane %v4706, %v4709
    %v4711 = vadd.f32 %v4689, %v4710
    %v4712 = vadd.f32 %v4690, %v4710
    %v4713 = vadd.f32 %v4691, %v4710
    %v4714 = vadd.f32 %v4692, %v4710
    %v4715 = vadd.f32 %v4693, %v4710
    %v4716 = vadd.f32 %v4694, %v4710
    %v4717 = vadd.f32 %v4695, %v4710
    %v4718 = vadd.f32 %v4696, %v4710
    %v4719 = vadd.f32 %v4697, %v4710
    %v4720 = vadd.f32 %v4698, %v4710
    %v4721 = vadd.f32 %v4699, %v4710
    %v4722 = vadd.f32 %v4700, %v4710
    %v4723 = vadd.f32 %v4701, %v4710
    %v4724 = vadd.f32 %v4702, %v4710
    %v4725 = vadd.f32 %v4703, %v4710
    %v4726 = vadd.f32 %v4704, %v4710
    %v4727 = vmax.f32 %v4711, 0.0
    %v4728 = vmax.f32 %v4712, 0.0
    %v4729 = vmax.f32 %v4713, 0.0
    %v4730 = vmax.f32 %v4714, 0.0
    %v4731 = vmax.f32 %v4715, 0.0
    %v4732 = vmax.f32 %v4716, 0.0
    %v4733 = vmax.f32 %v4717, 0.0
    %v4734 = vmax.f32 %v4718, 0.0
    %v4735 = vmax.f32 %v4719, 0.0
    %v4736 = vmax.f32 %v4720, 0.0
    %v4737 = vmax.f32 %v4721, 0.0
    %v4738 = vmax.f32 %v4722, 0.0
    %v4739 = vmax.f32 %v4723, 0.0
    %v4740 = vmax.f32 %v4724, 0.0
    %v4741 = vmax.f32 %v4725, 0.0
    %v4742 = vmax.f32 %v4726, 0.0
    %v4743 = vld [vmem:[#allocation2 + $0x738] sm:$0xf]
    %v4744 = vld [vmem:[#allocation2 + $0x73c] sm:$0xf]
    %v4745 = vld [vmem:[#allocation2 + $0x740] sm:$0xf]
    %v4746 = vld [vmem:[#allocation2 + $0x744] sm:$0xf]
    %v4747 = vld [vmem:[#allocation2 + $0x748] sm:$0xf]
    %v4748 = vld [vmem:[#allocation2 + $0x74c] sm:$0xf]
    %v4749 = vld [vmem:[#allocation2 + $0x750] sm:$0xf]
    %v4750 = vld [vmem:[#allocation2 + $0x754] sm:$0xf]
    %v4751 = vpack.c.bf16 %v4728, %v4727
    %v4752 = vpack.c.bf16 %v4730, %v4729
    %v4753 = vpack.c.bf16 %v4732, %v4731
    %v4754 = vpack.c.bf16 %v4734, %v4733
    %v4755 = vpack.c.bf16 %v4736, %v4735
    %v4756 = vpack.c.bf16 %v4738, %v4737
    %v4757 = vpack.c.bf16 %v4740, %v4739
    %v4758 = vpack.c.bf16 %v4742, %v4741
    %v4759 = vld [vmem:[#allocation2 + $0x758] sm:$0x1]
    %v4760 = vunpack.c.l.bf16 %v4759
    %v4761 = vlaneseq
    %v4762 = vshrl.u32 %v4761, 7
    %v4763 = vsub.s32 0, %v4762
    %v4764 = vrot.slane %v4760, %v4763
    %v4773 = vunpack.c.l.b16 %v4743
    %v4774 = vunpack.c.l.b16 %v4744
    %v4775 = vunpack.c.l.b16 %v4745
    %v4776 = vunpack.c.l.b16 %v4746
    %v4777 = vunpack.c.l.b16 %v4747
    %v4778 = vunpack.c.l.b16 %v4748
    %v4779 = vunpack.c.l.b16 %v4749
    %v4780 = vunpack.c.l.b16 %v4750
    %v4781 = vpack.c.b16 %v4774, %v4773
    %v4782 = vpack.c.b16 %v4776, %v4775
    %v4783 = vpack.c.b16 %v4778, %v4777
    %v4784 = vpack.c.b16 %v4780, %v4779
    %v4790 = vsel %vm60, %v4751, 0
    %v4793 = vsel %vm60, %v4752, 0
    %v4796 = vsel %vm60, %v4753, 0
    %v4799 = vsel %vm60, %v4754, 0
    %v4802 = vsel %vm60, %v4755, 0
    %v4805 = vsel %vm60, %v4756, 0
    %v4808 = vsel %vm60, %v4757, 0
    %v4811 = vsel %vm60, %v4758, 0
    %4813 = vmatprep.subr.bf16.mxu0 0
    %4814 = vmatpush1.bf16.msra.mxu0 0
    %4815 = vmatprep.subr.bf16.mxu0 0
    %4816 = vmatpush1.bf16.msra.mxu0 0
    %4817 = vmatprep.subr.bf16.mxu0 0
    %4818 = vmatpush1.bf16.msra.mxu0 0
    %4819 = vmatprep.subr.bf16.mxu0 0
    %4820 = vmatpush1.bf16.msra.mxu0 0
    %4821 = vmatprep.subr.bf16.mxu0 0
    %4822 = vmatpush1.bf16.msra.mxu0 %v4784
    %4823 = vmatprep.subr.bf16.mxu0 0
    %4824 = vmatpush1.bf16.msra.mxu0 %v4783
    %4825 = vmatprep.subr.bf16.mxu0 0
    %4826 = vmatpush1.bf16.msra.mxu0 %v4782
    %4827 = vmatprep.subr.bf16.mxu0 0
    %4828 = vmatpush1.bf16.msra.mxu0 %v4781
    %4829 = vmatprep.subr.bf16.mxu0 0
    %4830 = vmatpush2.bf16.msra.mxu0 0
    %4831 = vmatprep.subr.bf16.mxu0 0
    %4832 = vmatpush2.bf16.msra.mxu0 0
    %4833 = vmatprep.subr.bf16.mxu0 0
    %4834 = vmatpush2.bf16.msra.mxu0 0
    %4835 = vmatprep.subr.bf16.mxu0 0
    %4836 = vmatpush2.bf16.msra.mxu0 0
    %4837 = vmatprep.subr.bf16.mxu0 0
    %4838 = vmatpush2.bf16.msra.mxu0 0
    %4839 = vmatprep.subr.bf16.mxu0 0
    %4840 = vmatpush2.bf16.msra.mxu0 0
    %4841 = vmatprep.subr.bf16.mxu0 0
    %4842 = vmatpush2.bf16.msra.mxu0 0
    %4843 = vmatprep.subr.bf16.mxu0 0
    %4844 = vmatpush2.bf16.msra.mxu0 0
    %4845 = vmatprep.mubr.bf16.mxu0 0
    %4846 = vmatmul.mubr.bf16.gmra.mxu0 %v4790
    %v4847 = vpop.f32.mrf.mxu0
    %v4848 = vadd.f32 %v4764, %v4847
    %v4849 = vpop.f32.mrf.mxu0
    %v4850 = vpop.f32.mrf.mxu0
    %v4851 = vadd.f32 %v4764, %v4850
    %v4852 = vpop.f32.mrf.mxu0
    %4853 = vmatprep.mubr.bf16.mxu0 0
    %4854 = vmatmul.mubr.bf16.gmra.mxu0 %v4793
    %v4855 = vpop.f32.mrf.mxu0
    %v4856 = vadd.f32 %v4764, %v4855
    %v4857 = vpop.f32.mrf.mxu0
    %v4858 = vpop.f32.mrf.mxu0
    %v4859 = vadd.f32 %v4764, %v4858
    %v4860 = vpop.f32.mrf.mxu0
    %4861 = vmatprep.mubr.bf16.mxu0 0
    %4862 = vmatmul.mubr.bf16.gmra.mxu0 %v4796
    %v4863 = vpop.f32.mrf.mxu0
    %v4864 = vadd.f32 %v4764, %v4863
    %v4865 = vpop.f32.mrf.mxu0
    %v4866 = vpop.f32.mrf.mxu0
    %v4867 = vadd.f32 %v4764, %v4866
    %v4868 = vpop.f32.mrf.mxu0
    %4869 = vmatprep.mubr.bf16.mxu0 0
    %4870 = vmatmul.mubr.bf16.gmra.mxu0 %v4799
    %v4871 = vpop.f32.mrf.mxu0
    %v4872 = vadd.f32 %v4764, %v4871
    %v4873 = vpop.f32.mrf.mxu0
    %v4874 = vpop.f32.mrf.mxu0
    %v4875 = vadd.f32 %v4764, %v4874
    %v4876 = vpop.f32.mrf.mxu0
    %4877 = vmatprep.mubr.bf16.mxu0 0
    %4878 = vmatmul.mubr.bf16.gmra.mxu0 %v4802
    %v4879 = vpop.f32.mrf.mxu0
    %v4880 = vadd.f32 %v4764, %v4879
    %v4881 = vpop.f32.mrf.mxu0
    %v4882 = vpop.f32.mrf.mxu0
    %v4883 = vadd.f32 %v4764, %v4882
    %v4884 = vpop.f32.mrf.mxu0
    %4885 = vmatprep.mubr.bf16.mxu0 0
    %4886 = vmatmul.mubr.bf16.gmra.mxu0 %v4805
    %v4887 = vpop.f32.mrf.mxu0
    %v4888 = vadd.f32 %v4764, %v4887
    %v4889 = vpop.f32.mrf.mxu0
    %v4890 = vpop.f32.mrf.mxu0
    %v4891 = vadd.f32 %v4764, %v4890
    %v4892 = vpop.f32.mrf.mxu0
    %4893 = vmatprep.mubr.bf16.mxu0 0
    %4894 = vmatmul.mubr.bf16.gmra.mxu0 %v4808
    %v4895 = vpop.f32.mrf.mxu0
    %v4896 = vadd.f32 %v4764, %v4895
    %v4897 = vpop.f32.mrf.mxu0
    %v4898 = vpop.f32.mrf.mxu0
    %v4899 = vadd.f32 %v4764, %v4898
    %v4900 = vpop.f32.mrf.mxu0
    %4901 = vmatprep.mubr.bf16.mxu0 0
    %4902 = vmatmul.mubr.bf16.gmra.mxu0 %v4811
    %v4903 = vpop.f32.mrf.mxu0
    %v4904 = vadd.f32 %v4764, %v4903
    %v4905 = vpop.f32.mrf.mxu0
    %v4906 = vpop.f32.mrf.mxu0
    %v4907 = vadd.f32 %v4764, %v4906
    %v4908 = vpop.f32.mrf.mxu0
    %4909 = vdwg.mxu0
    %4910 = vst [vmem:[%s2] sm:$0xff] %v4848
    %4911 = vst [vmem:[%s2 + $0x8] sm:$0xff] %v4851
    %4912 = vst [vmem:[%s2 + $0x10] sm:$0xff] %v4856
    %4913 = vst [vmem:[%s2 + $0x18] sm:$0xff] %v4859
    %4914 = vst [vmem:[%s2 + $0x20] sm:$0xff] %v4864
    %4915 = vst [vmem:[%s2 + $0x28] sm:$0xff] %v4867
    %4916 = vst [vmem:[%s2 + $0x30] sm:$0xff] %v4872
    %4917 = vst [vmem:[%s2 + $0x38] sm:$0xff] %v4875
    %4918 = vst [vmem:[%s2 + $0x40] sm:$0xff] %v4880
    %4919 = vst [vmem:[%s2 + $0x48] sm:$0xff] %v4883
    %4920 = vst [vmem:[%s2 + $0x50] sm:$0xff] %v4888
    %4921 = vst [vmem:[%s2 + $0x58] sm:$0xff] %v4891
    %4922 = vst [vmem:[%s2 + $0x60] sm:$0xff] %v4896
    %4923 = vst [vmem:[%s2 + $0x68] sm:$0xff] %v4899
    %4924 = vst [vmem:[%s2 + $0x70] sm:$0xff] %v4904
    %4925 = vst [vmem:[%s2 + $0x78] sm:$0xff] %v4907
    // Predicated region
    $region14: #{forward.1} parent=1 // pred_check
      _
    $region15: #{forward.1} parent=1 // pred_check_branch
      %4927 = sbr.rel (0) target = $region17
    $region16: #{forward.1} parent=1 // pred_region
      _
    $region17: #{forward.1} parent=1 // pred_fallthru
      _
    // Predicated region
    $region18: #{forward.1} parent=1 // pred_check
      _
    $region19: #{forward.1} parent=1 // pred_check_branch
      %4929 = sbr.rel (0) target = $region21
    $region20: #{forward.1} parent=1 // pred_region
      _
    $region21: #{forward.1} parent=1 // pred_fallthru
      _
    %4930 = vsyncpa [#allocation3], 1

</llo_original>
